<compile_context>
chip_gen: v6e
topology: v6e:2x2x1
jax: 0.10.0
libtpu: 0.0.40
codegen_flags: <defaults>
</compile_context>

<pallas_src>
import math
import functools

import numpy as np
import jax
import jax.numpy as jnp
from jax import lax
from jax.experimental import pallas as pl
from jax.experimental.pallas import tpu as pltpu

# ----------------------------- hyperparameters -------------------------------
VOCAB = 50
D_MODEL = 32
N_LAYERS = 2
HEADS = 4
D_K = D_MODEL // HEADS
D_FF = 128          # (PyTorch default is 2048; kept small for this synthetic test)
BATCH = 2
SEQ = 8
EPS = 1e-5          # nn.LayerNorm default


# ------------------------------ fused Pallas kernel --------------------------
def _encoder_kernel(src_ref, mask_ref, emb_ref, pe_ref,
                    ln1g_ref, ln1b_ref,
                    wqkv_ref, bqkv_ref, wo_ref, bo_ref,
                    ln2g_ref, ln2b_ref,
                    w1_ref, b1_ref, w2_ref, b2_ref,
                    ng_ref, nb_ref,
                    o_ref, *, n_layers, heads, d_k, batch, seq, d_model, vocab):
    """Embedding + PE + all encoder layers + final LayerNorm, VMEM-resident."""
    B, S, H, DK, D = batch, seq, heads, d_k, d_model
    M, N = B * S, H * B
    scale = 1.0 / math.sqrt(DK)

    def layer_norm(v, g, b):
        mean = jnp.mean(v, axis=-1, keepdims=True)
        var = jnp.mean(jnp.square(v - mean), axis=-1, keepdims=True)  # biased, like torch
        return (v - mean) * lax.rsqrt(var + EPS) * g + b

    # ---- in-kernel glue: embedding lookup as a one-hot MXU matmul + scale + PE ----
    ids = src_ref[...]                                                   # (M, 1) int32
    onehot = (lax.broadcasted_iota(jnp.int32, (M, vocab), 1) == ids).astype(jnp.float32)
    pe = pe_ref[...]                                                     # (S, D)
    pe_all = jnp.concatenate([pe] * B, axis=0) if B > 1 else pe          # (M, D)
    x = (jnp.dot(onehot, emb_ref[...], preferred_element_type=jnp.float32)
         * math.sqrt(D) + pe_all)                                        # (M, D)

    # ---- additive attention-mask bias, built ONCE, head-major order (n = h*B + b) ----
    mbias = (mask_ref[...].astype(jnp.float32) - 1.0) * 1e9              # (B, S)
    mbias = jnp.concatenate([mbias] * H, axis=0) if H > 1 else mbias     # (N, S)
    bias = jnp.broadcast_to(mbias[:, None, :], (N, S, S))                # (N, S, S)

    def split_heads(t):          # (M, H*DK) -> (N, S, DK), n = h*B + b
        return jnp.concatenate(
            [t[:, h * DK:(h + 1) * DK].reshape(B, S, DK) for h in range(H)], axis=0)

    for li in range(n_layers):   # static unroll (fine at L=2)
        # -------- pre-norm + fused QKV projection (single wide matmul) --------
        x2 = layer_norm(x, ln1g_ref[li], ln1b_ref[li])
        qkv = jnp.dot(x2, wqkv_ref[li], preferred_element_type=jnp.float32) + bqkv_ref[li]
        qh = split_heads(qkv[:, 0:D])
        kh = split_heads(qkv[:, D:2 * D])
        vh = split_heads(qkv[:, 2 * D:3 * D])

        # -------- head-batched attention: 1 scores einsum, 1 softmax, 1 ctx einsum ----
        s = jnp.einsum('nqd,nkd->nqk', qh, kh,
                       preferred_element_type=jnp.float32) * scale + bias
        m = jnp.max(s, axis=-1, keepdims=True)
        e = jnp.exp(s - m)
        p = e * pl.reciprocal(jnp.sum(e, axis=-1, keepdims=True), approx=True)
        ctx = jnp.einsum('nqk,nkd->nqd', p, vh, preferred_element_type=jnp.float32)

        # -------- merge heads back to (M, D) lanes, ONE W_o matmul + residual --------
        merged = jnp.concatenate(
            [ctx[h * B:(h + 1) * B].reshape(M, DK) for h in range(H)], axis=-1)
        x = x + jnp.dot(merged, wo_ref[li], preferred_element_type=jnp.float32) + bo_ref[li]

        # -------- pre-norm + feed-forward + residual --------------------------------
        x2 = layer_norm(x, ln2g_ref[li], ln2b_ref[li])
        hdn = jnp.maximum(
            jnp.dot(x2, w1_ref[li], preferred_element_type=jnp.float32) + b1_ref[li], 0.0)
        x = x + jnp.dot(hdn, w2_ref[li], preferred_element_type=jnp.float32) + b2_ref[li]

    # -------- final LayerNorm ------------------------------------------------------
    o_ref[...] = layer_norm(x, ng_ref[...], nb_ref[...]).astype(o_ref.dtype)


def fused_encoder(src2d, mask, pe_s, fp):
    """One pallas_call covering embedding + mask bias + every layer + final norm."""
    M = src2d.shape[0]
    B, S = mask.shape
    D, L, F = D_MODEL, N_LAYERS, D_FF

    def fb(shape):  # full-array block (block_shape == array shape is always legal)
        nd = len(shape)
        return pl.BlockSpec(shape, lambda i, nd=nd: (0,) * nd)

    kern = functools.partial(_encoder_kernel, n_layers=L, heads=HEADS, d_k=D_K,
                             batch=B, seq=S, d_model=D, vocab=VOCAB)

    in_specs = [
        fb((M, 1)),                      # src token ids
        fb((B, S)),                      # padding mask
        fb((VOCAB, D)),                  # embedding table
        fb((S, D)),                      # positional-encoding slice
        fb((L, 1, D)), fb((L, 1, D)),    # ln1 gamma / beta
        fb((L, D, 3 * D)), fb((L, 1, 3 * D)),   # fused wqkv, bqkv
        fb((L, D, D)), fb((L, 1, D)),    # wo, bo
        fb((L, 1, D)), fb((L, 1, D)),    # ln2 gamma / beta
        fb((L, D, F)), fb((L, 1, F)),    # w1, b1
        fb((L, F, D)), fb((L, 1, D)),    # w2, b2
        fb((1, D)), fb((1, D)),          # final norm gamma / beta
    ]

    return pl.pallas_call(
        kern,
        out_shape=jax.ShapeDtypeStruct((M, D), jnp.float32),
        grid=(1,),
        in_specs=in_specs,
        out_specs=fb((M, D)),
        compiler_params=pltpu.CompilerParams(dimension_semantics=("arbitrary",)),
    )(src2d, mask,
      fp['embed'], fp['pe'],
      fp['ln1_g'], fp['ln1_b'],
      fp['wqkv'], fp['bqkv'], fp['wo'], fp['bo'],
      fp['ln2_g'], fp['ln2_b'],
      fp['w1'], fp['b1'], fp['w2'], fp['b2'],
      fp['norm_g'], fp['norm_b']) if False else _call(kern, in_specs, M, D,
                                                      src2d, mask, pe_s, fp)


def _call(kern, in_specs, M, D, src2d, mask, pe_s, fp):
    return pl.pallas_call(
        kern,
        out_shape=jax.ShapeDtypeStruct((M, D), jnp.float32),
        grid=(1,),
        in_specs=in_specs,
        out_specs=pl.BlockSpec((M, D), lambda i: (0, 0)),
        compiler_params=pltpu.CompilerParams(dimension_semantics=("arbitrary",)),
    )(src2d, mask,
      fp['embed'], pe_s,
      fp['ln1_g'], fp['ln1_b'],
      fp['wqkv'], fp['bqkv'], fp['wo'], fp['bo'],
      fp['ln2_g'], fp['ln2_b'],
      fp['w1'], fp['b1'], fp['w2'], fp['b2'],
      fp['norm_g'], fp['norm_b'])


# --------------------------- parameter construction --------------------------
def init_params(key):
    keys = jax.random.split(key, 1 + N_LAYERS)
    params = {'embed': jax.random.normal(keys[0], (VOCAB, D_MODEL), jnp.float32)}

    def linear(k, fan_in, fan_out):
        kw, kb = jax.random.split(k)
        bound = 1.0 / math.sqrt(fan_in)
        w = jax.random.uniform(kw, (fan_in, fan_out), jnp.float32, -bound, bound)
        b = jax.random.uniform(kb, (1, fan_out), jnp.float32, -bound, bound)
        return w, b

    names = ['wq', 'bq', 'wk', 'bk', 'wv', 'bv', 'wo', 'bo', 'w1', 'b1', 'w2', 'b2']
    acc = {n: [] for n in names}
    shapes = [(D_MODEL, D_MODEL)] * 4 + [(D_MODEL, D_FF), (D_FF, D_MODEL)]
    pairs = [('wq', 'bq'), ('wk', 'bk'), ('wv', 'bv'), ('wo', 'bo'),
             ('w1', 'b1'), ('w2', 'b2')]
    for li in range(N_LAYERS):
        lk = jax.random.split(keys[1 + li], 6)
        for (wn, bn), kk, (fi, fo) in zip(pairs, lk, shapes):
            w, b = linear(kk, fi, fo)
            acc[wn].append(w)
            acc[bn].append(b)
    for n in names:
        params[n] = jnp.stack(acc[n], axis=0)          # stacked over layers: (L, ...)

    L = N_LAYERS
    params['ln1_g'] = jnp.ones((L, 1, D_MODEL), jnp.float32)
    params['ln1_b'] = jnp.zeros((L, 1, D_MODEL), jnp.float32)
    params['ln2_g'] = jnp.ones((L, 1, D_MODEL), jnp.float32)
    params['ln2_b'] = jnp.zeros((L, 1, D_MODEL), jnp.float32)
    params['norm_g'] = jnp.ones((1, D_MODEL), jnp.float32)
    params['norm_b'] = jnp.zeros((1, D_MODEL), jnp.float32)
    return params


def fuse_params(p):
    """Host-side, one-time: stack wq|wk|wv along the output dim for the fused QKV matmul."""
    fp = {k: p[k] for k in ('embed', 'ln1_g', 'ln1_b', 'ln2_g', 'ln2_b',
                            'wo', 'bo', 'w1', 'b1', 'w2', 'b2', 'norm_g', 'norm_b')}
    fp['wqkv'] = jnp.concatenate([p['wq'], p['wk'], p['wv']], axis=-1)   # (L, D, 3D)
    fp['bqkv'] = jnp.concatenate([p['bq'], p['bk'], p['bv']], axis=-1)   # (L, 1, 3D)
    return fp


def make_positional_encoding(max_seq_len, d_model):
    # exact replica of the PyTorch PositionalEncoder buffer construction
    pe = np.zeros((max_seq_len, d_model), np.float32)
    for pos in range(max_seq_len):
        for i in range(0, d_model, 2):
            pe[pos, i] = math.sin(pos / 10000 ** (2 * i / d_model))
            pe[pos, i + 1] = math.cos(pos / 10000 ** (2 * (i + 1) / d_model))
    return jnp.asarray(pe)


# --------------------------------- forward -----------------------------------
@jax.jit
def encoder_forward(src, mask, fparams, pe_s):
    B, S = src.shape
    src2d = src.reshape(B * S, 1).astype(jnp.int32)
    out2d = fused_encoder(src2d, mask.astype(jnp.int32), pe_s, fparams)
    return out2d.reshape(B, S, D_MODEL)


# ------------------------- pure-JAX reference (checking) ---------------------
def encoder_reference(src, mask, params, pe):
    B, S = src.shape
    x = jnp.take(params['embed'], src, axis=0) * math.sqrt(D_MODEL) + pe[:S][None, :, :]
    mask4 = mask[:, None, None, :]  # (B,1,1,S), broadcast over heads & query rows

    def ln(v, g, b):
        mean = jnp.mean(v, axis=-1, keepdims=True)
        var = jnp.mean((v - mean) ** 2, axis=-1, keepdims=True)
        return (v - mean) / jnp.sqrt(var + EPS) * g + b

    for li in range(N_LAYERS):
        x2 = ln(x, params['ln1_g'][li, 0], params['ln1_b'][li, 0])
        x2f = x2.reshape(B * S, D_MODEL)

        def proj(w, b):
            return (x2f @ params[w][li] + params[b][li]).reshape(
                B, S, HEADS, D_K).transpose(0, 2, 1, 3)
        q, k, v = proj('wq', 'bq'), proj('wk', 'bk'), proj('wv', 'bv')
        scores = jnp.einsum('bhqd,bhkd->bhqk', q, k) / math.sqrt(D_K)
        scores = jnp.where(mask4 == 0, -1e9, scores)
        p = jax.nn.softmax(scores, axis=-1)
        ctx = jnp.einsum('bhqk,bhkd->bhqd', p, v).transpose(0, 2, 1, 3)
        attn = ctx.reshape(B * S, D_MODEL) @ params['wo'][li] + params['bo'][li]
        x = x + attn.reshape(B, S, D_MODEL)
        x2 = ln(x, params['ln2_g'][li, 0], params['ln2_b'][li, 0])
        h = jax.nn.relu(x2.reshape(B * S, D_MODEL) @ params['w1'][li] + params['b1'][li])
        ff = h @ params['w2'][li] + params['b2'][li]
        x = x + ff.reshape(B, S, D_MODEL)
    return ln(x, params['norm_g'][0], params['norm_b'][0])


# ----------------------------------- main -------------------------------------
if __name__ == "__main__":
    key = jax.random.PRNGKey(0)
    k_param, k_src = jax.random.split(key)

    params = init_params(k_param)
    fparams = fuse_params(params)
    pe = make_positional_encoding(80, D_MODEL)
    pe_s = pe[:SEQ]                      # static slice, done once on the host

    src = jax.random.randint(k_src, (BATCH, SEQ), 0, VOCAB, dtype=jnp.int32)
    # simple padding mask: batch 0 fully valid, batch 1 has its last 2 tokens masked
    mask = np.ones((BATCH, SEQ), np.int32)
    mask[1, -2:] = 0
    mask = jnp.asarray(mask)

    out = jax.block_until_ready(encoder_forward(src, mask, fparams, pe_s))
    assert out.shape == (BATCH, SEQ, D_MODEL)
    assert bool(jnp.all(jnp.isfinite(out)))

    ref = encoder_reference(src, mask, params, pe)
    assert bool(jnp.allclose(out, ref, atol=5e-2, rtol=5e-2))
    print("KERNEL_OK")
</pallas_src>

<mosaic_0001>
module attributes {stable_mosaic.version = 11 : i64} {
  func.func @_encoder_kernel(%arg0: i32, %arg1: memref<16x1xi32, #tpu.memory_space<vmem>>, %arg2: memref<2x8xi32, #tpu.memory_space<vmem>>, %arg3: memref<50x32xf32, #tpu.memory_space<vmem>>, %arg4: memref<8x32xf32, #tpu.memory_space<vmem>>, %arg5: memref<2x1x32xf32, #tpu.memory_space<vmem>>, %arg6: memref<2x1x32xf32, #tpu.memory_space<vmem>>, %arg7: memref<2x32x96xf32, #tpu.memory_space<vmem>>, %arg8: memref<2x1x96xf32, #tpu.memory_space<vmem>>, %arg9: memref<2x32x32xf32, #tpu.memory_space<vmem>>, %arg10: memref<2x1x32xf32, #tpu.memory_space<vmem>>, %arg11: memref<2x1x32xf32, #tpu.memory_space<vmem>>, %arg12: memref<2x1x32xf32, #tpu.memory_space<vmem>>, %arg13: memref<2x32x128xf32, #tpu.memory_space<vmem>>, %arg14: memref<2x1x128xf32, #tpu.memory_space<vmem>>, %arg15: memref<2x128x32xf32, #tpu.memory_space<vmem>>, %arg16: memref<2x1x32xf32, #tpu.memory_space<vmem>>, %arg17: memref<1x32xf32, #tpu.memory_space<vmem>>, %arg18: memref<1x32xf32, #tpu.memory_space<vmem>>, %arg19: memref<16x32xf32, #tpu.memory_space<vmem>>) attributes {dimension_semantics = [#tpu.dimension_semantics<arbitrary>], iteration_bounds = array<i64: 1>, scalar_prefetch = 0 : i64, scratch_operands = 0 : i64, tpu.core_type = #tpu.core_type<tc>, window_params = [{pipeline_mode = #tpu.pipeline_mode<synchronous>, transform_indices = @transform_0, window_bounds = array<i64: 16, 1>}, {pipeline_mode = #tpu.pipeline_mode<synchronous>, transform_indices = @transform_1, window_bounds = array<i64: 2, 8>}, {pipeline_mode = #tpu.pipeline_mode<synchronous>, transform_indices = @transform_2, window_bounds = array<i64: 50, 32>}, {pipeline_mode = #tpu.pipeline_mode<synchronous>, transform_indices = @transform_3, window_bounds = array<i64: 8, 32>}, {pipeline_mode = #tpu.pipeline_mode<synchronous>, transform_indices = @transform_4, window_bounds = array<i64: 2, 1, 32>}, {pipeline_mode = #tpu.pipeline_mode<synchronous>, transform_indices = @transform_5, window_bounds = array<i64: 2, 1, 32>}, {pipeline_mode = #tpu.pipeline_mode<synchronous>, transform_indices = @transform_6, window_bounds = array<i64: 2, 32, 96>}, {pipeline_mode = #tpu.pipeline_mode<synchronous>, transform_indices = @transform_7, window_bounds = array<i64: 2, 1, 96>}, {pipeline_mode = #tpu.pipeline_mode<synchronous>, transform_indices = @transform_8, window_bounds = array<i64: 2, 32, 32>}, {pipeline_mode = #tpu.pipeline_mode<synchronous>, transform_indices = @transform_9, window_bounds = array<i64: 2, 1, 32>}, {pipeline_mode = #tpu.pipeline_mode<synchronous>, transform_indices = @transform_10, window_bounds = array<i64: 2, 1, 32>}, {pipeline_mode = #tpu.pipeline_mode<synchronous>, transform_indices = @transform_11, window_bounds = array<i64: 2, 1, 32>}, {pipeline_mode = #tpu.pipeline_mode<synchronous>, transform_indices = @transform_12, window_bounds = array<i64: 2, 32, 128>}, {pipeline_mode = #tpu.pipeline_mode<synchronous>, transform_indices = @transform_13, window_bounds = array<i64: 2, 1, 128>}, {pipeline_mode = #tpu.pipeline_mode<synchronous>, transform_indices = @transform_14, window_bounds = array<i64: 2, 128, 32>}, {pipeline_mode = #tpu.pipeline_mode<synchronous>, transform_indices = @transform_15, window_bounds = array<i64: 2, 1, 32>}, {pipeline_mode = #tpu.pipeline_mode<synchronous>, transform_indices = @transform_16, window_bounds = array<i64: 1, 32>}, {pipeline_mode = #tpu.pipeline_mode<synchronous>, transform_indices = @transform_17, window_bounds = array<i64: 1, 32>}, {pipeline_mode = #tpu.pipeline_mode<synchronous>, transform_indices = @transform_18, window_bounds = array<i64: 16, 32>}]} {
    %c0 = arith.constant 0 : index
    %c0_0 = arith.constant 0 : index
    %0 = vector.load %arg1[%c0, %c0_0] : memref<16x1xi32, #tpu.memory_space<vmem>>, vector<16x1xi32>
    %1 = tpu.iota {dimensions = array<i32: 1>} : vector<16x50xi32>
    %2 = vector.broadcast %0 : vector<16x1xi32> to vector<16x50xi32>
    %3 = arith.cmpi eq, %1, %2 : vector<16x50xi32>
    %4 = arith.extui %3 : vector<16x50xi1> to vector<16x50xi32>
    %5 = arith.sitofp %4 : vector<16x50xi32> to vector<16x50xf32>
    %c0_1 = arith.constant 0 : index
    %c0_2 = arith.constant 0 : index
    %6 = vector.load %arg4[%c0_1, %c0_2] : memref<8x32xf32, #tpu.memory_space<vmem>>, vector<8x32xf32>
    %7 = tpu.concatenate %6, %6 in 0 : vector<8x32xf32>, vector<8x32xf32> -> vector<16x32xf32>
    %c0_3 = arith.constant 0 : index
    %c0_4 = arith.constant 0 : index
    %8 = vector.load %arg3[%c0_3, %c0_4] : memref<50x32xf32, #tpu.memory_space<vmem>>, vector<50x32xf32>
    %cst = arith.constant dense<0.000000e+00> : vector<16x32xf32>
    %9 = tpu.matmul %5, %8, %cst {dimension_numbers = #tpu.dot_dimension_numbers<[1], [0], [0], [1], [0, 0, 1, 1], [], []>} : vector<16x50xf32>, vector<50x32xf32>, vector<16x32xf32> -> vector<16x32xf32>
    %cst_5 = arith.constant 5.65685415 : f32
    %10 = vector.broadcast %cst_5 : f32 to vector<16x32xf32>
    %11 = arith.mulf %9, %10 : vector<16x32xf32>
    %12 = arith.addf %11, %7 : vector<16x32xf32>
    %c0_6 = arith.constant 0 : index
    %c0_7 = arith.constant 0 : index
    %13 = vector.load %arg2[%c0_6, %c0_7] : memref<2x8xi32, #tpu.memory_space<vmem>>, vector<2x8xi32>
    %14 = arith.sitofp %13 : vector<2x8xi32> to vector<2x8xf32>
    %cst_8 = arith.constant 1.000000e+00 : f32
    %15 = vector.broadcast %cst_8 : f32 to vector<2x8xf32>
    %16 = arith.subf %14, %15 : vector<2x8xf32>
    %cst_9 = arith.constant 1.000000e+09 : f32
    %17 = vector.broadcast %cst_9 : f32 to vector<2x8xf32>
    %18 = arith.mulf %16, %17 : vector<2x8xf32>
    %19 = tpu.concatenate %18, %18, %18, %18 in 0 : vector<2x8xf32>, vector<2x8xf32>, vector<2x8xf32>, vector<2x8xf32> -> vector<8x8xf32>
    %20 = vector.shape_cast %19 : vector<8x8xf32> to vector<8x1x8xf32>
    %21 = vector.shape_cast %20 : vector<8x1x8xf32> to vector<8x1x8xf32>
    %22 = vector.broadcast %21 : vector<8x1x8xf32> to vector<8x8x8xf32>
    %c0_10 = arith.constant 0 : index
    %c0_11 = arith.constant 0 : index
    %c0_12 = arith.constant 0 : index
    %23 = vector.load %arg5[%c0_10, %c0_11, %c0_12] : memref<2x1x32xf32, #tpu.memory_space<vmem>>, vector<1x1x32xf32>
    %24 = vector.shape_cast %23 : vector<1x1x32xf32> to vector<1x32xf32>
    %c0_13 = arith.constant 0 : index
    %c0_14 = arith.constant 0 : index
    %c0_15 = arith.constant 0 : index
    %25 = vector.load %arg6[%c0_13, %c0_14, %c0_15] : memref<2x1x32xf32, #tpu.memory_space<vmem>>, vector<1x1x32xf32>
    %26 = vector.shape_cast %25 : vector<1x1x32xf32> to vector<1x32xf32>
    %cst_16 = arith.constant dense<0.000000e+00> : vector<16xf32>
    %27 = vector.multi_reduction <add>, %12, %cst_16 [1] : vector<16x32xf32> to vector<16xf32>
    %28 = vector.shape_cast %27 : vector<16xf32> to vector<16x1xf32>
    %cst_17 = arith.constant 3.200000e+01 : f32
    %29 = vector.broadcast %cst_17 : f32 to vector<16x1xf32>
    %30 = arith.divf %28, %29 : vector<16x1xf32>
    %31 = vector.broadcast %30 : vector<16x1xf32> to vector<16x32xf32>
    %32 = arith.subf %12, %31 : vector<16x32xf32>
    %33 = arith.mulf %32, %32 : vector<16x32xf32>
    %cst_18 = arith.constant dense<0.000000e+00> : vector<16xf32>
    %34 = vector.multi_reduction <add>, %33, %cst_18 [1] : vector<16x32xf32> to vector<16xf32>
    %35 = vector.shape_cast %34 : vector<16xf32> to vector<16x1xf32>
    %cst_19 = arith.constant 3.200000e+01 : f32
    %36 = vector.broadcast %cst_19 : f32 to vector<16x1xf32>
    %37 = arith.divf %35, %36 : vector<16x1xf32>
    %38 = vector.broadcast %30 : vector<16x1xf32> to vector<16x32xf32>
    %39 = arith.subf %12, %38 : vector<16x32xf32>
    %cst_20 = arith.constant 9.99999974E-6 : f32
    %40 = vector.broadcast %cst_20 : f32 to vector<16x1xf32>
    %41 = arith.addf %37, %40 : vector<16x1xf32>
    %42 = math.rsqrt %41 : vector<16x1xf32>
    %43 = vector.broadcast %42 : vector<16x1xf32> to vector<16x32xf32>
    %44 = arith.mulf %39, %43 : vector<16x32xf32>
    %45 = vector.broadcast %24 : vector<1x32xf32> to vector<16x32xf32>
    %46 = arith.mulf %44, %45 : vector<16x32xf32>
    %47 = vector.broadcast %26 : vector<1x32xf32> to vector<16x32xf32>
    %48 = arith.addf %46, %47 : vector<16x32xf32>
    %c0_21 = arith.constant 0 : index
    %c0_22 = arith.constant 0 : index
    %c0_23 = arith.constant 0 : index
    %49 = vector.load %arg7[%c0_21, %c0_22, %c0_23] : memref<2x32x96xf32, #tpu.memory_space<vmem>>, vector<1x32x96xf32>
    %50 = vector.shape_cast %49 : vector<1x32x96xf32> to vector<32x96xf32>
    %cst_24 = arith.constant dense<0.000000e+00> : vector<16x96xf32>
    %51 = tpu.matmul %48, %50, %cst_24 {dimension_numbers = #tpu.dot_dimension_numbers<[1], [0], [0], [1], [0, 0, 1, 1], [], []>} : vector<16x32xf32>, vector<32x96xf32>, vector<16x96xf32> -> vector<16x96xf32>
    %c0_25 = arith.constant 0 : index
    %c0_26 = arith.constant 0 : index
    %c0_27 = arith.constant 0 : index
    %52 = vector.load %arg8[%c0_25, %c0_26, %c0_27] : memref<2x1x96xf32, #tpu.memory_space<vmem>>, vector<1x1x96xf32>
    %53 = vector.shape_cast %52 : vector<1x1x96xf32> to vector<1x96xf32>
    %54 = vector.broadcast %53 : vector<1x96xf32> to vector<16x96xf32>
    %55 = arith.addf %51, %54 : vector<16x96xf32>
    %56 = vector.extract_strided_slice %55 {offsets = [0, 0], sizes = [16, 32], strides = [1, 1]} : vector<16x96xf32> to vector<16x32xf32>
    %57 = vector.extract_strided_slice %56 {offsets = [0, 0], sizes = [16, 8], strides = [1, 1]} : vector<16x32xf32> to vector<16x8xf32>
    %58 = vector.shape_cast %57 : vector<16x8xf32> to vector<2x8x8xf32>
    %59 = vector.extract_strided_slice %56 {offsets = [0, 8], sizes = [16, 8], strides = [1, 1]} : vector<16x32xf32> to vector<16x8xf32>
    %60 = vector.shape_cast %59 : vector<16x8xf32> to vector<2x8x8xf32>
    %61 = vector.extract_strided_slice %56 {offsets = [0, 16], sizes = [16, 8], strides = [1, 1]} : vector<16x32xf32> to vector<16x8xf32>
    %62 = vector.shape_cast %61 : vector<16x8xf32> to vector<2x8x8xf32>
    %63 = vector.extract_strided_slice %56 {offsets = [0, 24], sizes = [16, 8], strides = [1, 1]} : vector<16x32xf32> to vector<16x8xf32>
    %64 = vector.shape_cast %63 : vector<16x8xf32> to vector<2x8x8xf32>
    %65 = tpu.concatenate %58, %60, %62, %64 in 0 : vector<2x8x8xf32>, vector<2x8x8xf32>, vector<2x8x8xf32>, vector<2x8x8xf32> -> vector<8x8x8xf32>
    %66 = vector.extract_strided_slice %55 {offsets = [0, 32], sizes = [16, 32], strides = [1, 1]} : vector<16x96xf32> to vector<16x32xf32>
    %67 = vector.extract_strided_slice %66 {offsets = [0, 0], sizes = [16, 8], strides = [1, 1]} : vector<16x32xf32> to vector<16x8xf32>
    %68 = vector.shape_cast %67 : vector<16x8xf32> to vector<2x8x8xf32>
    %69 = vector.extract_strided_slice %66 {offsets = [0, 8], sizes = [16, 8], strides = [1, 1]} : vector<16x32xf32> to vector<16x8xf32>
    %70 = vector.shape_cast %69 : vector<16x8xf32> to vector<2x8x8xf32>
    %71 = vector.extract_strided_slice %66 {offsets = [0, 16], sizes = [16, 8], strides = [1, 1]} : vector<16x32xf32> to vector<16x8xf32>
    %72 = vector.shape_cast %71 : vector<16x8xf32> to vector<2x8x8xf32>
    %73 = vector.extract_strided_slice %66 {offsets = [0, 24], sizes = [16, 8], strides = [1, 1]} : vector<16x32xf32> to vector<16x8xf32>
    %74 = vector.shape_cast %73 : vector<16x8xf32> to vector<2x8x8xf32>
    %75 = tpu.concatenate %68, %70, %72, %74 in 0 : vector<2x8x8xf32>, vector<2x8x8xf32>, vector<2x8x8xf32>, vector<2x8x8xf32> -> vector<8x8x8xf32>
    %76 = vector.extract_strided_slice %55 {offsets = [0, 64], sizes = [16, 32], strides = [1, 1]} : vector<16x96xf32> to vector<16x32xf32>
    %77 = vector.extract_strided_slice %76 {offsets = [0, 0], sizes = [16, 8], strides = [1, 1]} : vector<16x32xf32> to vector<16x8xf32>
    %78 = vector.shape_cast %77 : vector<16x8xf32> to vector<2x8x8xf32>
    %79 = vector.extract_strided_slice %76 {offsets = [0, 8], sizes = [16, 8], strides = [1, 1]} : vector<16x32xf32> to vector<16x8xf32>
    %80 = vector.shape_cast %79 : vector<16x8xf32> to vector<2x8x8xf32>
    %81 = vector.extract_strided_slice %76 {offsets = [0, 16], sizes = [16, 8], strides = [1, 1]} : vector<16x32xf32> to vector<16x8xf32>
    %82 = vector.shape_cast %81 : vector<16x8xf32> to vector<2x8x8xf32>
    %83 = vector.extract_strided_slice %76 {offsets = [0, 24], sizes = [16, 8], strides = [1, 1]} : vector<16x32xf32> to vector<16x8xf32>
    %84 = vector.shape_cast %83 : vector<16x8xf32> to vector<2x8x8xf32>
    %85 = tpu.concatenate %78, %80, %82, %84 in 0 : vector<2x8x8xf32>, vector<2x8x8xf32>, vector<2x8x8xf32>, vector<2x8x8xf32> -> vector<8x8x8xf32>
    "tpu.trace_start"() <{level = 10 : i32, message = "nqd,nkd->nqk"}> : () -> ()
    %cst_28 = arith.constant dense<0.000000e+00> : vector<8x8x8xf32>
    %86 = tpu.matmul %65, %75, %cst_28 {dimension_numbers = #tpu.dot_dimension_numbers<[2], [2], [1], [1], [0, 0, 0, 1, 1, 1], [0], [0]>} : vector<8x8x8xf32>, vector<8x8x8xf32>, vector<8x8x8xf32> -> vector<8x8x8xf32>
    "tpu.trace_stop"() : () -> ()
    %cst_29 = arith.constant 0.353553385 : f32
    %87 = vector.broadcast %cst_29 : f32 to vector<8x8x8xf32>
    %88 = arith.mulf %86, %87 : vector<8x8x8xf32>
    %89 = arith.addf %88, %22 : vector<8x8x8xf32>
    %cst_30 = arith.constant dense<0xFF800000> : vector<8x8xf32>
    %90 = vector.multi_reduction <maximumf>, %89, %cst_30 [2] : vector<8x8x8xf32> to vector<8x8xf32>
    %91 = vector.shape_cast %90 : vector<8x8xf32> to vector<8x8x1xf32>
    %92 = vector.broadcast %91 : vector<8x8x1xf32> to vector<8x8x8xf32>
    %93 = arith.subf %89, %92 : vector<8x8x8xf32>
    %94 = math.exp %93 : vector<8x8x8xf32>
    %cst_31 = arith.constant dense<0.000000e+00> : vector<8x8xf32>
    %95 = vector.multi_reduction <add>, %94, %cst_31 [2] : vector<8x8x8xf32> to vector<8x8xf32>
    %96 = vector.shape_cast %95 : vector<8x8xf32> to vector<8x8x1xf32>
    %97 = tpu.reciprocal %96 {approx = true} : vector<8x8x1xf32> -> vector<8x8x1xf32>
    %98 = vector.broadcast %97 : vector<8x8x1xf32> to vector<8x8x8xf32>
    %99 = arith.mulf %94, %98 : vector<8x8x8xf32>
    "tpu.trace_start"() <{level = 10 : i32, message = "nqk,nkd->nqd"}> : () -> ()
    %cst_32 = arith.constant dense<0.000000e+00> : vector<8x8x8xf32>
    %100 = tpu.matmul %99, %85, %cst_32 {dimension_numbers = #tpu.dot_dimension_numbers<[2], [1], [1], [2], [0, 0, 0, 1, 1, 2], [0], [0]>} : vector<8x8x8xf32>, vector<8x8x8xf32>, vector<8x8x8xf32> -> vector<8x8x8xf32>
    "tpu.trace_stop"() : () -> ()
    %101 = vector.extract_strided_slice %100 {offsets = [0, 0, 0], sizes = [2, 8, 8], strides = [1, 1, 1]} : vector<8x8x8xf32> to vector<2x8x8xf32>
    %102 = vector.shape_cast %101 : vector<2x8x8xf32> to vector<16x8xf32>
    %103 = vector.extract_strided_slice %100 {offsets = [2, 0, 0], sizes = [2, 8, 8], strides = [1, 1, 1]} : vector<8x8x8xf32> to vector<2x8x8xf32>
    %104 = vector.shape_cast %103 : vector<2x8x8xf32> to vector<16x8xf32>
    %105 = vector.extract_strided_slice %100 {offsets = [4, 0, 0], sizes = [2, 8, 8], strides = [1, 1, 1]} : vector<8x8x8xf32> to vector<2x8x8xf32>
    %106 = vector.shape_cast %105 : vector<2x8x8xf32> to vector<16x8xf32>
    %107 = vector.extract_strided_slice %100 {offsets = [6, 0, 0], sizes = [2, 8, 8], strides = [1, 1, 1]} : vector<8x8x8xf32> to vector<2x8x8xf32>
    %108 = vector.shape_cast %107 : vector<2x8x8xf32> to vector<16x8xf32>
    %109 = tpu.concatenate %102, %104, %106, %108 in 1 : vector<16x8xf32>, vector<16x8xf32>, vector<16x8xf32>, vector<16x8xf32> -> vector<16x32xf32>
    %c0_33 = arith.constant 0 : index
    %c0_34 = arith.constant 0 : index
    %c0_35 = arith.constant 0 : index
    %110 = vector.load %arg9[%c0_33, %c0_34, %c0_35] : memref<2x32x32xf32, #tpu.memory_space<vmem>>, vector<1x32x32xf32>
    %111 = vector.shape_cast %110 : vector<1x32x32xf32> to vector<32x32xf32>
    %cst_36 = arith.constant dense<0.000000e+00> : vector<16x32xf32>
    %112 = tpu.matmul %109, %111, %cst_36 {dimension_numbers = #tpu.dot_dimension_numbers<[1], [0], [0], [1], [0, 0, 1, 1], [], []>} : vector<16x32xf32>, vector<32x32xf32>, vector<16x32xf32> -> vector<16x32xf32>
    %113 = arith.addf %12, %112 : vector<16x32xf32>
    %c0_37 = arith.constant 0 : index
    %c0_38 = arith.constant 0 : index
    %c0_39 = arith.constant 0 : index
    %114 = vector.load %arg10[%c0_37, %c0_38, %c0_39] : memref<2x1x32xf32, #tpu.memory_space<vmem>>, vector<1x1x32xf32>
    %115 = vector.shape_cast %114 : vector<1x1x32xf32> to vector<1x32xf32>
    %116 = vector.broadcast %115 : vector<1x32xf32> to vector<16x32xf32>
    %117 = arith.addf %113, %116 : vector<16x32xf32>
    %c0_40 = arith.constant 0 : index
    %c0_41 = arith.constant 0 : index
    %c0_42 = arith.constant 0 : index
    %118 = vector.load %arg11[%c0_40, %c0_41, %c0_42] : memref<2x1x32xf32, #tpu.memory_space<vmem>>, vector<1x1x32xf32>
    %119 = vector.shape_cast %118 : vector<1x1x32xf32> to vector<1x32xf32>
    %c0_43 = arith.constant 0 : index
    %c0_44 = arith.constant 0 : index
    %c0_45 = arith.constant 0 : index
    %120 = vector.load %arg12[%c0_43, %c0_44, %c0_45] : memref<2x1x32xf32, #tpu.memory_space<vmem>>, vector<1x1x32xf32>
    %121 = vector.shape_cast %120 : vector<1x1x32xf32> to vector<1x32xf32>
    %cst_46 = arith.constant dense<0.000000e+00> : vector<16xf32>
    %122 = vector.multi_reduction <add>, %117, %cst_46 [1] : vector<16x32xf32> to vector<16xf32>
    %123 = vector.shape_cast %122 : vector<16xf32> to vector<16x1xf32>
    %cst_47 = arith.constant 3.200000e+01 : f32
    %124 = vector.broadcast %cst_47 : f32 to vector<16x1xf32>
    %125 = arith.divf %123, %124 : vector<16x1xf32>
    %126 = vector.broadcast %125 : vector<16x1xf32> to vector<16x32xf32>
    %127 = arith.subf %117, %126 : vector<16x32xf32>
    %128 = arith.mulf %127, %127 : vector<16x32xf32>
    %cst_48 = arith.constant dense<0.000000e+00> : vector<16xf32>
    %129 = vector.multi_reduction <add>, %128, %cst_48 [1] : vector<16x32xf32> to vector<16xf32>
    %130 = vector.shape_cast %129 : vector<16xf32> to vector<16x1xf32>
    %cst_49 = arith.constant 3.200000e+01 : f32
    %131 = vector.broadcast %cst_49 : f32 to vector<16x1xf32>
    %132 = arith.divf %130, %131 : vector<16x1xf32>
    %133 = vector.broadcast %125 : vector<16x1xf32> to vector<16x32xf32>
    %134 = arith.subf %117, %133 : vector<16x32xf32>
    %cst_50 = arith.constant 9.99999974E-6 : f32
    %135 = vector.broadcast %cst_50 : f32 to vector<16x1xf32>
    %136 = arith.addf %132, %135 : vector<16x1xf32>
    %137 = math.rsqrt %136 : vector<16x1xf32>
    %138 = vector.broadcast %137 : vector<16x1xf32> to vector<16x32xf32>
    %139 = arith.mulf %134, %138 : vector<16x32xf32>
    %140 = vector.broadcast %119 : vector<1x32xf32> to vector<16x32xf32>
    %141 = arith.mulf %139, %140 : vector<16x32xf32>
    %142 = vector.broadcast %121 : vector<1x32xf32> to vector<16x32xf32>
    %143 = arith.addf %141, %142 : vector<16x32xf32>
    %c0_51 = arith.constant 0 : index
    %c0_52 = arith.constant 0 : index
    %c0_53 = arith.constant 0 : index
    %144 = vector.load %arg13[%c0_51, %c0_52, %c0_53] : memref<2x32x128xf32, #tpu.memory_space<vmem>>, vector<1x32x128xf32>
    %145 = vector.shape_cast %144 : vector<1x32x128xf32> to vector<32x128xf32>
    %cst_54 = arith.constant dense<0.000000e+00> : vector<16x128xf32>
    %146 = tpu.matmul %143, %145, %cst_54 {dimension_numbers = #tpu.dot_dimension_numbers<[1], [0], [0], [1], [0, 0, 1, 1], [], []>} : vector<16x32xf32>, vector<32x128xf32>, vector<16x128xf32> -> vector<16x128xf32>
    %c0_55 = arith.constant 0 : index
    %c0_56 = arith.constant 0 : index
    %c0_57 = arith.constant 0 : index
    %147 = vector.load %arg14[%c0_55, %c0_56, %c0_57] : memref<2x1x128xf32, #tpu.memory_space<vmem>>, vector<1x1x128xf32>
    %148 = vector.shape_cast %147 : vector<1x1x128xf32> to vector<1x128xf32>
    %149 = vector.broadcast %148 : vector<1x128xf32> to vector<16x128xf32>
    %150 = arith.addf %146, %149 : vector<16x128xf32>
    %cst_58 = arith.constant 0.000000e+00 : f32
    %151 = vector.broadcast %cst_58 : f32 to vector<16x128xf32>
    %152 = arith.maximumf %150, %151 : vector<16x128xf32>
    %c0_59 = arith.constant 0 : index
    %c0_60 = arith.constant 0 : index
    %c0_61 = arith.constant 0 : index
    %153 = vector.load %arg15[%c0_59, %c0_60, %c0_61] : memref<2x128x32xf32, #tpu.memory_space<vmem>>, vector<1x128x32xf32>
    %154 = vector.shape_cast %153 : vector<1x128x32xf32> to vector<128x32xf32>
    %cst_62 = arith.constant dense<0.000000e+00> : vector<16x32xf32>
    %155 = tpu.matmul %152, %154, %cst_62 {dimension_numbers = #tpu.dot_dimension_numbers<[1], [0], [0], [1], [0, 0, 1, 1], [], []>} : vector<16x128xf32>, vector<128x32xf32>, vector<16x32xf32> -> vector<16x32xf32>
    %156 = arith.addf %117, %155 : vector<16x32xf32>
    %c0_63 = arith.constant 0 : index
    %c0_64 = arith.constant 0 : index
    %c0_65 = arith.constant 0 : index
    %157 = vector.load %arg16[%c0_63, %c0_64, %c0_65] : memref<2x1x32xf32, #tpu.memory_space<vmem>>, vector<1x1x32xf32>
    %158 = vector.shape_cast %157 : vector<1x1x32xf32> to vector<1x32xf32>
    %159 = vector.broadcast %158 : vector<1x32xf32> to vector<16x32xf32>
    %160 = arith.addf %156, %159 : vector<16x32xf32>
    %c1 = arith.constant 1 : index
    %c0_66 = arith.constant 0 : index
    %c0_67 = arith.constant 0 : index
    %161 = vector.load %arg5[%c1, %c0_66, %c0_67] : memref<2x1x32xf32, #tpu.memory_space<vmem>>, vector<1x1x32xf32>
    %162 = vector.shape_cast %161 : vector<1x1x32xf32> to vector<1x32xf32>
    %c1_68 = arith.constant 1 : index
    %c0_69 = arith.constant 0 : index
    %c0_70 = arith.constant 0 : index
    %163 = vector.load %arg6[%c1_68, %c0_69, %c0_70] : memref<2x1x32xf32, #tpu.memory_space<vmem>>, vector<1x1x32xf32>
    %164 = vector.shape_cast %163 : vector<1x1x32xf32> to vector<1x32xf32>
    %cst_71 = arith.constant dense<0.000000e+00> : vector<16xf32>
    %165 = vector.multi_reduction <add>, %160, %cst_71 [1] : vector<16x32xf32> to vector<16xf32>
    %166 = vector.shape_cast %165 : vector<16xf32> to vector<16x1xf32>
    %cst_72 = arith.constant 3.200000e+01 : f32
    %167 = vector.broadcast %cst_72 : f32 to vector<16x1xf32>
    %168 = arith.divf %166, %167 : vector<16x1xf32>
    %169 = vector.broadcast %168 : vector<16x1xf32> to vector<16x32xf32>
    %170 = arith.subf %160, %169 : vector<16x32xf32>
    %171 = arith.mulf %170, %170 : vector<16x32xf32>
    %cst_73 = arith.constant dense<0.000000e+00> : vector<16xf32>
    %172 = vector.multi_reduction <add>, %171, %cst_73 [1] : vector<16x32xf32> to vector<16xf32>
    %173 = vector.shape_cast %172 : vector<16xf32> to vector<16x1xf32>
    %cst_74 = arith.constant 3.200000e+01 : f32
    %174 = vector.broadcast %cst_74 : f32 to vector<16x1xf32>
    %175 = arith.divf %173, %174 : vector<16x1xf32>
    %176 = vector.broadcast %168 : vector<16x1xf32> to vector<16x32xf32>
    %177 = arith.subf %160, %176 : vector<16x32xf32>
    %cst_75 = arith.constant 9.99999974E-6 : f32
    %178 = vector.broadcast %cst_75 : f32 to vector<16x1xf32>
    %179 = arith.addf %175, %178 : vector<16x1xf32>
    %180 = math.rsqrt %179 : vector<16x1xf32>
    %181 = vector.broadcast %180 : vector<16x1xf32> to vector<16x32xf32>
    %182 = arith.mulf %177, %181 : vector<16x32xf32>
    %183 = vector.broadcast %162 : vector<1x32xf32> to vector<16x32xf32>
    %184 = arith.mulf %182, %183 : vector<16x32xf32>
    %185 = vector.broadcast %164 : vector<1x32xf32> to vector<16x32xf32>
    %186 = arith.addf %184, %185 : vector<16x32xf32>
    %c1_76 = arith.constant 1 : index
    %c0_77 = arith.constant 0 : index
    %c0_78 = arith.constant 0 : index
    %187 = vector.load %arg7[%c1_76, %c0_77, %c0_78] : memref<2x32x96xf32, #tpu.memory_space<vmem>>, vector<1x32x96xf32>
    %188 = vector.shape_cast %187 : vector<1x32x96xf32> to vector<32x96xf32>
    %cst_79 = arith.constant dense<0.000000e+00> : vector<16x96xf32>
    %189 = tpu.matmul %186, %188, %cst_79 {dimension_numbers = #tpu.dot_dimension_numbers<[1], [0], [0], [1], [0, 0, 1, 1], [], []>} : vector<16x32xf32>, vector<32x96xf32>, vector<16x96xf32> -> vector<16x96xf32>
    %c1_80 = arith.constant 1 : index
    %c0_81 = arith.constant 0 : index
    %c0_82 = arith.constant 0 : index
    %190 = vector.load %arg8[%c1_80, %c0_81, %c0_82] : memref<2x1x96xf32, #tpu.memory_space<vmem>>, vector<1x1x96xf32>
    %191 = vector.shape_cast %190 : vector<1x1x96xf32> to vector<1x96xf32>
    %192 = vector.broadcast %191 : vector<1x96xf32> to vector<16x96xf32>
    %193 = arith.addf %189, %192 : vector<16x96xf32>
    %194 = vector.extract_strided_slice %193 {offsets = [0, 0], sizes = [16, 32], strides = [1, 1]} : vector<16x96xf32> to vector<16x32xf32>
    %195 = vector.extract_strided_slice %194 {offsets = [0, 0], sizes = [16, 8], strides = [1, 1]} : vector<16x32xf32> to vector<16x8xf32>
    %196 = vector.shape_cast %195 : vector<16x8xf32> to vector<2x8x8xf32>
    %197 = vector.extract_strided_slice %194 {offsets = [0, 8], sizes = [16, 8], strides = [1, 1]} : vector<16x32xf32> to vector<16x8xf32>
    %198 = vector.shape_cast %197 : vector<16x8xf32> to vector<2x8x8xf32>
    %199 = vector.extract_strided_slice %194 {offsets = [0, 16], sizes = [16, 8], strides = [1, 1]} : vector<16x32xf32> to vector<16x8xf32>
    %200 = vector.shape_cast %199 : vector<16x8xf32> to vector<2x8x8xf32>
    %201 = vector.extract_strided_slice %194 {offsets = [0, 24], sizes = [16, 8], strides = [1, 1]} : vector<16x32xf32> to vector<16x8xf32>
    %202 = vector.shape_cast %201 : vector<16x8xf32> to vector<2x8x8xf32>
    %203 = tpu.concatenate %196, %198, %200, %202 in 0 : vector<2x8x8xf32>, vector<2x8x8xf32>, vector<2x8x8xf32>, vector<2x8x8xf32> -> vector<8x8x8xf32>
    %204 = vector.extract_strided_slice %193 {offsets = [0, 32], sizes = [16, 32], strides = [1, 1]} : vector<16x96xf32> to vector<16x32xf32>
    %205 = vector.extract_strided_slice %204 {offsets = [0, 0], sizes = [16, 8], strides = [1, 1]} : vector<16x32xf32> to vector<16x8xf32>
    %206 = vector.shape_cast %205 : vector<16x8xf32> to vector<2x8x8xf32>
    %207 = vector.extract_strided_slice %204 {offsets = [0, 8], sizes = [16, 8], strides = [1, 1]} : vector<16x32xf32> to vector<16x8xf32>
    %208 = vector.shape_cast %207 : vector<16x8xf32> to vector<2x8x8xf32>
    %209 = vector.extract_strided_slice %204 {offsets = [0, 16], sizes = [16, 8], strides = [1, 1]} : vector<16x32xf32> to vector<16x8xf32>
    %210 = vector.shape_cast %209 : vector<16x8xf32> to vector<2x8x8xf32>
    %211 = vector.extract_strided_slice %204 {offsets = [0, 24], sizes = [16, 8], strides = [1, 1]} : vector<16x32xf32> to vector<16x8xf32>
    %212 = vector.shape_cast %211 : vector<16x8xf32> to vector<2x8x8xf32>
    %213 = tpu.concatenate %206, %208, %210, %212 in 0 : vector<2x8x8xf32>, vector<2x8x8xf32>, vector<2x8x8xf32>, vector<2x8x8xf32> -> vector<8x8x8xf32>
    %214 = vector.extract_strided_slice %193 {offsets = [0, 64], sizes = [16, 32], strides = [1, 1]} : vector<16x96xf32> to vector<16x32xf32>
    %215 = vector.extract_strided_slice %214 {offsets = [0, 0], sizes = [16, 8], strides = [1, 1]} : vector<16x32xf32> to vector<16x8xf32>
    %216 = vector.shape_cast %215 : vector<16x8xf32> to vector<2x8x8xf32>
    %217 = vector.extract_strided_slice %214 {offsets = [0, 8], sizes = [16, 8], strides = [1, 1]} : vector<16x32xf32> to vector<16x8xf32>
    %218 = vector.shape_cast %217 : vector<16x8xf32> to vector<2x8x8xf32>
    %219 = vector.extract_strided_slice %214 {offsets = [0, 16], sizes = [16, 8], strides = [1, 1]} : vector<16x32xf32> to vector<16x8xf32>
    %220 = vector.shape_cast %219 : vector<16x8xf32> to vector<2x8x8xf32>
    %221 = vector.extract_strided_slice %214 {offsets = [0, 24], sizes = [16, 8], strides = [1, 1]} : vector<16x32xf32> to vector<16x8xf32>
    %222 = vector.shape_cast %221 : vector<16x8xf32> to vector<2x8x8xf32>
    %223 = tpu.concatenate %216, %218, %220, %222 in 0 : vector<2x8x8xf32>, vector<2x8x8xf32>, vector<2x8x8xf32>, vector<2x8x8xf32> -> vector<8x8x8xf32>
    "tpu.trace_start"() <{level = 10 : i32, message = "nqd,nkd->nqk"}> : () -> ()
    %cst_83 = arith.constant dense<0.000000e+00> : vector<8x8x8xf32>
    %224 = tpu.matmul %203, %213, %cst_83 {dimension_numbers = #tpu.dot_dimension_numbers<[2], [2], [1], [1], [0, 0, 0, 1, 1, 1], [0], [0]>} : vector<8x8x8xf32>, vector<8x8x8xf32>, vector<8x8x8xf32> -> vector<8x8x8xf32>
    "tpu.trace_stop"() : () -> ()
    %cst_84 = arith.constant 0.353553385 : f32
    %225 = vector.broadcast %cst_84 : f32 to vector<8x8x8xf32>
    %226 = arith.mulf %224, %225 : vector<8x8x8xf32>
    %227 = arith.addf %226, %22 : vector<8x8x8xf32>
    %cst_85 = arith.constant dense<0xFF800000> : vector<8x8xf32>
    %228 = vector.multi_reduction <maximumf>, %227, %cst_85 [2] : vector<8x8x8xf32> to vector<8x8xf32>
    %229 = vector.shape_cast %228 : vector<8x8xf32> to vector<8x8x1xf32>
    %230 = vector.broadcast %229 : vector<8x8x1xf32> to vector<8x8x8xf32>
    %231 = arith.subf %227, %230 : vector<8x8x8xf32>
    %232 = math.exp %231 : vector<8x8x8xf32>
    %cst_86 = arith.constant dense<0.000000e+00> : vector<8x8xf32>
    %233 = vector.multi_reduction <add>, %232, %cst_86 [2] : vector<8x8x8xf32> to vector<8x8xf32>
    %234 = vector.shape_cast %233 : vector<8x8xf32> to vector<8x8x1xf32>
    %235 = tpu.reciprocal %234 {approx = true} : vector<8x8x1xf32> -> vector<8x8x1xf32>
    %236 = vector.broadcast %235 : vector<8x8x1xf32> to vector<8x8x8xf32>
    %237 = arith.mulf %232, %236 : vector<8x8x8xf32>
    "tpu.trace_start"() <{level = 10 : i32, message = "nqk,nkd->nqd"}> : () -> ()
    %cst_87 = arith.constant dense<0.000000e+00> : vector<8x8x8xf32>
    %238 = tpu.matmul %237, %223, %cst_87 {dimension_numbers = #tpu.dot_dimension_numbers<[2], [1], [1], [2], [0, 0, 0, 1, 1, 2], [0], [0]>} : vector<8x8x8xf32>, vector<8x8x8xf32>, vector<8x8x8xf32> -> vector<8x8x8xf32>
    "tpu.trace_stop"() : () -> ()
    %239 = vector.extract_strided_slice %238 {offsets = [0, 0, 0], sizes = [2, 8, 8], strides = [1, 1, 1]} : vector<8x8x8xf32> to vector<2x8x8xf32>
    %240 = vector.shape_cast %239 : vector<2x8x8xf32> to vector<16x8xf32>
    %241 = vector.extract_strided_slice %238 {offsets = [2, 0, 0], sizes = [2, 8, 8], strides = [1, 1, 1]} : vector<8x8x8xf32> to vector<2x8x8xf32>
    %242 = vector.shape_cast %241 : vector<2x8x8xf32> to vector<16x8xf32>
    %243 = vector.extract_strided_slice %238 {offsets = [4, 0, 0], sizes = [2, 8, 8], strides = [1, 1, 1]} : vector<8x8x8xf32> to vector<2x8x8xf32>
    %244 = vector.shape_cast %243 : vector<2x8x8xf32> to vector<16x8xf32>
    %245 = vector.extract_strided_slice %238 {offsets = [6, 0, 0], sizes = [2, 8, 8], strides = [1, 1, 1]} : vector<8x8x8xf32> to vector<2x8x8xf32>
    %246 = vector.shape_cast %245 : vector<2x8x8xf32> to vector<16x8xf32>
    %247 = tpu.concatenate %240, %242, %244, %246 in 1 : vector<16x8xf32>, vector<16x8xf32>, vector<16x8xf32>, vector<16x8xf32> -> vector<16x32xf32>
    %c1_88 = arith.constant 1 : index
    %c0_89 = arith.constant 0 : index
    %c0_90 = arith.constant 0 : index
    %248 = vector.load %arg9[%c1_88, %c0_89, %c0_90] : memref<2x32x32xf32, #tpu.memory_space<vmem>>, vector<1x32x32xf32>
    %249 = vector.shape_cast %248 : vector<1x32x32xf32> to vector<32x32xf32>
    %cst_91 = arith.constant dense<0.000000e+00> : vector<16x32xf32>
    %250 = tpu.matmul %247, %249, %cst_91 {dimension_numbers = #tpu.dot_dimension_numbers<[1], [0], [0], [1], [0, 0, 1, 1], [], []>} : vector<16x32xf32>, vector<32x32xf32>, vector<16x32xf32> -> vector<16x32xf32>
    %251 = arith.addf %160, %250 : vector<16x32xf32>
    %c1_92 = arith.constant 1 : index
    %c0_93 = arith.constant 0 : index
    %c0_94 = arith.constant 0 : index
    %252 = vector.load %arg10[%c1_92, %c0_93, %c0_94] : memref<2x1x32xf32, #tpu.memory_space<vmem>>, vector<1x1x32xf32>
    %253 = vector.shape_cast %252 : vector<1x1x32xf32> to vector<1x32xf32>
    %254 = vector.broadcast %253 : vector<1x32xf32> to vector<16x32xf32>
    %255 = arith.addf %251, %254 : vector<16x32xf32>
    %c1_95 = arith.constant 1 : index
    %c0_96 = arith.constant 0 : index
    %c0_97 = arith.constant 0 : index
    %256 = vector.load %arg11[%c1_95, %c0_96, %c0_97] : memref<2x1x32xf32, #tpu.memory_space<vmem>>, vector<1x1x32xf32>
    %257 = vector.shape_cast %256 : vector<1x1x32xf32> to vector<1x32xf32>
    %c1_98 = arith.constant 1 : index
    %c0_99 = arith.constant 0 : index
    %c0_100 = arith.constant 0 : index
    %258 = vector.load %arg12[%c1_98, %c0_99, %c0_100] : memref<2x1x32xf32, #tpu.memory_space<vmem>>, vector<1x1x32xf32>
    %259 = vector.shape_cast %258 : vector<1x1x32xf32> to vector<1x32xf32>
    %cst_101 = arith.constant dense<0.000000e+00> : vector<16xf32>
    %260 = vector.multi_reduction <add>, %255, %cst_101 [1] : vector<16x32xf32> to vector<16xf32>
    %261 = vector.shape_cast %260 : vector<16xf32> to vector<16x1xf32>
    %cst_102 = arith.constant 3.200000e+01 : f32
    %262 = vector.broadcast %cst_102 : f32 to vector<16x1xf32>
    %263 = arith.divf %261, %262 : vector<16x1xf32>
    %264 = vector.broadcast %263 : vector<16x1xf32> to vector<16x32xf32>
    %265 = arith.subf %255, %264 : vector<16x32xf32>
    %266 = arith.mulf %265, %265 : vector<16x32xf32>
    %cst_103 = arith.constant dense<0.000000e+00> : vector<16xf32>
    %267 = vector.multi_reduction <add>, %266, %cst_103 [1] : vector<16x32xf32> to vector<16xf32>
    %268 = vector.shape_cast %267 : vector<16xf32> to vector<16x1xf32>
    %cst_104 = arith.constant 3.200000e+01 : f32
    %269 = vector.broadcast %cst_104 : f32 to vector<16x1xf32>
    %270 = arith.divf %268, %269 : vector<16x1xf32>
    %271 = vector.broadcast %263 : vector<16x1xf32> to vector<16x32xf32>
    %272 = arith.subf %255, %271 : vector<16x32xf32>
    %cst_105 = arith.constant 9.99999974E-6 : f32
    %273 = vector.broadcast %cst_105 : f32 to vector<16x1xf32>
    %274 = arith.addf %270, %273 : vector<16x1xf32>
    %275 = math.rsqrt %274 : vector<16x1xf32>
    %276 = vector.broadcast %275 : vector<16x1xf32> to vector<16x32xf32>
    %277 = arith.mulf %272, %276 : vector<16x32xf32>
    %278 = vector.broadcast %257 : vector<1x32xf32> to vector<16x32xf32>
    %279 = arith.mulf %277, %278 : vector<16x32xf32>
    %280 = vector.broadcast %259 : vector<1x32xf32> to vector<16x32xf32>
    %281 = arith.addf %279, %280 : vector<16x32xf32>
    %c1_106 = arith.constant 1 : index
    %c0_107 = arith.constant 0 : index
    %c0_108 = arith.constant 0 : index
    %282 = vector.load %arg13[%c1_106, %c0_107, %c0_108] : memref<2x32x128xf32, #tpu.memory_space<vmem>>, vector<1x32x128xf32>
    %283 = vector.shape_cast %282 : vector<1x32x128xf32> to vector<32x128xf32>
    %cst_109 = arith.constant dense<0.000000e+00> : vector<16x128xf32>
    %284 = tpu.matmul %281, %283, %cst_109 {dimension_numbers = #tpu.dot_dimension_numbers<[1], [0], [0], [1], [0, 0, 1, 1], [], []>} : vector<16x32xf32>, vector<32x128xf32>, vector<16x128xf32> -> vector<16x128xf32>
    %c1_110 = arith.constant 1 : index
    %c0_111 = arith.constant 0 : index
    %c0_112 = arith.constant 0 : index
    %285 = vector.load %arg14[%c1_110, %c0_111, %c0_112] : memref<2x1x128xf32, #tpu.memory_space<vmem>>, vector<1x1x128xf32>
    %286 = vector.shape_cast %285 : vector<1x1x128xf32> to vector<1x128xf32>
    %287 = vector.broadcast %286 : vector<1x128xf32> to vector<16x128xf32>
    %288 = arith.addf %284, %287 : vector<16x128xf32>
    %cst_113 = arith.constant 0.000000e+00 : f32
    %289 = vector.broadcast %cst_113 : f32 to vector<16x128xf32>
    %290 = arith.maximumf %288, %289 : vector<16x128xf32>
    %c1_114 = arith.constant 1 : index
    %c0_115 = arith.constant 0 : index
    %c0_116 = arith.constant 0 : index
    %291 = vector.load %arg15[%c1_114, %c0_115, %c0_116] : memref<2x128x32xf32, #tpu.memory_space<vmem>>, vector<1x128x32xf32>
    %292 = vector.shape_cast %291 : vector<1x128x32xf32> to vector<128x32xf32>
    %cst_117 = arith.constant dense<0.000000e+00> : vector<16x32xf32>
    %293 = tpu.matmul %290, %292, %cst_117 {dimension_numbers = #tpu.dot_dimension_numbers<[1], [0], [0], [1], [0, 0, 1, 1], [], []>} : vector<16x128xf32>, vector<128x32xf32>, vector<16x32xf32> -> vector<16x32xf32>
    %294 = arith.addf %255, %293 : vector<16x32xf32>
    %c1_118 = arith.constant 1 : index
    %c0_119 = arith.constant 0 : index
    %c0_120 = arith.constant 0 : index
    %295 = vector.load %arg16[%c1_118, %c0_119, %c0_120] : memref<2x1x32xf32, #tpu.memory_space<vmem>>, vector<1x1x32xf32>
    %296 = vector.shape_cast %295 : vector<1x1x32xf32> to vector<1x32xf32>
    %297 = vector.broadcast %296 : vector<1x32xf32> to vector<16x32xf32>
    %298 = arith.addf %294, %297 : vector<16x32xf32>
    %c0_121 = arith.constant 0 : index
    %c0_122 = arith.constant 0 : index
    %299 = vector.load %arg17[%c0_121, %c0_122] : memref<1x32xf32, #tpu.memory_space<vmem>>, vector<1x32xf32>
    %c0_123 = arith.constant 0 : index
    %c0_124 = arith.constant 0 : index
    %300 = vector.load %arg18[%c0_123, %c0_124] : memref<1x32xf32, #tpu.memory_space<vmem>>, vector<1x32xf32>
    %cst_125 = arith.constant dense<0.000000e+00> : vector<16xf32>
    %301 = vector.multi_reduction <add>, %298, %cst_125 [1] : vector<16x32xf32> to vector<16xf32>
    %302 = vector.shape_cast %301 : vector<16xf32> to vector<16x1xf32>
    %cst_126 = arith.constant 3.200000e+01 : f32
    %303 = vector.broadcast %cst_126 : f32 to vector<16x1xf32>
    %304 = arith.divf %302, %303 : vector<16x1xf32>
    %305 = vector.broadcast %304 : vector<16x1xf32> to vector<16x32xf32>
    %306 = arith.subf %298, %305 : vector<16x32xf32>
    %307 = arith.mulf %306, %306 : vector<16x32xf32>
    %cst_127 = arith.constant dense<0.000000e+00> : vector<16xf32>
    %308 = vector.multi_reduction <add>, %307, %cst_127 [1] : vector<16x32xf32> to vector<16xf32>
    %309 = vector.shape_cast %308 : vector<16xf32> to vector<16x1xf32>
    %cst_128 = arith.constant 3.200000e+01 : f32
    %310 = vector.broadcast %cst_128 : f32 to vector<16x1xf32>
    %311 = arith.divf %309, %310 : vector<16x1xf32>
    %312 = vector.broadcast %304 : vector<16x1xf32> to vector<16x32xf32>
    %313 = arith.subf %298, %312 : vector<16x32xf32>
    %cst_129 = arith.constant 9.99999974E-6 : f32
    %314 = vector.broadcast %cst_129 : f32 to vector<16x1xf32>
    %315 = arith.addf %311, %314 : vector<16x1xf32>
    %316 = math.rsqrt %315 : vector<16x1xf32>
    %317 = vector.broadcast %316 : vector<16x1xf32> to vector<16x32xf32>
    %318 = arith.mulf %313, %317 : vector<16x32xf32>
    %319 = vector.broadcast %299 : vector<1x32xf32> to vector<16x32xf32>
    %320 = arith.mulf %318, %319 : vector<16x32xf32>
    %321 = vector.broadcast %300 : vector<1x32xf32> to vector<16x32xf32>
    %322 = arith.addf %320, %321 : vector<16x32xf32>
    %c0_130 = arith.constant 0 : index
    %c0_131 = arith.constant 0 : index
    %323 = vector.load %arg19[%c0_130, %c0_131] : memref<16x32xf32, #tpu.memory_space<vmem>>, vector<16x32xf32>
    tpu.vector_store %arg19[%c0_130, %c0_131], %322 {strides = array<i32>} : memref<16x32xf32, #tpu.memory_space<vmem>>, vector<16x32xf32>,
    return
  }
  func.func @transform_0(%arg0: i32) -> (i32, i32) {
    %c0_i32 = arith.constant 0 : i32
    %c0_i32_0 = arith.constant 0 : i32
    %c0_i32_1 = arith.constant 0 : i32
    return %c0_i32, %c0_i32_0 : i32, i32
  }
  func.func @transform_1(%arg0: i32) -> (i32, i32) {
    %c0_i32 = arith.constant 0 : i32
    %c0_i32_0 = arith.constant 0 : i32
    %c0_i32_1 = arith.constant 0 : i32
    return %c0_i32, %c0_i32_0 : i32, i32
  }
  func.func @transform_2(%arg0: i32) -> (i32, i32) {
    %c0_i32 = arith.constant 0 : i32
    %c0_i32_0 = arith.constant 0 : i32
    %c0_i32_1 = arith.constant 0 : i32
    return %c0_i32, %c0_i32_0 : i32, i32
  }
  func.func @transform_3(%arg0: i32) -> (i32, i32) {
    %c0_i32 = arith.constant 0 : i32
    %c0_i32_0 = arith.constant 0 : i32
    %c0_i32_1 = arith.constant 0 : i32
    return %c0_i32, %c0_i32_0 : i32, i32
  }
  func.func @transform_4(%arg0: i32) -> (i32, i32, i32) {
    %c0_i32 = arith.constant 0 : i32
    %c0_i32_0 = arith.constant 0 : i32
    %c0_i32_1 = arith.constant 0 : i32
    %c0_i32_2 = arith.constant 0 : i32
    return %c0_i32, %c0_i32_0, %c0_i32_1 : i32, i32, i32
  }
  func.func @transform_5(%arg0: i32) -> (i32, i32, i32) {
    %c0_i32 = arith.constant 0 : i32
    %c0_i32_0 = arith.constant 0 : i32
    %c0_i32_1 = arith.constant 0 : i32
    %c0_i32_2 = arith.constant 0 : i32
    return %c0_i32, %c0_i32_0, %c0_i32_1 : i32, i32, i32
  }
  func.func @transform_6(%arg0: i32) -> (i32, i32, i32) {
    %c0_i32 = arith.constant 0 : i32
    %c0_i32_0 = arith.constant 0 : i32
    %c0_i32_1 = arith.constant 0 : i32
    %c0_i32_2 = arith.constant 0 : i32
    return %c0_i32, %c0_i32_0, %c0_i32_1 : i32, i32, i32
  }
  func.func @transform_7(%arg0: i32) -> (i32, i32, i32) {
    %c0_i32 = arith.constant 0 : i32
    %c0_i32_0 = arith.constant 0 : i32
    %c0_i32_1 = arith.constant 0 : i32
    %c0_i32_2 = arith.constant 0 : i32
    return %c0_i32, %c0_i32_0, %c0_i32_1 : i32, i32, i32
  }
  func.func @transform_8(%arg0: i32) -> (i32, i32, i32) {
    %c0_i32 = arith.constant 0 : i32
    %c0_i32_0 = arith.constant 0 : i32
    %c0_i32_1 = arith.constant 0 : i32
    %c0_i32_2 = arith.constant 0 : i32
    return %c0_i32, %c0_i32_0, %c0_i32_1 : i32, i32, i32
  }
  func.func @transform_9(%arg0: i32) -> (i32, i32, i32) {
    %c0_i32 = arith.constant 0 : i32
    %c0_i32_0 = arith.constant 0 : i32
    %c0_i32_1 = arith.constant 0 : i32
    %c0_i32_2 = arith.constant 0 : i32
    return %c0_i32, %c0_i32_0, %c0_i32_1 : i32, i32, i32
  }
  func.func @transform_10(%arg0: i32) -> (i32, i32, i32) {
    %c0_i32 = arith.constant 0 : i32
    %c0_i32_0 = arith.constant 0 : i32
    %c0_i32_1 = arith.constant 0 : i32
    %c0_i32_2 = arith.constant 0 : i32
    return %c0_i32, %c0_i32_0, %c0_i32_1 : i32, i32, i32
  }
  func.func @transform_11(%arg0: i32) -> (i32, i32, i32) {
    %c0_i32 = arith.constant 0 : i32
    %c0_i32_0 = arith.constant 0 : i32
    %c0_i32_1 = arith.constant 0 : i32
    %c0_i32_2 = arith.constant 0 : i32
    return %c0_i32, %c0_i32_0, %c0_i32_1 : i32, i32, i32
  }
  func.func @transform_12(%arg0: i32) -> (i32, i32, i32) {
    %c0_i32 = arith.constant 0 : i32
    %c0_i32_0 = arith.constant 0 : i32
    %c0_i32_1 = arith.constant 0 : i32
    %c0_i32_2 = arith.constant 0 : i32
    return %c0_i32, %c0_i32_0, %c0_i32_1 : i32, i32, i32
  }
  func.func @transform_13(%arg0: i32) -> (i32, i32, i32) {
    %c0_i32 = arith.constant 0 : i32
    %c0_i32_0 = arith.constant 0 : i32
    %c0_i32_1 = arith.constant 0 : i32
    %c0_i32_2 = arith.constant 0 : i32
    return %c0_i32, %c0_i32_0, %c0_i32_1 : i32, i32, i32
  }
  func.func @transform_14(%arg0: i32) -> (i32, i32, i32) {
    %c0_i32 = arith.constant 0 : i32
    %c0_i32_0 = arith.constant 0 : i32
    %c0_i32_1 = arith.constant 0 : i32
    %c0_i32_2 = arith.constant 0 : i32
    return %c0_i32, %c0_i32_0, %c0_i32_1 : i32, i32, i32
  }
  func.func @transform_15(%arg0: i32) -> (i32, i32, i32) {
    %c0_i32 = arith.constant 0 : i32
    %c0_i32_0 = arith.constant 0 : i32
    %c0_i32_1 = arith.constant 0 : i32
    %c0_i32_2 = arith.constant 0 : i32
    return %c0_i32, %c0_i32_0, %c0_i32_1 : i32, i32, i32
  }
  func.func @transform_16(%arg0: i32) -> (i32, i32) {
    %c0_i32 = arith.constant 0 : i32
    %c0_i32_0 = arith.constant 0 : i32
    %c0_i32_1 = arith.constant 0 : i32
    return %c0_i32, %c0_i32_0 : i32, i32
  }
  func.func @transform_17(%arg0: i32) -> (i32, i32) {
    %c0_i32 = arith.constant 0 : i32
    %c0_i32_0 = arith.constant 0 : i32
    %c0_i32_1 = arith.constant 0 : i32
    return %c0_i32, %c0_i32_0 : i32, i32
  }
  func.func @transform_18(%arg0: i32) -> (i32, i32) {
    %c0_i32 = arith.constant 0 : i32
    %c0_i32_0 = arith.constant 0 : i32
    %c0_i32_1 = arith.constant 0 : i32
    return %c0_i32, %c0_i32_0 : i32, i32
  }
}

</mosaic_0001>

<llo_original>
// kernel: encoder_forward.1
$region0: #{encoder_forward.1}
  #allocation0 [shape = 'u32[]', space=smem, size = 0x4, offset = 0x4, fixed_abs, tag = 'smem constant byte address 0x4 - core index']
  #allocation1 [shape = 'u32[144,128]{1,0:T(1,128)}', space=vmem, size = 0x12000, scoped, tag = 'internal scratch']
  %s0 = inlined_call_operand.vmem [shape: s32[16,1], index: 0, kind: input, shape index: {}]
  %s1 = inlined_call_operand.vmem [shape: s32[2,8], index: 1, kind: input, shape index: {}]
  %s2 = inlined_call_operand.vmem [shape: f32[50,32], index: 2, kind: input, shape index: {}]
  %s3 = inlined_call_operand.vmem [shape: f32[8,32], index: 3, kind: input, shape index: {}]
  %s4 = inlined_call_operand.vmem [shape: f32[2,1,32], index: 4, kind: input, shape index: {}]
  %s5 = inlined_call_operand.vmem [shape: f32[2,1,32], index: 5, kind: input, shape index: {}]
  %s6 = inlined_call_operand.vmem [shape: f32[2,32,96], index: 6, kind: input, shape index: {}]
  %s7 = inlined_call_operand.vmem [shape: f32[2,1,96], index: 7, kind: input, shape index: {}]
  %s8 = inlined_call_operand.vmem [shape: f32[2,32,32], index: 8, kind: input, shape index: {}]
  %s9 = inlined_call_operand.vmem [shape: f32[2,1,32], index: 9, kind: input, shape index: {}]
  %s10 = inlined_call_operand.vmem [shape: f32[2,1,32], index: 10, kind: input, shape index: {}]
  %s11 = inlined_call_operand.vmem [shape: f32[2,1,32], index: 11, kind: input, shape index: {}]
  %s12 = inlined_call_operand.vmem [shape: f32[2,32,128], index: 12, kind: input, shape index: {}]
  %s13 = inlined_call_operand.vmem [shape: f32[2,1,128], index: 13, kind: input, shape index: {}]
  %s14 = inlined_call_operand.vmem [shape: f32[2,128,32], index: 14, kind: input, shape index: {}]
  %s15 = inlined_call_operand.vmem [shape: f32[2,1,32], index: 15, kind: input, shape index: {}]
  %s16 = inlined_call_operand.vmem [shape: f32[1,32], index: 16, kind: input, shape index: {}]
  %s17 = inlined_call_operand.vmem [shape: f32[1,32], index: 17, kind: input, shape index: {}]
  %s18 = inlined_call_operand.hbm [shape: f32[16,32], index: 18, kind: output, shape index: {}]
  %s19 = sld [smem:[#allocation0]]
  $region82: #{encoder_forward.1} parent=0
    _
  %s21 = ssub.s32 1, %s19
  %s22 = scalar_select 0, %s21, %s19
  $region1: #{encoder_forward.1} parent=0
    #allocation2 [shape = 'u8[8192]{0}', space=vmem, size = 0x2000, scoped, tag = 'output window, operand 0, single buffered']
    #allocation3 [shape = 's32[1]{0}', space=sflag, size = 0x4, scoped, tag = 'scoped memory for encoder_forward.1']
    %23 = vsyncpa [#allocation3], 0
    // Predicated region
    $region2: #{encoder_forward.1} parent=1 // pred_check
      _
    $region3: #{encoder_forward.1} parent=1 // pred_check_branch
      %25 = sbr.rel (0) target = $region5
    $region4: #{encoder_forward.1} parent=1 // pred_region
      _
    $region5: #{encoder_forward.1} parent=1 // pred_fallthru
      _
    // Predicated region
    $region6: #{encoder_forward.1} parent=1 // pred_check
      _
    $region7: #{encoder_forward.1} parent=1 // pred_check_branch
      %27 = sbr.rel (0) target = $region9
    $region8: #{encoder_forward.1} parent=1 // pred_region
      _
    $region9: #{encoder_forward.1} parent=1 // pred_fallthru
      _
    // Predicated region
    $region10: #{encoder_forward.1} parent=1 // pred_check
      _
    $region11: #{encoder_forward.1} parent=1 // pred_check_branch
      %29 = sbr.rel (0) target = $region13
    $region12: #{encoder_forward.1} parent=1 // pred_region
      _
    $region13: #{encoder_forward.1} parent=1 // pred_fallthru
      _
    // Predicated region
    $region14: #{encoder_forward.1} parent=1 // pred_check
      _
    $region15: #{encoder_forward.1} parent=1 // pred_check_branch
      %31 = sbr.rel (0) target = $region17
    $region16: #{encoder_forward.1} parent=1 // pred_region
      _
    $region17: #{encoder_forward.1} parent=1 // pred_fallthru
      _
    // Predicated region
    $region18: #{encoder_forward.1} parent=1 // pred_check
      _
    $region19: #{encoder_forward.1} parent=1 // pred_check_branch
      %33 = sbr.rel (0) target = $region21
    $region20: #{encoder_forward.1} parent=1 // pred_region
      _
    $region21: #{encoder_forward.1} parent=1 // pred_fallthru
      _
    // Predicated region
    $region22: #{encoder_forward.1} parent=1 // pred_check
      _
    $region23: #{encoder_forward.1} parent=1 // pred_check_branch
      %35 = sbr.rel (0) target = $region25
    $region24: #{encoder_forward.1} parent=1 // pred_region
      _
    $region25: #{encoder_forward.1} parent=1 // pred_fallthru
      _
    // Predicated region
    $region26: #{encoder_forward.1} parent=1 // pred_check
      _
    $region27: #{encoder_forward.1} parent=1 // pred_check_branch
      %37 = sbr.rel (0) target = $region29
    $region28: #{encoder_forward.1} parent=1 // pred_region
      _
    $region29: #{encoder_forward.1} parent=1 // pred_fallthru
      _
    // Predicated region
    $region30: #{encoder_forward.1} parent=1 // pred_check
      _
    $region31: #{encoder_forward.1} parent=1 // pred_check_branch
      %39 = sbr.rel (0) target = $region33
    $region32: #{encoder_forward.1} parent=1 // pred_region
      _
    $region33: #{encoder_forward.1} parent=1 // pred_fallthru
      _
    // Predicated region
    $region34: #{encoder_forward.1} parent=1 // pred_check
      _
    $region35: #{encoder_forward.1} parent=1 // pred_check_branch
      %41 = sbr.rel (0) target = $region37
    $region36: #{encoder_forward.1} parent=1 // pred_region
      _
    $region37: #{encoder_forward.1} parent=1 // pred_fallthru
      _
    // Predicated region
    $region38: #{encoder_forward.1} parent=1 // pred_check
      _
    $region39: #{encoder_forward.1} parent=1 // pred_check_branch
      %43 = sbr.rel (0) target = $region41
    $region40: #{encoder_forward.1} parent=1 // pred_region
      _
    $region41: #{encoder_forward.1} parent=1 // pred_fallthru
      _
    // Predicated region
    $region42: #{encoder_forward.1} parent=1 // pred_check
      _
    $region43: #{encoder_forward.1} parent=1 // pred_check_branch
      %45 = sbr.rel (0) target = $region45
    $region44: #{encoder_forward.1} parent=1 // pred_region
      _
    $region45: #{encoder_forward.1} parent=1 // pred_fallthru
      _
    // Predicated region
    $region46: #{encoder_forward.1} parent=1 // pred_check
      _
    $region47: #{encoder_forward.1} parent=1 // pred_check_branch
      %47 = sbr.rel (0) target = $region49
    $region48: #{encoder_forward.1} parent=1 // pred_region
      _
    $region49: #{encoder_forward.1} parent=1 // pred_fallthru
      _
    // Predicated region
    $region50: #{encoder_forward.1} parent=1 // pred_check
      _
    $region51: #{encoder_forward.1} parent=1 // pred_check_branch
      %49 = sbr.rel (0) target = $region53
    $region52: #{encoder_forward.1} parent=1 // pred_region
      _
    $region53: #{encoder_forward.1} parent=1 // pred_fallthru
      _
    // Predicated region
    $region54: #{encoder_forward.1} parent=1 // pred_check
      _
    $region55: #{encoder_forward.1} parent=1 // pred_check_branch
      %51 = sbr.rel (0) target = $region57
    $region56: #{encoder_forward.1} parent=1 // pred_region
      _
    $region57: #{encoder_forward.1} parent=1 // pred_fallthru
      _
    // Predicated region
    $region58: #{encoder_forward.1} parent=1 // pred_check
      _
    $region59: #{encoder_forward.1} parent=1 // pred_check_branch
      %53 = sbr.rel (0) target = $region61
    $region60: #{encoder_forward.1} parent=1 // pred_region
      _
    $region61: #{encoder_forward.1} parent=1 // pred_fallthru
      _
    // Predicated region
    $region62: #{encoder_forward.1} parent=1 // pred_check
      _
    $region63: #{encoder_forward.1} parent=1 // pred_check_branch
      %55 = sbr.rel (0) target = $region65
    $region64: #{encoder_forward.1} parent=1 // pred_region
      _
    $region65: #{encoder_forward.1} parent=1 // pred_fallthru
      _
    // Predicated region
    $region66: #{encoder_forward.1} parent=1 // pred_check
      _
    $region67: #{encoder_forward.1} parent=1 // pred_check_branch
      %57 = sbr.rel (0) target = $region69
    $region68: #{encoder_forward.1} parent=1 // pred_region
      _
    $region69: #{encoder_forward.1} parent=1 // pred_fallthru
      _
    // Predicated region
    $region70: #{encoder_forward.1} parent=1 // pred_check
      _
    $region71: #{encoder_forward.1} parent=1 // pred_check_branch
      %59 = sbr.rel (0) target = $region73
    $region72: #{encoder_forward.1} parent=1 // pred_region
      _
    $region73: #{encoder_forward.1} parent=1 // pred_fallthru
      _
    %v60 = vld [vmem:[%s0] sm:$0xff]
    %v61 = vld [vmem:[%s0 + $0x8] sm:$0xff]
    %v62 = vlaneseq
    %v63 = vand.u32 %v62, 127
    %64 = vset.pattern.permute.xlu0 0
    %65 = vperm.xlu0 %64, %v60
    %v66 = vpop.permute.xlu0 %65
    %67 = vset.pattern.permute.xlu0 0
    %68 = vperm.xlu0 %67, %v61
    %v69 = vpop.permute.xlu0 %68
    %vm70 = vcmp.eq.s32.totalorder %v63, %v66
    %vm71 = vcmp.eq.s32.totalorder %v63, %v69
    %v72 = vsel %vm70, 1, 0
    %v73 = vsel %vm71, 1, 0
    %v74 = vcvt.s32.f32 %v72
    %v75 = vcvt.s32.f32 %v73
    %v76 = vld [vmem:[%s3] sm:$0xff]
    %v77 = vld [vmem:[%s2] sm:$0xff]
    %v78 = vld [vmem:[%s2 + $0x8] sm:$0xff]
    %v79 = vld [vmem:[%s2 + $0x10] sm:$0xff]
    %v80 = vld [vmem:[%s2 + $0x18] sm:$0xff]
    %v81 = vld [vmem:[%s2 + $0x20] sm:$0xff]
    %v82 = vld [vmem:[%s2 + $0x28] sm:$0xff]
    %v83 = vld [vmem:[%s2 + $0x30] sm:$0x3]
    %vm84 = vcmask 408576
    %v86 = vsel %vm84, %v74, 0
    %v89 = vsel %vm84, %v75, 0
    %vm91 = vcmask 1041408
    %v93 = vsel %vm91, %v83, 0
    %95 = vmatprep.subr.mxu0 0.0
    %96 = vmatpush1.msra.mxu0 0.0
    %97 = vmatprep.subr.mxu0 0.0
    %98 = vmatpush1.msra.mxu0 0.0
    %99 = vmatprep.subr.mxu0 0.0
    %100 = vmatpush1.msra.mxu0 0.0
    %101 = vmatprep.subr.mxu0 0.0
    %102 = vmatpush1.msra.mxu0 0.0
    %103 = vmatprep.subr.mxu0 0.0
    %104 = vmatpush1.msra.mxu0 0.0
    %105 = vmatprep.subr.mxu0 0.0
    %106 = vmatpush1.msra.mxu0 0.0
    %107 = vmatprep.subr.mxu0 0.0
    %108 = vmatpush1.msra.mxu0 0.0
    %109 = vmatprep.subr.mxu0 0.0
    %110 = vmatpush1.msra.mxu0 0.0
    %111 = vmatprep.subr.mxu0 0.0
    %112 = vmatpush1.msra.mxu0 0.0
    %113 = vmatprep.subr.mxu0 0.0
    %114 = vmatpush1.msra.mxu0 %v93
    %115 = vmatprep.subr.mxu0 0.0
    %116 = vmatpush1.msra.mxu0 %v82
    %117 = vmatprep.subr.mxu0 0.0
    %118 = vmatpush1.msra.mxu0 %v81
    %119 = vmatprep.subr.mxu0 0.0
    %120 = vmatpush1.msra.mxu0 %v80
    %121 = vmatprep.subr.mxu0 0.0
    %122 = vmatpush1.msra.mxu0 %v79
    %123 = vmatprep.subr.mxu0 0.0
    %124 = vmatpush1.msra.mxu0 %v78
    %125 = vmatprep.subr.mxu0 0.0
    %126 = vmatpush1.msra.mxu0 %v77
    %127 = vmatprep.subr.mxu0 0.0
    %128 = vmatpush2.msra.mxu0 0.0
    %129 = vmatprep.subr.mxu0 0.0
    %130 = vmatpush2.msra.mxu0 0.0
    %131 = vmatprep.subr.mxu0 0.0
    %132 = vmatpush2.msra.mxu0 0.0
    %133 = vmatprep.subr.mxu0 0.0
    %134 = vmatpush2.msra.mxu0 0.0
    %135 = vmatprep.subr.mxu0 0.0
    %136 = vmatpush2.msra.mxu0 0.0
    %137 = vmatprep.subr.mxu0 0.0
    %138 = vmatpush2.msra.mxu0 0.0
    %139 = vmatprep.subr.mxu0 0.0
    %140 = vmatpush2.msra.mxu0 0.0
    %141 = vmatprep.subr.mxu0 0.0
    %142 = vmatpush2.msra.mxu0 0.0
    %143 = vmatprep.subr.mxu0 0.0
    %144 = vmatpush2.msra.mxu0 0.0
    %145 = vmatprep.subr.mxu0 0.0
    %146 = vmatpush2.msra.mxu0 0.0
    %147 = vmatprep.subr.mxu0 0.0
    %148 = vmatpush2.msra.mxu0 0.0
    %149 = vmatprep.subr.mxu0 0.0
    %150 = vmatpush2.msra.mxu0 0.0
    %151 = vmatprep.subr.mxu0 0.0
    %152 = vmatpush2.msra.mxu0 0.0
    %153 = vmatprep.subr.mxu0 0.0
    %154 = vmatpush2.msra.mxu0 0.0
    %155 = vmatprep.subr.mxu0 0.0
    %156 = vmatpush2.msra.mxu0 0.0
    %157 = vmatprep.subr.mxu0 0.0
    %158 = vmatpush2.msra.mxu0 0.0
    %159 = vmatprep.mubr.f32.mxu0 0.0
    %160 = vmatmul.mubr.f32.gmra.mxu0 %v86
    %v161 = vpop.f32.mrf.mxu0
    %v162 = vadd.f32 0.0, %v161
    %v163 = vpop.f32.mrf.mxu0
    %164 = vmatprep.mubr.f32.mxu0 0.0
    %165 = vmatmul.mubr.f32.gmra.mxu0 %v89
    %v166 = vpop.f32.mrf.mxu0
    %v167 = vadd.f32 0.0, %v166
    %v168 = vpop.f32.mrf.mxu0
    %169 = vdwg.mxu0
    %v170 = vmul.f32 %v162, 5.656854
    %v171 = vmul.f32 %v167, 5.656854
    %v172 = vadd.f32 %v170, %v76
    %v173 = vadd.f32 %v171, %v76
    %v174 = vld [vmem:[%s1] sm:$0x3]
    %v175 = vcvt.s32.f32 %v174
    %v176 = vsub.f32 %v175, 1.0
    %v177 = vmul.f32 %v176, 1e+09
    %v179 = vrot.slane %v177, 6
    %v181 = vrot.slane %v177, 4
    %v183 = vrot.slane %v177, 2
    %v185 = vsel %vm91, %v177, %v179
    %vm186 = vcmask 1043456
    %v187 = vsel %vm186, %v185, %v181
    %vm188 = vcmask 1045504
    %v189 = vsel %vm188, %v187, %v183
    %v191 = vcombine.high %v189, %v189
    %v193 = vunpack.c.l.s4 1966171168
    %v194 = vunpack.c.0.s8 %v193
    %v195 = vlaneseq
    %v196 = vshrl.u32 %v195, 7
    %v197 = vsub.s32 %v194, %v196
    %v198 = vrot.slane %v189, %v197
    %v200 = vunpack.c.l.s4 1966171168
    %v201 = vunpack.c.0.s8 %v200
    %v202 = vlaneseq
    %v203 = vshrl.u32 %v202, 7
    %v204 = vsub.s32 %v201, %v203
    %v205 = vrot.slane %v191, %v204
    %v206 = vcombine.high %v198, %v198
    %v207 = vcombine.high %v205, %v205
    %v209 = vunpack.c.l.s4 1966171168
    %v210 = vunpack.c.0.s8 %v209
    %v211 = vlaneseq
    %v212 = vshrl.u32 %v211, 7
    %v213 = vsub.s32 %v210, %v212
    %v214 = vrot.slane %v198, %v213
    %v216 = vunpack.c.l.s4 1966171168
    %v217 = vunpack.c.0.s8 %v216
    %v218 = vlaneseq
    %v219 = vshrl.u32 %v218, 7
    %v220 = vsub.s32 %v217, %v219
    %v221 = vrot.slane %v205, %v220
    %v223 = vunpack.c.l.s4 1966171168
    %v224 = vunpack.c.0.s8 %v223
    %v225 = vlaneseq
    %v226 = vshrl.u32 %v225, 7
    %v227 = vsub.s32 %v224, %v226
    %v228 = vrot.slane %v206, %v227
    %v230 = vunpack.c.l.s4 1966171168
    %v231 = vunpack.c.0.s8 %v230
    %v232 = vlaneseq
    %v233 = vshrl.u32 %v232, 7
    %v234 = vsub.s32 %v231, %v233
    %v235 = vrot.slane %v207, %v234
    %v236 = vcombine.high %v214, %v214
    %v237 = vcombine.high %v221, %v221
    %v238 = vcombine.high %v228, %v228
    %v239 = vcombine.high %v235, %v235
    %v240 = vlaneseq
    %v241 = vshrl.u32 %v240, 7
    %v242 = vsub.s32 0, %v241
    %v243 = vrot.slane %v214, %v242
    %v244 = vlaneseq
    %v245 = vshrl.u32 %v244, 7
    %v246 = vsub.s32 0, %v245
    %v247 = vrot.slane %v228, %v246
    %v248 = vlaneseq
    %v249 = vshrl.u32 %v248, 7
    %v250 = vsub.s32 0, %v249
    %v251 = vrot.slane %v236, %v250
    %v252 = vlaneseq
    %v253 = vshrl.u32 %v252, 7
    %v254 = vsub.s32 0, %v253
    %v255 = vrot.slane %v238, %v254
    %v256 = vlaneseq
    %v257 = vshrl.u32 %v256, 7
    %v258 = vsub.s32 0, %v257
    %v259 = vrot.slane %v221, %v258
    %v260 = vlaneseq
    %v261 = vshrl.u32 %v260, 7
    %v262 = vsub.s32 0, %v261
    %v263 = vrot.slane %v235, %v262
    %v264 = vlaneseq
    %v265 = vshrl.u32 %v264, 7
    %v266 = vsub.s32 0, %v265
    %v267 = vrot.slane %v237, %v266
    %v268 = vlaneseq
    %v269 = vshrl.u32 %v268, 7
    %v270 = vsub.s32 0, %v269
    %v271 = vrot.slane %v239, %v270
    %v280 = vld [vmem:[%s4] sm:$0x1]
    %v281 = vld [vmem:[%s5] sm:$0x1]
    %vm282 = vcmask 261120
    %v283 = vsel %vm282, %v172, 0.0
    %284 = vadd.xlane.f32.xlu0 %v283
    %v285 = vpop.xlane.xlu0 %284
    %v286 = vsel %vm282, %v173, 0.0
    %287 = vadd.xlane.f32.xlu0 %v286
    %v288 = vpop.xlane.xlu0 %287
    %v289 = vrcp.pop 32.0
    %v290 = vmul.f32 %v285, %v289
    %v291 = vmul.f32 %v288, %v289
    %v292 = vsub.f32 %v172, %v290
    %v293 = vsub.f32 %v173, %v291
    %v294 = vmul.f32 %v292, %v292
    %v295 = vmul.f32 %v293, %v293
    %v296 = vsel %vm282, %v294, 0.0
    %297 = vadd.xlane.f32.xlu0 %v296
    %v298 = vpop.xlane.xlu0 %297
    %v299 = vsel %vm282, %v295, 0.0
    %300 = vadd.xlane.f32.xlu0 %v299
    %v301 = vpop.xlane.xlu0 %300
    %v302 = vmul.f32 %v298, %v289
    %v303 = vmul.f32 %v301, %v289
    %v304 = vadd.f32 %v302, 1e-05
    %v305 = vadd.f32 %v303, 1e-05
    %v306 = vrsqrt.pop %v304
    %v307 = vrsqrt.pop %v305
    %v308 = vmul.f32 %v292, %v306
    %v309 = vmul.f32 %v293, %v307
    %v311 = vlaneseq
    %v312 = vshrl.u32 %v311, 7
    %v313 = vsub.s32 0, %v312
    %v314 = vrot.slane %v280, %v313
    %v316 = vmul.f32 %v308, %v314
    %v317 = vmul.f32 %v309, %v314
    %v319 = vlaneseq
    %v320 = vshrl.u32 %v319, 7
    %v321 = vsub.s32 0, %v320
    %v322 = vrot.slane %v281, %v321
    %v324 = vadd.f32 %v316, %v322
    %v325 = vadd.f32 %v317, %v322
    %v326 = vld [vmem:[%s6] sm:$0xff]
    %v327 = vld [vmem:[%s6 + $0x8] sm:$0xff]
    %v328 = vld [vmem:[%s6 + $0x10] sm:$0xff]
    %v329 = vld [vmem:[%s6 + $0x18] sm:$0xff]
    %v330 = vld [vmem:[%s7] sm:$0x1]
    %v332 = vlaneseq
    %v333 = vshrl.u32 %v332, 7
    %v334 = vsub.s32 0, %v333
    %v335 = vrot.slane %v330, %v334
    %v338 = vsel %vm282, %v324, 0
    %v341 = vsel %vm282, %v325, 0
    %343 = vmatprep.subr.mxu0 0.0
    %344 = vmatpush1.msra.mxu0 0.0
    %345 = vmatprep.subr.mxu0 0.0
    %346 = vmatpush1.msra.mxu0 0.0
    %347 = vmatprep.subr.mxu0 0.0
    %348 = vmatpush1.msra.mxu0 0.0
    %349 = vmatprep.subr.mxu0 0.0
    %350 = vmatpush1.msra.mxu0 0.0
    %351 = vmatprep.subr.mxu0 0.0
    %352 = vmatpush1.msra.mxu0 0.0
    %353 = vmatprep.subr.mxu0 0.0
    %354 = vmatpush1.msra.mxu0 0.0
    %355 = vmatprep.subr.mxu0 0.0
    %356 = vmatpush1.msra.mxu0 0.0
    %357 = vmatprep.subr.mxu0 0.0
    %358 = vmatpush1.msra.mxu0 0.0
    %359 = vmatprep.subr.mxu0 0.0
    %360 = vmatpush1.msra.mxu0 0.0
    %361 = vmatprep.subr.mxu0 0.0
    %362 = vmatpush1.msra.mxu0 0.0
    %363 = vmatprep.subr.mxu0 0.0
    %364 = vmatpush1.msra.mxu0 0.0
    %365 = vmatprep.subr.mxu0 0.0
    %366 = vmatpush1.msra.mxu0 0.0
    %367 = vmatprep.subr.mxu0 0.0
    %368 = vmatpush1.msra.mxu0 %v329
    %369 = vmatprep.subr.mxu0 0.0
    %370 = vmatpush1.msra.mxu0 %v328
    %371 = vmatprep.subr.mxu0 0.0
    %372 = vmatpush1.msra.mxu0 %v327
    %373 = vmatprep.subr.mxu0 0.0
    %374 = vmatpush1.msra.mxu0 %v326
    %375 = vmatprep.subr.mxu0 0.0
    %376 = vmatpush2.msra.mxu0 0.0
    %377 = vmatprep.subr.mxu0 0.0
    %378 = vmatpush2.msra.mxu0 0.0
    %379 = vmatprep.subr.mxu0 0.0
    %380 = vmatpush2.msra.mxu0 0.0
    %381 = vmatprep.subr.mxu0 0.0
    %382 = vmatpush2.msra.mxu0 0.0
    %383 = vmatprep.subr.mxu0 0.0
    %384 = vmatpush2.msra.mxu0 0.0
    %385 = vmatprep.subr.mxu0 0.0
    %386 = vmatpush2.msra.mxu0 0.0
    %387 = vmatprep.subr.mxu0 0.0
    %388 = vmatpush2.msra.mxu0 0.0
    %389 = vmatprep.subr.mxu0 0.0
    %390 = vmatpush2.msra.mxu0 0.0
    %391 = vmatprep.subr.mxu0 0.0
    %392 = vmatpush2.msra.mxu0 0.0
    %393 = vmatprep.subr.mxu0 0.0
    %394 = vmatpush2.msra.mxu0 0.0
    %395 = vmatprep.subr.mxu0 0.0
    %396 = vmatpush2.msra.mxu0 0.0
    %397 = vmatprep.subr.mxu0 0.0
    %398 = vmatpush2.msra.mxu0 0.0
    %399 = vmatprep.subr.mxu0 0.0
    %400 = vmatpush2.msra.mxu0 0.0
    %401 = vmatprep.subr.mxu0 0.0
    %402 = vmatpush2.msra.mxu0 0.0
    %403 = vmatprep.subr.mxu0 0.0
    %404 = vmatpush2.msra.mxu0 0.0
    %405 = vmatprep.subr.mxu0 0.0
    %406 = vmatpush2.msra.mxu0 0.0
    %407 = vmatprep.mubr.f32.mxu0 0.0
    %408 = vmatmul.mubr.f32.gmra.mxu0 %v338
    %v409 = vpop.f32.mrf.mxu0
    %v410 = vadd.f32 %v335, %v409
    %v411 = vpop.f32.mrf.mxu0
    %412 = vmatprep.mubr.f32.mxu0 0.0
    %413 = vmatmul.mubr.f32.gmra.mxu0 %v341
    %v414 = vpop.f32.mrf.mxu0
    %v415 = vadd.f32 %v335, %v414
    %v416 = vpop.f32.mrf.mxu0
    %417 = vdwg.mxu0
    %420 = vrot.lane.b32.xlu0 %v410, 120
    %v421 = vpop.permute.xlu0 %420
    %422 = vrot.lane.b32.xlu0 %v415, 120
    %v423 = vpop.permute.xlu0 %422
    %424 = vrot.lane.b32.xlu0 %v410, 112
    %v425 = vpop.permute.xlu0 %424
    %426 = vrot.lane.b32.xlu0 %v415, 112
    %v427 = vpop.permute.xlu0 %426
    %428 = vrot.lane.b32.xlu0 %v410, 104
    %v429 = vpop.permute.xlu0 %428
    %430 = vrot.lane.b32.xlu0 %v415, 104
    %v431 = vpop.permute.xlu0 %430
    %432 = vrot.lane.b32.xlu0 %v410, 96
    %v433 = vpop.permute.xlu0 %432
    %vm434 = vcmask 64512
    %v435 = vsel %vm434, %v410, 0
    %v437 = vsel %vm434, %v433, 0
    %439 = vmatprep.subr.mxu0 0.0
    %440 = vmatpush1.xpose.msra.mxu0 0.0
    %441 = vmatprep.subr.mxu0 0.0
    %442 = vmatpush1.xpose.msra.mxu0 0.0
    %443 = vmatprep.subr.mxu0 0.0
    %444 = vmatpush1.xpose.msra.mxu0 0.0
    %445 = vmatprep.subr.mxu0 0.0
    %446 = vmatpush1.xpose.msra.mxu0 0.0
    %447 = vmatprep.subr.mxu0 0.0
    %448 = vmatpush1.xpose.msra.mxu0 0.0
    %449 = vmatprep.subr.mxu0 0.0
    %450 = vmatpush1.xpose.msra.mxu0 0.0
    %451 = vmatprep.subr.mxu0 0.0
    %452 = vmatpush1.xpose.msra.mxu0 0.0
    %453 = vmatprep.subr.mxu0 0.0
    %454 = vmatpush1.xpose.msra.mxu0 0.0
    %455 = vmatprep.subr.mxu0 0.0
    %456 = vmatpush1.xpose.msra.mxu0 0.0
    %457 = vmatprep.subr.mxu0 0.0
    %458 = vmatpush1.xpose.msra.mxu0 0.0
    %459 = vmatprep.subr.mxu0 0.0
    %460 = vmatpush1.xpose.msra.mxu0 0.0
    %461 = vmatprep.subr.mxu0 0.0
    %462 = vmatpush1.xpose.msra.mxu0 0.0
    %463 = vmatprep.subr.mxu0 0.0
    %464 = vmatpush1.xpose.msra.mxu0 0.0
    %465 = vmatprep.subr.mxu0 0.0
    %466 = vmatpush1.xpose.msra.mxu0 0.0
    %467 = vmatprep.subr.mxu0 0.0
    %468 = vmatpush1.xpose.msra.mxu0 0.0
    %469 = vmatprep.subr.mxu0 0.0
    %470 = vmatpush1.xpose.msra.mxu0 %v437
    %471 = vmatprep.subr.mxu0 0.0
    %472 = vmatpush2.xpose.msra.mxu0 0.0
    %473 = vmatprep.subr.mxu0 0.0
    %474 = vmatpush2.xpose.msra.mxu0 0.0
    %475 = vmatprep.subr.mxu0 0.0
    %476 = vmatpush2.xpose.msra.mxu0 0.0
    %477 = vmatprep.subr.mxu0 0.0
    %478 = vmatpush2.xpose.msra.mxu0 0.0
    %479 = vmatprep.subr.mxu0 0.0
    %480 = vmatpush2.xpose.msra.mxu0 0.0
    %481 = vmatprep.subr.mxu0 0.0
    %482 = vmatpush2.xpose.msra.mxu0 0.0
    %483 = vmatprep.subr.mxu0 0.0
    %484 = vmatpush2.xpose.msra.mxu0 0.0
    %485 = vmatprep.subr.mxu0 0.0
    %486 = vmatpush2.xpose.msra.mxu0 0.0
    %487 = vmatprep.subr.mxu0 0.0
    %488 = vmatpush2.xpose.msra.mxu0 0.0
    %489 = vmatprep.subr.mxu0 0.0
    %490 = vmatpush2.xpose.msra.mxu0 0.0
    %491 = vmatprep.subr.mxu0 0.0
    %492 = vmatpush2.xpose.msra.mxu0 0.0
    %493 = vmatprep.subr.mxu0 0.0
    %494 = vmatpush2.xpose.msra.mxu0 0.0
    %495 = vmatprep.subr.mxu0 0.0
    %496 = vmatpush2.xpose.msra.mxu0 0.0
    %497 = vmatprep.subr.mxu0 0.0
    %498 = vmatpush2.xpose.msra.mxu0 0.0
    %499 = vmatprep.subr.mxu0 0.0
    %500 = vmatpush2.xpose.msra.mxu0 0.0
    %501 = vmatprep.subr.mxu0 0.0
    %502 = vmatpush2.xpose.msra.mxu0 0.0
    %503 = vmatprep.mubr.f32.mxu0 0.0
    %504 = vmatmul.mubr.f32.gmra.mxu0 %v435
    %v505 = vpop.f32.mrf.mxu0
    %v506 = vadd.f32 0.0, %v505
    %v507 = vpop.f32.mrf.mxu0
    %508 = vdwg.mxu0
    %509 = vrot.lane.b32.xlu0 %v415, 96
    %v510 = vpop.permute.xlu0 %509
    %v511 = vsel %vm434, %v415, 0
    %v513 = vsel %vm434, %v510, 0
    %515 = vmatprep.subr.mxu0 0.0
    %516 = vmatpush1.xpose.msra.mxu0 0.0
    %517 = vmatprep.subr.mxu0 0.0
    %518 = vmatpush1.xpose.msra.mxu0 0.0
    %519 = vmatprep.subr.mxu0 0.0
    %520 = vmatpush1.xpose.msra.mxu0 0.0
    %521 = vmatprep.subr.mxu0 0.0
    %522 = vmatpush1.xpose.msra.mxu0 0.0
    %523 = vmatprep.subr.mxu0 0.0
    %524 = vmatpush1.xpose.msra.mxu0 0.0
    %525 = vmatprep.subr.mxu0 0.0
    %526 = vmatpush1.xpose.msra.mxu0 0.0
    %527 = vmatprep.subr.mxu0 0.0
    %528 = vmatpush1.xpose.msra.mxu0 0.0
    %529 = vmatprep.subr.mxu0 0.0
    %530 = vmatpush1.xpose.msra.mxu0 0.0
    %531 = vmatprep.subr.mxu0 0.0
    %532 = vmatpush1.xpose.msra.mxu0 0.0
    %533 = vmatprep.subr.mxu0 0.0
    %534 = vmatpush1.xpose.msra.mxu0 0.0
    %535 = vmatprep.subr.mxu0 0.0
    %536 = vmatpush1.xpose.msra.mxu0 0.0
    %537 = vmatprep.subr.mxu0 0.0
    %538 = vmatpush1.xpose.msra.mxu0 0.0
    %539 = vmatprep.subr.mxu0 0.0
    %540 = vmatpush1.xpose.msra.mxu0 0.0
    %541 = vmatprep.subr.mxu0 0.0
    %542 = vmatpush1.xpose.msra.mxu0 0.0
    %543 = vmatprep.subr.mxu0 0.0
    %544 = vmatpush1.xpose.msra.mxu0 0.0
    %545 = vmatprep.subr.mxu0 0.0
    %546 = vmatpush1.xpose.msra.mxu0 %v513
    %547 = vmatprep.subr.mxu0 0.0
    %548 = vmatpush2.xpose.msra.mxu0 0.0
    %549 = vmatprep.subr.mxu0 0.0
    %550 = vmatpush2.xpose.msra.mxu0 0.0
    %551 = vmatprep.subr.mxu0 0.0
    %552 = vmatpush2.xpose.msra.mxu0 0.0
    %553 = vmatprep.subr.mxu0 0.0
    %554 = vmatpush2.xpose.msra.mxu0 0.0
    %555 = vmatprep.subr.mxu0 0.0
    %556 = vmatpush2.xpose.msra.mxu0 0.0
    %557 = vmatprep.subr.mxu0 0.0
    %558 = vmatpush2.xpose.msra.mxu0 0.0
    %559 = vmatprep.subr.mxu0 0.0
    %560 = vmatpush2.xpose.msra.mxu0 0.0
    %561 = vmatprep.subr.mxu0 0.0
    %562 = vmatpush2.xpose.msra.mxu0 0.0
    %563 = vmatprep.subr.mxu0 0.0
    %564 = vmatpush2.xpose.msra.mxu0 0.0
    %565 = vmatprep.subr.mxu0 0.0
    %566 = vmatpush2.xpose.msra.mxu0 0.0
    %567 = vmatprep.subr.mxu0 0.0
    %568 = vmatpush2.xpose.msra.mxu0 0.0
    %569 = vmatprep.subr.mxu0 0.0
    %570 = vmatpush2.xpose.msra.mxu0 0.0
    %571 = vmatprep.subr.mxu0 0.0
    %572 = vmatpush2.xpose.msra.mxu0 0.0
    %573 = vmatprep.subr.mxu0 0.0
    %574 = vmatpush2.xpose.msra.mxu0 0.0
    %575 = vmatprep.subr.mxu0 0.0
    %576 = vmatpush2.xpose.msra.mxu0 0.0
    %577 = vmatprep.subr.mxu0 0.0
    %578 = vmatpush2.xpose.msra.mxu0 0.0
    %579 = vmatprep.mubr.f32.mxu0 0.0
    %580 = vmatmul.mubr.f32.gmra.mxu0 %v511
    %v581 = vpop.f32.mrf.mxu0
    %v582 = vadd.f32 0.0, %v581
    %v583 = vpop.f32.mrf.mxu0
    %584 = vdwg.mxu0
    %585 = vrot.lane.b32.xlu0 %v421, 96
    %v586 = vpop.permute.xlu0 %585
    %v587 = vsel %vm434, %v421, 0
    %v589 = vsel %vm434, %v586, 0
    %591 = vmatprep.subr.mxu0 0.0
    %592 = vmatpush1.xpose.msra.mxu0 0.0
    %593 = vmatprep.subr.mxu0 0.0
    %594 = vmatpush1.xpose.msra.mxu0 0.0
    %595 = vmatprep.subr.mxu0 0.0
    %596 = vmatpush1.xpose.msra.mxu0 0.0
    %597 = vmatprep.subr.mxu0 0.0
    %598 = vmatpush1.xpose.msra.mxu0 0.0
    %599 = vmatprep.subr.mxu0 0.0
    %600 = vmatpush1.xpose.msra.mxu0 0.0
    %601 = vmatprep.subr.mxu0 0.0
    %602 = vmatpush1.xpose.msra.mxu0 0.0
    %603 = vmatprep.subr.mxu0 0.0
    %604 = vmatpush1.xpose.msra.mxu0 0.0
    %605 = vmatprep.subr.mxu0 0.0
    %606 = vmatpush1.xpose.msra.mxu0 0.0
    %607 = vmatprep.subr.mxu0 0.0
    %608 = vmatpush1.xpose.msra.mxu0 0.0
    %609 = vmatprep.subr.mxu0 0.0
    %610 = vmatpush1.xpose.msra.mxu0 0.0
    %611 = vmatprep.subr.mxu0 0.0
    %612 = vmatpush1.xpose.msra.mxu0 0.0
    %613 = vmatprep.subr.mxu0 0.0
    %614 = vmatpush1.xpose.msra.mxu0 0.0
    %615 = vmatprep.subr.mxu0 0.0
    %616 = vmatpush1.xpose.msra.mxu0 0.0
    %617 = vmatprep.subr.mxu0 0.0
    %618 = vmatpush1.xpose.msra.mxu0 0.0
    %619 = vmatprep.subr.mxu0 0.0
    %620 = vmatpush1.xpose.msra.mxu0 0.0
    %621 = vmatprep.subr.mxu0 0.0
    %622 = vmatpush1.xpose.msra.mxu0 %v589
    %623 = vmatprep.subr.mxu0 0.0
    %624 = vmatpush2.xpose.msra.mxu0 0.0
    %625 = vmatprep.subr.mxu0 0.0
    %626 = vmatpush2.xpose.msra.mxu0 0.0
    %627 = vmatprep.subr.mxu0 0.0
    %628 = vmatpush2.xpose.msra.mxu0 0.0
    %629 = vmatprep.subr.mxu0 0.0
    %630 = vmatpush2.xpose.msra.mxu0 0.0
    %631 = vmatprep.subr.mxu0 0.0
    %632 = vmatpush2.xpose.msra.mxu0 0.0
    %633 = vmatprep.subr.mxu0 0.0
    %634 = vmatpush2.xpose.msra.mxu0 0.0
    %635 = vmatprep.subr.mxu0 0.0
    %636 = vmatpush2.xpose.msra.mxu0 0.0
    %637 = vmatprep.subr.mxu0 0.0
    %638 = vmatpush2.xpose.msra.mxu0 0.0
    %639 = vmatprep.subr.mxu0 0.0
    %640 = vmatpush2.xpose.msra.mxu0 0.0
    %641 = vmatprep.subr.mxu0 0.0
    %642 = vmatpush2.xpose.msra.mxu0 0.0
    %643 = vmatprep.subr.mxu0 0.0
    %644 = vmatpush2.xpose.msra.mxu0 0.0
    %645 = vmatprep.subr.mxu0 0.0
    %646 = vmatpush2.xpose.msra.mxu0 0.0
    %647 = vmatprep.subr.mxu0 0.0
    %648 = vmatpush2.xpose.msra.mxu0 0.0
    %649 = vmatprep.subr.mxu0 0.0
    %650 = vmatpush2.xpose.msra.mxu0 0.0
    %651 = vmatprep.subr.mxu0 0.0
    %652 = vmatpush2.xpose.msra.mxu0 0.0
    %653 = vmatprep.subr.mxu0 0.0
    %654 = vmatpush2.xpose.msra.mxu0 0.0
    %655 = vmatprep.mubr.f32.mxu0 0.0
    %656 = vmatmul.mubr.f32.gmra.mxu0 %v587
    %v657 = vpop.f32.mrf.mxu0
    %v658 = vadd.f32 0.0, %v657
    %v659 = vpop.f32.mrf.mxu0
    %660 = vdwg.mxu0
    %661 = vrot.lane.b32.xlu0 %v423, 96
    %v662 = vpop.permute.xlu0 %661
    %v663 = vsel %vm434, %v423, 0
    %v665 = vsel %vm434, %v662, 0
    %667 = vmatprep.subr.mxu0 0.0
    %668 = vmatpush1.xpose.msra.mxu0 0.0
    %669 = vmatprep.subr.mxu0 0.0
    %670 = vmatpush1.xpose.msra.mxu0 0.0
    %671 = vmatprep.subr.mxu0 0.0
    %672 = vmatpush1.xpose.msra.mxu0 0.0
    %673 = vmatprep.subr.mxu0 0.0
    %674 = vmatpush1.xpose.msra.mxu0 0.0
    %675 = vmatprep.subr.mxu0 0.0
    %676 = vmatpush1.xpose.msra.mxu0 0.0
    %677 = vmatprep.subr.mxu0 0.0
    %678 = vmatpush1.xpose.msra.mxu0 0.0
    %679 = vmatprep.subr.mxu0 0.0
    %680 = vmatpush1.xpose.msra.mxu0 0.0
    %681 = vmatprep.subr.mxu0 0.0
    %682 = vmatpush1.xpose.msra.mxu0 0.0
    %683 = vmatprep.subr.mxu0 0.0
    %684 = vmatpush1.xpose.msra.mxu0 0.0
    %685 = vmatprep.subr.mxu0 0.0
    %686 = vmatpush1.xpose.msra.mxu0 0.0
    %687 = vmatprep.subr.mxu0 0.0
    %688 = vmatpush1.xpose.msra.mxu0 0.0
    %689 = vmatprep.subr.mxu0 0.0
    %690 = vmatpush1.xpose.msra.mxu0 0.0
    %691 = vmatprep.subr.mxu0 0.0
    %692 = vmatpush1.xpose.msra.mxu0 0.0
    %693 = vmatprep.subr.mxu0 0.0
    %694 = vmatpush1.xpose.msra.mxu0 0.0
    %695 = vmatprep.subr.mxu0 0.0
    %696 = vmatpush1.xpose.msra.mxu0 0.0
    %697 = vmatprep.subr.mxu0 0.0
    %698 = vmatpush1.xpose.msra.mxu0 %v665
    %699 = vmatprep.subr.mxu0 0.0
    %700 = vmatpush2.xpose.msra.mxu0 0.0
    %701 = vmatprep.subr.mxu0 0.0
    %702 = vmatpush2.xpose.msra.mxu0 0.0
    %703 = vmatprep.subr.mxu0 0.0
    %704 = vmatpush2.xpose.msra.mxu0 0.0
    %705 = vmatprep.subr.mxu0 0.0
    %706 = vmatpush2.xpose.msra.mxu0 0.0
    %707 = vmatprep.subr.mxu0 0.0
    %708 = vmatpush2.xpose.msra.mxu0 0.0
    %709 = vmatprep.subr.mxu0 0.0
    %710 = vmatpush2.xpose.msra.mxu0 0.0
    %711 = vmatprep.subr.mxu0 0.0
    %712 = vmatpush2.xpose.msra.mxu0 0.0
    %713 = vmatprep.subr.mxu0 0.0
    %714 = vmatpush2.xpose.msra.mxu0 0.0
    %715 = vmatprep.subr.mxu0 0.0
    %716 = vmatpush2.xpose.msra.mxu0 0.0
    %717 = vmatprep.subr.mxu0 0.0
    %718 = vmatpush2.xpose.msra.mxu0 0.0
    %719 = vmatprep.subr.mxu0 0.0
    %720 = vmatpush2.xpose.msra.mxu0 0.0
    %721 = vmatprep.subr.mxu0 0.0
    %722 = vmatpush2.xpose.msra.mxu0 0.0
    %723 = vmatprep.subr.mxu0 0.0
    %724 = vmatpush2.xpose.msra.mxu0 0.0
    %725 = vmatprep.subr.mxu0 0.0
    %726 = vmatpush2.xpose.msra.mxu0 0.0
    %727 = vmatprep.subr.mxu0 0.0
    %728 = vmatpush2.xpose.msra.mxu0 0.0
    %729 = vmatprep.subr.mxu0 0.0
    %730 = vmatpush2.xpose.msra.mxu0 0.0
    %731 = vmatprep.mubr.f32.mxu0 0.0
    %732 = vmatmul.mubr.f32.gmra.mxu0 %v663
    %v733 = vpop.f32.mrf.mxu0
    %v734 = vadd.f32 0.0, %v733
    %v735 = vpop.f32.mrf.mxu0
    %736 = vdwg.mxu0
    %737 = vrot.lane.b32.xlu0 %v425, 96
    %v738 = vpop.permute.xlu0 %737
    %v739 = vsel %vm434, %v425, 0
    %v741 = vsel %vm434, %v738, 0
    %743 = vmatprep.subr.mxu0 0.0
    %744 = vmatpush1.xpose.msra.mxu0 0.0
    %745 = vmatprep.subr.mxu0 0.0
    %746 = vmatpush1.xpose.msra.mxu0 0.0
    %747 = vmatprep.subr.mxu0 0.0
    %748 = vmatpush1.xpose.msra.mxu0 0.0
    %749 = vmatprep.subr.mxu0 0.0
    %750 = vmatpush1.xpose.msra.mxu0 0.0
    %751 = vmatprep.subr.mxu0 0.0
    %752 = vmatpush1.xpose.msra.mxu0 0.0
    %753 = vmatprep.subr.mxu0 0.0
    %754 = vmatpush1.xpose.msra.mxu0 0.0
    %755 = vmatprep.subr.mxu0 0.0
    %756 = vmatpush1.xpose.msra.mxu0 0.0
    %757 = vmatprep.subr.mxu0 0.0
    %758 = vmatpush1.xpose.msra.mxu0 0.0
    %759 = vmatprep.subr.mxu0 0.0
    %760 = vmatpush1.xpose.msra.mxu0 0.0
    %761 = vmatprep.subr.mxu0 0.0
    %762 = vmatpush1.xpose.msra.mxu0 0.0
    %763 = vmatprep.subr.mxu0 0.0
    %764 = vmatpush1.xpose.msra.mxu0 0.0
    %765 = vmatprep.subr.mxu0 0.0
    %766 = vmatpush1.xpose.msra.mxu0 0.0
    %767 = vmatprep.subr.mxu0 0.0
    %768 = vmatpush1.xpose.msra.mxu0 0.0
    %769 = vmatprep.subr.mxu0 0.0
    %770 = vmatpush1.xpose.msra.mxu0 0.0
    %771 = vmatprep.subr.mxu0 0.0
    %772 = vmatpush1.xpose.msra.mxu0 0.0
    %773 = vmatprep.subr.mxu0 0.0
    %774 = vmatpush1.xpose.msra.mxu0 %v741
    %775 = vmatprep.subr.mxu0 0.0
    %776 = vmatpush2.xpose.msra.mxu0 0.0
    %777 = vmatprep.subr.mxu0 0.0
    %778 = vmatpush2.xpose.msra.mxu0 0.0
    %779 = vmatprep.subr.mxu0 0.0
    %780 = vmatpush2.xpose.msra.mxu0 0.0
    %781 = vmatprep.subr.mxu0 0.0
    %782 = vmatpush2.xpose.msra.mxu0 0.0
    %783 = vmatprep.subr.mxu0 0.0
    %784 = vmatpush2.xpose.msra.mxu0 0.0
    %785 = vmatprep.subr.mxu0 0.0
    %786 = vmatpush2.xpose.msra.mxu0 0.0
    %787 = vmatprep.subr.mxu0 0.0
    %788 = vmatpush2.xpose.msra.mxu0 0.0
    %789 = vmatprep.subr.mxu0 0.0
    %790 = vmatpush2.xpose.msra.mxu0 0.0
    %791 = vmatprep.subr.mxu0 0.0
    %792 = vmatpush2.xpose.msra.mxu0 0.0
    %793 = vmatprep.subr.mxu0 0.0
    %794 = vmatpush2.xpose.msra.mxu0 0.0
    %795 = vmatprep.subr.mxu0 0.0
    %796 = vmatpush2.xpose.msra.mxu0 0.0
    %797 = vmatprep.subr.mxu0 0.0
    %798 = vmatpush2.xpose.msra.mxu0 0.0
    %799 = vmatprep.subr.mxu0 0.0
    %800 = vmatpush2.xpose.msra.mxu0 0.0
    %801 = vmatprep.subr.mxu0 0.0
    %802 = vmatpush2.xpose.msra.mxu0 0.0
    %803 = vmatprep.subr.mxu0 0.0
    %804 = vmatpush2.xpose.msra.mxu0 0.0
    %805 = vmatprep.subr.mxu0 0.0
    %806 = vmatpush2.xpose.msra.mxu0 0.0
    %807 = vmatprep.mubr.f32.mxu0 0.0
    %808 = vmatmul.mubr.f32.gmra.mxu0 %v739
    %v809 = vpop.f32.mrf.mxu0
    %v810 = vadd.f32 0.0, %v809
    %v811 = vpop.f32.mrf.mxu0
    %812 = vdwg.mxu0
    %813 = vrot.lane.b32.xlu0 %v427, 96
    %v814 = vpop.permute.xlu0 %813
    %v815 = vsel %vm434, %v427, 0
    %v817 = vsel %vm434, %v814, 0
    %819 = vmatprep.subr.mxu0 0.0
    %820 = vmatpush1.xpose.msra.mxu0 0.0
    %821 = vmatprep.subr.mxu0 0.0
    %822 = vmatpush1.xpose.msra.mxu0 0.0
    %823 = vmatprep.subr.mxu0 0.0
    %824 = vmatpush1.xpose.msra.mxu0 0.0
    %825 = vmatprep.subr.mxu0 0.0
    %826 = vmatpush1.xpose.msra.mxu0 0.0
    %827 = vmatprep.subr.mxu0 0.0
    %828 = vmatpush1.xpose.msra.mxu0 0.0
    %829 = vmatprep.subr.mxu0 0.0
    %830 = vmatpush1.xpose.msra.mxu0 0.0
    %831 = vmatprep.subr.mxu0 0.0
    %832 = vmatpush1.xpose.msra.mxu0 0.0
    %833 = vmatprep.subr.mxu0 0.0
    %834 = vmatpush1.xpose.msra.mxu0 0.0
    %835 = vmatprep.subr.mxu0 0.0
    %836 = vmatpush1.xpose.msra.mxu0 0.0
    %837 = vmatprep.subr.mxu0 0.0
    %838 = vmatpush1.xpose.msra.mxu0 0.0
    %839 = vmatprep.subr.mxu0 0.0
    %840 = vmatpush1.xpose.msra.mxu0 0.0
    %841 = vmatprep.subr.mxu0 0.0
    %842 = vmatpush1.xpose.msra.mxu0 0.0
    %843 = vmatprep.subr.mxu0 0.0
    %844 = vmatpush1.xpose.msra.mxu0 0.0
    %845 = vmatprep.subr.mxu0 0.0
    %846 = vmatpush1.xpose.msra.mxu0 0.0
    %847 = vmatprep.subr.mxu0 0.0
    %848 = vmatpush1.xpose.msra.mxu0 0.0
    %849 = vmatprep.subr.mxu0 0.0
    %850 = vmatpush1.xpose.msra.mxu0 %v817
    %851 = vmatprep.subr.mxu0 0.0
    %852 = vmatpush2.xpose.msra.mxu0 0.0
    %853 = vmatprep.subr.mxu0 0.0
    %854 = vmatpush2.xpose.msra.mxu0 0.0
    %855 = vmatprep.subr.mxu0 0.0
    %856 = vmatpush2.xpose.msra.mxu0 0.0
    %857 = vmatprep.subr.mxu0 0.0
    %858 = vmatpush2.xpose.msra.mxu0 0.0
    %859 = vmatprep.subr.mxu0 0.0
    %860 = vmatpush2.xpose.msra.mxu0 0.0
    %861 = vmatprep.subr.mxu0 0.0
    %862 = vmatpush2.xpose.msra.mxu0 0.0
    %863 = vmatprep.subr.mxu0 0.0
    %864 = vmatpush2.xpose.msra.mxu0 0.0
    %865 = vmatprep.subr.mxu0 0.0
    %866 = vmatpush2.xpose.msra.mxu0 0.0
    %867 = vmatprep.subr.mxu0 0.0
    %868 = vmatpush2.xpose.msra.mxu0 0.0
    %869 = vmatprep.subr.mxu0 0.0
    %870 = vmatpush2.xpose.msra.mxu0 0.0
    %871 = vmatprep.subr.mxu0 0.0
    %872 = vmatpush2.xpose.msra.mxu0 0.0
    %873 = vmatprep.subr.mxu0 0.0
    %874 = vmatpush2.xpose.msra.mxu0 0.0
    %875 = vmatprep.subr.mxu0 0.0
    %876 = vmatpush2.xpose.msra.mxu0 0.0
    %877 = vmatprep.subr.mxu0 0.0
    %878 = vmatpush2.xpose.msra.mxu0 0.0
    %879 = vmatprep.subr.mxu0 0.0
    %880 = vmatpush2.xpose.msra.mxu0 0.0
    %881 = vmatprep.subr.mxu0 0.0
    %882 = vmatpush2.xpose.msra.mxu0 0.0
    %883 = vmatprep.mubr.f32.mxu0 0.0
    %884 = vmatmul.mubr.f32.gmra.mxu0 %v815
    %v885 = vpop.f32.mrf.mxu0
    %v886 = vadd.f32 0.0, %v885
    %v887 = vpop.f32.mrf.mxu0
    %888 = vdwg.mxu0
    %889 = vrot.lane.b32.xlu0 %v429, 96
    %v890 = vpop.permute.xlu0 %889
    %v891 = vsel %vm434, %v429, 0
    %v893 = vsel %vm434, %v890, 0
    %895 = vmatprep.subr.mxu0 0.0
    %896 = vmatpush1.xpose.msra.mxu0 0.0
    %897 = vmatprep.subr.mxu0 0.0
    %898 = vmatpush1.xpose.msra.mxu0 0.0
    %899 = vmatprep.subr.mxu0 0.0
    %900 = vmatpush1.xpose.msra.mxu0 0.0
    %901 = vmatprep.subr.mxu0 0.0
    %902 = vmatpush1.xpose.msra.mxu0 0.0
    %903 = vmatprep.subr.mxu0 0.0
    %904 = vmatpush1.xpose.msra.mxu0 0.0
    %905 = vmatprep.subr.mxu0 0.0
    %906 = vmatpush1.xpose.msra.mxu0 0.0
    %907 = vmatprep.subr.mxu0 0.0
    %908 = vmatpush1.xpose.msra.mxu0 0.0
    %909 = vmatprep.subr.mxu0 0.0
    %910 = vmatpush1.xpose.msra.mxu0 0.0
    %911 = vmatprep.subr.mxu0 0.0
    %912 = vmatpush1.xpose.msra.mxu0 0.0
    %913 = vmatprep.subr.mxu0 0.0
    %914 = vmatpush1.xpose.msra.mxu0 0.0
    %915 = vmatprep.subr.mxu0 0.0
    %916 = vmatpush1.xpose.msra.mxu0 0.0
    %917 = vmatprep.subr.mxu0 0.0
    %918 = vmatpush1.xpose.msra.mxu0 0.0
    %919 = vmatprep.subr.mxu0 0.0
    %920 = vmatpush1.xpose.msra.mxu0 0.0
    %921 = vmatprep.subr.mxu0 0.0
    %922 = vmatpush1.xpose.msra.mxu0 0.0
    %923 = vmatprep.subr.mxu0 0.0
    %924 = vmatpush1.xpose.msra.mxu0 0.0
    %925 = vmatprep.subr.mxu0 0.0
    %926 = vmatpush1.xpose.msra.mxu0 %v893
    %927 = vmatprep.subr.mxu0 0.0
    %928 = vmatpush2.xpose.msra.mxu0 0.0
    %929 = vmatprep.subr.mxu0 0.0
    %930 = vmatpush2.xpose.msra.mxu0 0.0
    %931 = vmatprep.subr.mxu0 0.0
    %932 = vmatpush2.xpose.msra.mxu0 0.0
    %933 = vmatprep.subr.mxu0 0.0
    %934 = vmatpush2.xpose.msra.mxu0 0.0
    %935 = vmatprep.subr.mxu0 0.0
    %936 = vmatpush2.xpose.msra.mxu0 0.0
    %937 = vmatprep.subr.mxu0 0.0
    %938 = vmatpush2.xpose.msra.mxu0 0.0
    %939 = vmatprep.subr.mxu0 0.0
    %940 = vmatpush2.xpose.msra.mxu0 0.0
    %941 = vmatprep.subr.mxu0 0.0
    %942 = vmatpush2.xpose.msra.mxu0 0.0
    %943 = vmatprep.subr.mxu0 0.0
    %944 = vmatpush2.xpose.msra.mxu0 0.0
    %945 = vmatprep.subr.mxu0 0.0
    %946 = vmatpush2.xpose.msra.mxu0 0.0
    %947 = vmatprep.subr.mxu0 0.0
    %948 = vmatpush2.xpose.msra.mxu0 0.0
    %949 = vmatprep.subr.mxu0 0.0
    %950 = vmatpush2.xpose.msra.mxu0 0.0
    %951 = vmatprep.subr.mxu0 0.0
    %952 = vmatpush2.xpose.msra.mxu0 0.0
    %953 = vmatprep.subr.mxu0 0.0
    %954 = vmatpush2.xpose.msra.mxu0 0.0
    %955 = vmatprep.subr.mxu0 0.0
    %956 = vmatpush2.xpose.msra.mxu0 0.0
    %957 = vmatprep.subr.mxu0 0.0
    %958 = vmatpush2.xpose.msra.mxu0 0.0
    %959 = vmatprep.mubr.f32.mxu0 0.0
    %960 = vmatmul.mubr.f32.gmra.mxu0 %v891
    %v961 = vpop.f32.mrf.mxu0
    %v962 = vadd.f32 0.0, %v961
    %v963 = vpop.f32.mrf.mxu0
    %964 = vdwg.mxu0
    %965 = vrot.lane.b32.xlu0 %v431, 96
    %v966 = vpop.permute.xlu0 %965
    %v967 = vsel %vm434, %v431, 0
    %v969 = vsel %vm434, %v966, 0
    %971 = vmatprep.subr.mxu0 0.0
    %972 = vmatpush1.xpose.msra.mxu0 0.0
    %973 = vmatprep.subr.mxu0 0.0
    %974 = vmatpush1.xpose.msra.mxu0 0.0
    %975 = vmatprep.subr.mxu0 0.0
    %976 = vmatpush1.xpose.msra.mxu0 0.0
    %977 = vmatprep.subr.mxu0 0.0
    %978 = vmatpush1.xpose.msra.mxu0 0.0
    %979 = vmatprep.subr.mxu0 0.0
    %980 = vmatpush1.xpose.msra.mxu0 0.0
    %981 = vmatprep.subr.mxu0 0.0
    %982 = vmatpush1.xpose.msra.mxu0 0.0
    %983 = vmatprep.subr.mxu0 0.0
    %984 = vmatpush1.xpose.msra.mxu0 0.0
    %985 = vmatprep.subr.mxu0 0.0
    %986 = vmatpush1.xpose.msra.mxu0 0.0
    %987 = vmatprep.subr.mxu0 0.0
    %988 = vmatpush1.xpose.msra.mxu0 0.0
    %989 = vmatprep.subr.mxu0 0.0
    %990 = vmatpush1.xpose.msra.mxu0 0.0
    %991 = vmatprep.subr.mxu0 0.0
    %992 = vmatpush1.xpose.msra.mxu0 0.0
    %993 = vmatprep.subr.mxu0 0.0
    %994 = vmatpush1.xpose.msra.mxu0 0.0
    %995 = vmatprep.subr.mxu0 0.0
    %996 = vmatpush1.xpose.msra.mxu0 0.0
    %997 = vmatprep.subr.mxu0 0.0
    %998 = vmatpush1.xpose.msra.mxu0 0.0
    %999 = vmatprep.subr.mxu0 0.0
    %1000 = vmatpush1.xpose.msra.mxu0 0.0
    %1001 = vmatprep.subr.mxu0 0.0
    %1002 = vmatpush1.xpose.msra.mxu0 %v969
    %1003 = vmatprep.subr.mxu0 0.0
    %1004 = vmatpush2.xpose.msra.mxu0 0.0
    %1005 = vmatprep.subr.mxu0 0.0
    %1006 = vmatpush2.xpose.msra.mxu0 0.0
    %1007 = vmatprep.subr.mxu0 0.0
    %1008 = vmatpush2.xpose.msra.mxu0 0.0
    %1009 = vmatprep.subr.mxu0 0.0
    %1010 = vmatpush2.xpose.msra.mxu0 0.0
    %1011 = vmatprep.subr.mxu0 0.0
    %1012 = vmatpush2.xpose.msra.mxu0 0.0
    %1013 = vmatprep.subr.mxu0 0.0
    %1014 = vmatpush2.xpose.msra.mxu0 0.0
    %1015 = vmatprep.subr.mxu0 0.0
    %1016 = vmatpush2.xpose.msra.mxu0 0.0
    %1017 = vmatprep.subr.mxu0 0.0
    %1018 = vmatpush2.xpose.msra.mxu0 0.0
    %1019 = vmatprep.subr.mxu0 0.0
    %1020 = vmatpush2.xpose.msra.mxu0 0.0
    %1021 = vmatprep.subr.mxu0 0.0
    %1022 = vmatpush2.xpose.msra.mxu0 0.0
    %1023 = vmatprep.subr.mxu0 0.0
    %1024 = vmatpush2.xpose.msra.mxu0 0.0
    %1025 = vmatprep.subr.mxu0 0.0
    %1026 = vmatpush2.xpose.msra.mxu0 0.0
    %1027 = vmatprep.subr.mxu0 0.0
    %1028 = vmatpush2.xpose.msra.mxu0 0.0
    %1029 = vmatprep.subr.mxu0 0.0
    %1030 = vmatpush2.xpose.msra.mxu0 0.0
    %1031 = vmatprep.subr.mxu0 0.0
    %1032 = vmatpush2.xpose.msra.mxu0 0.0
    %1033 = vmatprep.subr.mxu0 0.0
    %1034 = vmatpush2.xpose.msra.mxu0 0.0
    %1035 = vmatprep.mubr.f32.mxu0 0.0
    %1036 = vmatmul.mubr.f32.gmra.mxu0 %v967
    %v1037 = vpop.f32.mrf.mxu0
    %v1038 = vadd.f32 0.0, %v1037
    %v1039 = vpop.f32.mrf.mxu0
    %1040 = vdwg.mxu0
    %v1041 = vmul.f32 %v506, 0.35355338
    %v1042 = vmul.f32 %v582, 0.35355338
    %v1043 = vmul.f32 %v658, 0.35355338
    %v1044 = vmul.f32 %v734, 0.35355338
    %v1045 = vmul.f32 %v810, 0.35355338
    %v1046 = vmul.f32 %v886, 0.35355338
    %v1047 = vmul.f32 %v962, 0.35355338
    %v1048 = vmul.f32 %v1038, 0.35355338
    %v1049 = vadd.f32 %v1041, %v243
    %v1050 = vadd.f32 %v1042, %v247
    %v1051 = vadd.f32 %v1043, %v251
    %v1052 = vadd.f32 %v1044, %v255
    %v1053 = vadd.f32 %v1045, %v259
    %v1054 = vadd.f32 %v1046, %v263
    %v1055 = vadd.f32 %v1047, %v267
    %v1056 = vadd.f32 %v1048, %v271
    %v1057 = vsel %vm434, %v1049, -inf
    %1058 = vmax.xlane.f32.xlu0 %v1057
    %v1059 = vpop.xlane.xlu0 %1058
    %v1060 = vsel %vm434, %v1050, -inf
    %1061 = vmax.xlane.f32.xlu0 %v1060
    %v1062 = vpop.xlane.xlu0 %1061
    %v1063 = vsel %vm434, %v1051, -inf
    %1064 = vmax.xlane.f32.xlu0 %v1063
    %v1065 = vpop.xlane.xlu0 %1064
    %v1066 = vsel %vm434, %v1052, -inf
    %1067 = vmax.xlane.f32.xlu0 %v1066
    %v1068 = vpop.xlane.xlu0 %1067
    %v1069 = vsel %vm434, %v1053, -inf
    %1070 = vmax.xlane.f32.xlu0 %v1069
    %v1071 = vpop.xlane.xlu0 %1070
    %v1072 = vsel %vm434, %v1054, -inf
    %1073 = vmax.xlane.f32.xlu0 %v1072
    %v1074 = vpop.xlane.xlu0 %1073
    %v1075 = vsel %vm434, %v1055, -inf
    %1076 = vmax.xlane.f32.xlu0 %v1075
    %v1077 = vpop.xlane.xlu0 %1076
    %v1078 = vsel %vm434, %v1056, -inf
    %1079 = vmax.xlane.f32.xlu0 %v1078
    %v1080 = vpop.xlane.xlu0 %1079
    %v1081 = vsub.f32 %v1049, %v1059
    %v1082 = vsub.f32 %v1050, %v1062
    %v1083 = vsub.f32 %v1051, %v1065
    %v1084 = vsub.f32 %v1052, %v1068
    %v1085 = vsub.f32 %v1053, %v1071
    %v1086 = vsub.f32 %v1054, %v1074
    %v1087 = vsub.f32 %v1055, %v1077
    %v1088 = vsub.f32 %v1056, %v1080
    %v1089 = vmul.f32 %v1081, 1.442695
    %v1090 = vpow.pop %v1089
    %v1091 = vmul.f32 %v1082, 1.442695
    %v1092 = vpow.pop %v1091
    %v1093 = vmul.f32 %v1083, 1.442695
    %v1094 = vpow.pop %v1093
    %v1095 = vmul.f32 %v1084, 1.442695
    %v1096 = vpow.pop %v1095
    %v1097 = vmul.f32 %v1085, 1.442695
    %v1098 = vpow.pop %v1097
    %v1099 = vmul.f32 %v1086, 1.442695
    %v1100 = vpow.pop %v1099
    %v1101 = vmul.f32 %v1087, 1.442695
    %v1102 = vpow.pop %v1101
    %v1103 = vmul.f32 %v1088, 1.442695
    %v1104 = vpow.pop %v1103
    %v1105 = vsel %vm434, %v1090, 0.0
    %1106 = vadd.xlane.f32.xlu0 %v1105
    %v1107 = vpop.xlane.xlu0 %1106
    %v1108 = vsel %vm434, %v1092, 0.0
    %1109 = vadd.xlane.f32.xlu0 %v1108
    %v1110 = vpop.xlane.xlu0 %1109
    %v1111 = vsel %vm434, %v1094, 0.0
    %1112 = vadd.xlane.f32.xlu0 %v1111
    %v1113 = vpop.xlane.xlu0 %1112
    %v1114 = vsel %vm434, %v1096, 0.0
    %1115 = vadd.xlane.f32.xlu0 %v1114
    %v1116 = vpop.xlane.xlu0 %1115
    %v1117 = vsel %vm434, %v1098, 0.0
    %1118 = vadd.xlane.f32.xlu0 %v1117
    %v1119 = vpop.xlane.xlu0 %1118
    %v1120 = vsel %vm434, %v1100, 0.0
    %1121 = vadd.xlane.f32.xlu0 %v1120
    %v1122 = vpop.xlane.xlu0 %1121
    %v1123 = vsel %vm434, %v1102, 0.0
    %1124 = vadd.xlane.f32.xlu0 %v1123
    %v1125 = vpop.xlane.xlu0 %1124
    %v1126 = vsel %vm434, %v1104, 0.0
    %1127 = vadd.xlane.f32.xlu0 %v1126
    %v1128 = vpop.xlane.xlu0 %1127
    %v1129 = vrcp.pop %v1107
    %v1130 = vrcp.pop %v1110
    %v1131 = vrcp.pop %v1113
    %v1132 = vrcp.pop %v1116
    %v1133 = vrcp.pop %v1119
    %v1134 = vrcp.pop %v1122
    %v1135 = vrcp.pop %v1125
    %v1136 = vrcp.pop %v1128
    %v1137 = vmul.f32 %v1090, %v1129
    %v1138 = vmul.f32 %v1092, %v1130
    %v1139 = vmul.f32 %v1094, %v1131
    %v1140 = vmul.f32 %v1096, %v1132
    %v1141 = vmul.f32 %v1098, %v1133
    %v1142 = vmul.f32 %v1100, %v1134
    %v1143 = vmul.f32 %v1102, %v1135
    %v1144 = vmul.f32 %v1104, %v1136
    %1145 = vrot.lane.b32.xlu0 %v410, 64
    %v1146 = vpop.permute.xlu0 %1145
    %v1149 = vsel %vm434, %v1137, 0
    %1151 = vmatprep.subr.mxu0 0.0
    %1152 = vmatpush1.msra.mxu0 0.0
    %1153 = vmatprep.subr.mxu0 0.0
    %1154 = vmatpush1.msra.mxu0 0.0
    %1155 = vmatprep.subr.mxu0 0.0
    %1156 = vmatpush1.msra.mxu0 0.0
    %1157 = vmatprep.subr.mxu0 0.0
    %1158 = vmatpush1.msra.mxu0 0.0
    %1159 = vmatprep.subr.mxu0 0.0
    %1160 = vmatpush1.msra.mxu0 0.0
    %1161 = vmatprep.subr.mxu0 0.0
    %1162 = vmatpush1.msra.mxu0 0.0
    %1163 = vmatprep.subr.mxu0 0.0
    %1164 = vmatpush1.msra.mxu0 0.0
    %1165 = vmatprep.subr.mxu0 0.0
    %1166 = vmatpush1.msra.mxu0 0.0
    %1167 = vmatprep.subr.mxu0 0.0
    %1168 = vmatpush1.msra.mxu0 0.0
    %1169 = vmatprep.subr.mxu0 0.0
    %1170 = vmatpush1.msra.mxu0 0.0
    %1171 = vmatprep.subr.mxu0 0.0
    %1172 = vmatpush1.msra.mxu0 0.0
    %1173 = vmatprep.subr.mxu0 0.0
    %1174 = vmatpush1.msra.mxu0 0.0
    %1175 = vmatprep.subr.mxu0 0.0
    %1176 = vmatpush1.msra.mxu0 0.0
    %1177 = vmatprep.subr.mxu0 0.0
    %1178 = vmatpush1.msra.mxu0 0.0
    %1179 = vmatprep.subr.mxu0 0.0
    %1180 = vmatpush1.msra.mxu0 0.0
    %1181 = vmatprep.subr.mxu0 0.0
    %1182 = vmatpush1.msra.mxu0 %v1146
    %1183 = vmatprep.subr.mxu0 0.0
    %1184 = vmatpush2.msra.mxu0 0.0
    %1185 = vmatprep.subr.mxu0 0.0
    %1186 = vmatpush2.msra.mxu0 0.0
    %1187 = vmatprep.subr.mxu0 0.0
    %1188 = vmatpush2.msra.mxu0 0.0
    %1189 = vmatprep.subr.mxu0 0.0
    %1190 = vmatpush2.msra.mxu0 0.0
    %1191 = vmatprep.subr.mxu0 0.0
    %1192 = vmatpush2.msra.mxu0 0.0
    %1193 = vmatprep.subr.mxu0 0.0
    %1194 = vmatpush2.msra.mxu0 0.0
    %1195 = vmatprep.subr.mxu0 0.0
    %1196 = vmatpush2.msra.mxu0 0.0
    %1197 = vmatprep.subr.mxu0 0.0
    %1198 = vmatpush2.msra.mxu0 0.0
    %1199 = vmatprep.subr.mxu0 0.0
    %1200 = vmatpush2.msra.mxu0 0.0
    %1201 = vmatprep.subr.mxu0 0.0
    %1202 = vmatpush2.msra.mxu0 0.0
    %1203 = vmatprep.subr.mxu0 0.0
    %1204 = vmatpush2.msra.mxu0 0.0
    %1205 = vmatprep.subr.mxu0 0.0
    %1206 = vmatpush2.msra.mxu0 0.0
    %1207 = vmatprep.subr.mxu0 0.0
    %1208 = vmatpush2.msra.mxu0 0.0
    %1209 = vmatprep.subr.mxu0 0.0
    %1210 = vmatpush2.msra.mxu0 0.0
    %1211 = vmatprep.subr.mxu0 0.0
    %1212 = vmatpush2.msra.mxu0 0.0
    %1213 = vmatprep.subr.mxu0 0.0
    %1214 = vmatpush2.msra.mxu0 0.0
    %1215 = vmatprep.mubr.f32.mxu0 0.0
    %1216 = vmatmul.mubr.f32.gmra.mxu0 %v1149
    %v1217 = vpop.f32.mrf.mxu0
    %v1218 = vadd.f32 0.0, %v1217
    %v1219 = vpop.f32.mrf.mxu0
    %1220 = vdwg.mxu0
    %1221 = vrot.lane.b32.xlu0 %v415, 64
    %v1222 = vpop.permute.xlu0 %1221
    %v1225 = vsel %vm434, %v1138, 0
    %1227 = vmatprep.subr.mxu0 0.0
    %1228 = vmatpush1.msra.mxu0 0.0
    %1229 = vmatprep.subr.mxu0 0.0
    %1230 = vmatpush1.msra.mxu0 0.0
    %1231 = vmatprep.subr.mxu0 0.0
    %1232 = vmatpush1.msra.mxu0 0.0
    %1233 = vmatprep.subr.mxu0 0.0
    %1234 = vmatpush1.msra.mxu0 0.0
    %1235 = vmatprep.subr.mxu0 0.0
    %1236 = vmatpush1.msra.mxu0 0.0
    %1237 = vmatprep.subr.mxu0 0.0
    %1238 = vmatpush1.msra.mxu0 0.0
    %1239 = vmatprep.subr.mxu0 0.0
    %1240 = vmatpush1.msra.mxu0 0.0
    %1241 = vmatprep.subr.mxu0 0.0
    %1242 = vmatpush1.msra.mxu0 0.0
    %1243 = vmatprep.subr.mxu0 0.0
    %1244 = vmatpush1.msra.mxu0 0.0
    %1245 = vmatprep.subr.mxu0 0.0
    %1246 = vmatpush1.msra.mxu0 0.0
    %1247 = vmatprep.subr.mxu0 0.0
    %1248 = vmatpush1.msra.mxu0 0.0
    %1249 = vmatprep.subr.mxu0 0.0
    %1250 = vmatpush1.msra.mxu0 0.0
    %1251 = vmatprep.subr.mxu0 0.0
    %1252 = vmatpush1.msra.mxu0 0.0
    %1253 = vmatprep.subr.mxu0 0.0
    %1254 = vmatpush1.msra.mxu0 0.0
    %1255 = vmatprep.subr.mxu0 0.0
    %1256 = vmatpush1.msra.mxu0 0.0
    %1257 = vmatprep.subr.mxu0 0.0
    %1258 = vmatpush1.msra.mxu0 %v1222
    %1259 = vmatprep.subr.mxu0 0.0
    %1260 = vmatpush2.msra.mxu0 0.0
    %1261 = vmatprep.subr.mxu0 0.0
    %1262 = vmatpush2.msra.mxu0 0.0
    %1263 = vmatprep.subr.mxu0 0.0
    %1264 = vmatpush2.msra.mxu0 0.0
    %1265 = vmatprep.subr.mxu0 0.0
    %1266 = vmatpush2.msra.mxu0 0.0
    %1267 = vmatprep.subr.mxu0 0.0
    %1268 = vmatpush2.msra.mxu0 0.0
    %1269 = vmatprep.subr.mxu0 0.0
    %1270 = vmatpush2.msra.mxu0 0.0
    %1271 = vmatprep.subr.mxu0 0.0
    %1272 = vmatpush2.msra.mxu0 0.0
    %1273 = vmatprep.subr.mxu0 0.0
    %1274 = vmatpush2.msra.mxu0 0.0
    %1275 = vmatprep.subr.mxu0 0.0
    %1276 = vmatpush2.msra.mxu0 0.0
    %1277 = vmatprep.subr.mxu0 0.0
    %1278 = vmatpush2.msra.mxu0 0.0
    %1279 = vmatprep.subr.mxu0 0.0
    %1280 = vmatpush2.msra.mxu0 0.0
    %1281 = vmatprep.subr.mxu0 0.0
    %1282 = vmatpush2.msra.mxu0 0.0
    %1283 = vmatprep.subr.mxu0 0.0
    %1284 = vmatpush2.msra.mxu0 0.0
    %1285 = vmatprep.subr.mxu0 0.0
    %1286 = vmatpush2.msra.mxu0 0.0
    %1287 = vmatprep.subr.mxu0 0.0
    %1288 = vmatpush2.msra.mxu0 0.0
    %1289 = vmatprep.subr.mxu0 0.0
    %1290 = vmatpush2.msra.mxu0 0.0
    %1291 = vmatprep.mubr.f32.mxu0 0.0
    %1292 = vmatmul.mubr.f32.gmra.mxu0 %v1225
    %v1293 = vpop.f32.mrf.mxu0
    %v1294 = vadd.f32 0.0, %v1293
    %v1295 = vpop.f32.mrf.mxu0
    %1296 = vdwg.mxu0
    %1297 = vrot.lane.b32.xlu0 %v421, 64
    %v1298 = vpop.permute.xlu0 %1297
    %v1301 = vsel %vm434, %v1139, 0
    %1303 = vmatprep.subr.mxu0 0.0
    %1304 = vmatpush1.msra.mxu0 0.0
    %1305 = vmatprep.subr.mxu0 0.0
    %1306 = vmatpush1.msra.mxu0 0.0
    %1307 = vmatprep.subr.mxu0 0.0
    %1308 = vmatpush1.msra.mxu0 0.0
    %1309 = vmatprep.subr.mxu0 0.0
    %1310 = vmatpush1.msra.mxu0 0.0
    %1311 = vmatprep.subr.mxu0 0.0
    %1312 = vmatpush1.msra.mxu0 0.0
    %1313 = vmatprep.subr.mxu0 0.0
    %1314 = vmatpush1.msra.mxu0 0.0
    %1315 = vmatprep.subr.mxu0 0.0
    %1316 = vmatpush1.msra.mxu0 0.0
    %1317 = vmatprep.subr.mxu0 0.0
    %1318 = vmatpush1.msra.mxu0 0.0
    %1319 = vmatprep.subr.mxu0 0.0
    %1320 = vmatpush1.msra.mxu0 0.0
    %1321 = vmatprep.subr.mxu0 0.0
    %1322 = vmatpush1.msra.mxu0 0.0
    %1323 = vmatprep.subr.mxu0 0.0
    %1324 = vmatpush1.msra.mxu0 0.0
    %1325 = vmatprep.subr.mxu0 0.0
    %1326 = vmatpush1.msra.mxu0 0.0
    %1327 = vmatprep.subr.mxu0 0.0
    %1328 = vmatpush1.msra.mxu0 0.0
    %1329 = vmatprep.subr.mxu0 0.0
    %1330 = vmatpush1.msra.mxu0 0.0
    %1331 = vmatprep.subr.mxu0 0.0
    %1332 = vmatpush1.msra.mxu0 0.0
    %1333 = vmatprep.subr.mxu0 0.0
    %1334 = vmatpush1.msra.mxu0 %v1298
    %1335 = vmatprep.subr.mxu0 0.0
    %1336 = vmatpush2.msra.mxu0 0.0
    %1337 = vmatprep.subr.mxu0 0.0
    %1338 = vmatpush2.msra.mxu0 0.0
    %1339 = vmatprep.subr.mxu0 0.0
    %1340 = vmatpush2.msra.mxu0 0.0
    %1341 = vmatprep.subr.mxu0 0.0
    %1342 = vmatpush2.msra.mxu0 0.0
    %1343 = vmatprep.subr.mxu0 0.0
    %1344 = vmatpush2.msra.mxu0 0.0
    %1345 = vmatprep.subr.mxu0 0.0
    %1346 = vmatpush2.msra.mxu0 0.0
    %1347 = vmatprep.subr.mxu0 0.0
    %1348 = vmatpush2.msra.mxu0 0.0
    %1349 = vmatprep.subr.mxu0 0.0
    %1350 = vmatpush2.msra.mxu0 0.0
    %1351 = vmatprep.subr.mxu0 0.0
    %1352 = vmatpush2.msra.mxu0 0.0
    %1353 = vmatprep.subr.mxu0 0.0
    %1354 = vmatpush2.msra.mxu0 0.0
    %1355 = vmatprep.subr.mxu0 0.0
    %1356 = vmatpush2.msra.mxu0 0.0
    %1357 = vmatprep.subr.mxu0 0.0
    %1358 = vmatpush2.msra.mxu0 0.0
    %1359 = vmatprep.subr.mxu0 0.0
    %1360 = vmatpush2.msra.mxu0 0.0
    %1361 = vmatprep.subr.mxu0 0.0
    %1362 = vmatpush2.msra.mxu0 0.0
    %1363 = vmatprep.subr.mxu0 0.0
    %1364 = vmatpush2.msra.mxu0 0.0
    %1365 = vmatprep.subr.mxu0 0.0
    %1366 = vmatpush2.msra.mxu0 0.0
    %1367 = vmatprep.mubr.f32.mxu0 0.0
    %1368 = vmatmul.mubr.f32.gmra.mxu0 %v1301
    %v1369 = vpop.f32.mrf.mxu0
    %v1370 = vadd.f32 0.0, %v1369
    %v1371 = vpop.f32.mrf.mxu0
    %1372 = vdwg.mxu0
    %1373 = vrot.lane.b32.xlu0 %v423, 64
    %v1374 = vpop.permute.xlu0 %1373
    %v1377 = vsel %vm434, %v1140, 0
    %1379 = vmatprep.subr.mxu0 0.0
    %1380 = vmatpush1.msra.mxu0 0.0
    %1381 = vmatprep.subr.mxu0 0.0
    %1382 = vmatpush1.msra.mxu0 0.0
    %1383 = vmatprep.subr.mxu0 0.0
    %1384 = vmatpush1.msra.mxu0 0.0
    %1385 = vmatprep.subr.mxu0 0.0
    %1386 = vmatpush1.msra.mxu0 0.0
    %1387 = vmatprep.subr.mxu0 0.0
    %1388 = vmatpush1.msra.mxu0 0.0
    %1389 = vmatprep.subr.mxu0 0.0
    %1390 = vmatpush1.msra.mxu0 0.0
    %1391 = vmatprep.subr.mxu0 0.0
    %1392 = vmatpush1.msra.mxu0 0.0
    %1393 = vmatprep.subr.mxu0 0.0
    %1394 = vmatpush1.msra.mxu0 0.0
    %1395 = vmatprep.subr.mxu0 0.0
    %1396 = vmatpush1.msra.mxu0 0.0
    %1397 = vmatprep.subr.mxu0 0.0
    %1398 = vmatpush1.msra.mxu0 0.0
    %1399 = vmatprep.subr.mxu0 0.0
    %1400 = vmatpush1.msra.mxu0 0.0
    %1401 = vmatprep.subr.mxu0 0.0
    %1402 = vmatpush1.msra.mxu0 0.0
    %1403 = vmatprep.subr.mxu0 0.0
    %1404 = vmatpush1.msra.mxu0 0.0
    %1405 = vmatprep.subr.mxu0 0.0
    %1406 = vmatpush1.msra.mxu0 0.0
    %1407 = vmatprep.subr.mxu0 0.0
    %1408 = vmatpush1.msra.mxu0 0.0
    %1409 = vmatprep.subr.mxu0 0.0
    %1410 = vmatpush1.msra.mxu0 %v1374
    %1411 = vmatprep.subr.mxu0 0.0
    %1412 = vmatpush2.msra.mxu0 0.0
    %1413 = vmatprep.subr.mxu0 0.0
    %1414 = vmatpush2.msra.mxu0 0.0
    %1415 = vmatprep.subr.mxu0 0.0
    %1416 = vmatpush2.msra.mxu0 0.0
    %1417 = vmatprep.subr.mxu0 0.0
    %1418 = vmatpush2.msra.mxu0 0.0
    %1419 = vmatprep.subr.mxu0 0.0
    %1420 = vmatpush2.msra.mxu0 0.0
    %1421 = vmatprep.subr.mxu0 0.0
    %1422 = vmatpush2.msra.mxu0 0.0
    %1423 = vmatprep.subr.mxu0 0.0
    %1424 = vmatpush2.msra.mxu0 0.0
    %1425 = vmatprep.subr.mxu0 0.0
    %1426 = vmatpush2.msra.mxu0 0.0
    %1427 = vmatprep.subr.mxu0 0.0
    %1428 = vmatpush2.msra.mxu0 0.0
    %1429 = vmatprep.subr.mxu0 0.0
    %1430 = vmatpush2.msra.mxu0 0.0
    %1431 = vmatprep.subr.mxu0 0.0
    %1432 = vmatpush2.msra.mxu0 0.0
    %1433 = vmatprep.subr.mxu0 0.0
    %1434 = vmatpush2.msra.mxu0 0.0
    %1435 = vmatprep.subr.mxu0 0.0
    %1436 = vmatpush2.msra.mxu0 0.0
    %1437 = vmatprep.subr.mxu0 0.0
    %1438 = vmatpush2.msra.mxu0 0.0
    %1439 = vmatprep.subr.mxu0 0.0
    %1440 = vmatpush2.msra.mxu0 0.0
    %1441 = vmatprep.subr.mxu0 0.0
    %1442 = vmatpush2.msra.mxu0 0.0
    %1443 = vmatprep.mubr.f32.mxu0 0.0
    %1444 = vmatmul.mubr.f32.gmra.mxu0 %v1377
    %v1445 = vpop.f32.mrf.mxu0
    %v1446 = vadd.f32 0.0, %v1445
    %v1447 = vpop.f32.mrf.mxu0
    %1448 = vdwg.mxu0
    %1449 = vrot.lane.b32.xlu0 %v425, 64
    %v1450 = vpop.permute.xlu0 %1449
    %v1453 = vsel %vm434, %v1141, 0
    %1455 = vmatprep.subr.mxu0 0.0
    %1456 = vmatpush1.msra.mxu0 0.0
    %1457 = vmatprep.subr.mxu0 0.0
    %1458 = vmatpush1.msra.mxu0 0.0
    %1459 = vmatprep.subr.mxu0 0.0
    %1460 = vmatpush1.msra.mxu0 0.0
    %1461 = vmatprep.subr.mxu0 0.0
    %1462 = vmatpush1.msra.mxu0 0.0
    %1463 = vmatprep.subr.mxu0 0.0
    %1464 = vmatpush1.msra.mxu0 0.0
    %1465 = vmatprep.subr.mxu0 0.0
    %1466 = vmatpush1.msra.mxu0 0.0
    %1467 = vmatprep.subr.mxu0 0.0
    %1468 = vmatpush1.msra.mxu0 0.0
    %1469 = vmatprep.subr.mxu0 0.0
    %1470 = vmatpush1.msra.mxu0 0.0
    %1471 = vmatprep.subr.mxu0 0.0
    %1472 = vmatpush1.msra.mxu0 0.0
    %1473 = vmatprep.subr.mxu0 0.0
    %1474 = vmatpush1.msra.mxu0 0.0
    %1475 = vmatprep.subr.mxu0 0.0
    %1476 = vmatpush1.msra.mxu0 0.0
    %1477 = vmatprep.subr.mxu0 0.0
    %1478 = vmatpush1.msra.mxu0 0.0
    %1479 = vmatprep.subr.mxu0 0.0
    %1480 = vmatpush1.msra.mxu0 0.0
    %1481 = vmatprep.subr.mxu0 0.0
    %1482 = vmatpush1.msra.mxu0 0.0
    %1483 = vmatprep.subr.mxu0 0.0
    %1484 = vmatpush1.msra.mxu0 0.0
    %1485 = vmatprep.subr.mxu0 0.0
    %1486 = vmatpush1.msra.mxu0 %v1450
    %1487 = vmatprep.subr.mxu0 0.0
    %1488 = vmatpush2.msra.mxu0 0.0
    %1489 = vmatprep.subr.mxu0 0.0
    %1490 = vmatpush2.msra.mxu0 0.0
    %1491 = vmatprep.subr.mxu0 0.0
    %1492 = vmatpush2.msra.mxu0 0.0
    %1493 = vmatprep.subr.mxu0 0.0
    %1494 = vmatpush2.msra.mxu0 0.0
    %1495 = vmatprep.subr.mxu0 0.0
    %1496 = vmatpush2.msra.mxu0 0.0
    %1497 = vmatprep.subr.mxu0 0.0
    %1498 = vmatpush2.msra.mxu0 0.0
    %1499 = vmatprep.subr.mxu0 0.0
    %1500 = vmatpush2.msra.mxu0 0.0
    %1501 = vmatprep.subr.mxu0 0.0
    %1502 = vmatpush2.msra.mxu0 0.0
    %1503 = vmatprep.subr.mxu0 0.0
    %1504 = vmatpush2.msra.mxu0 0.0
    %1505 = vmatprep.subr.mxu0 0.0
    %1506 = vmatpush2.msra.mxu0 0.0
    %1507 = vmatprep.subr.mxu0 0.0
    %1508 = vmatpush2.msra.mxu0 0.0
    %1509 = vmatprep.subr.mxu0 0.0
    %1510 = vmatpush2.msra.mxu0 0.0
    %1511 = vmatprep.subr.mxu0 0.0
    %1512 = vmatpush2.msra.mxu0 0.0
    %1513 = vmatprep.subr.mxu0 0.0
    %1514 = vmatpush2.msra.mxu0 0.0
    %1515 = vmatprep.subr.mxu0 0.0
    %1516 = vmatpush2.msra.mxu0 0.0
    %1517 = vmatprep.subr.mxu0 0.0
    %1518 = vmatpush2.msra.mxu0 0.0
    %1519 = vmatprep.mubr.f32.mxu0 0.0
    %1520 = vmatmul.mubr.f32.gmra.mxu0 %v1453
    %v1521 = vpop.f32.mrf.mxu0
    %v1522 = vadd.f32 0.0, %v1521
    %v1523 = vpop.f32.mrf.mxu0
    %1524 = vdwg.mxu0
    %1525 = vrot.lane.b32.xlu0 %v427, 64
    %v1526 = vpop.permute.xlu0 %1525
    %v1529 = vsel %vm434, %v1142, 0
    %1531 = vmatprep.subr.mxu0 0.0
    %1532 = vmatpush1.msra.mxu0 0.0
    %1533 = vmatprep.subr.mxu0 0.0
    %1534 = vmatpush1.msra.mxu0 0.0
    %1535 = vmatprep.subr.mxu0 0.0
    %1536 = vmatpush1.msra.mxu0 0.0
    %1537 = vmatprep.subr.mxu0 0.0
    %1538 = vmatpush1.msra.mxu0 0.0
    %1539 = vmatprep.subr.mxu0 0.0
    %1540 = vmatpush1.msra.mxu0 0.0
    %1541 = vmatprep.subr.mxu0 0.0
    %1542 = vmatpush1.msra.mxu0 0.0
    %1543 = vmatprep.subr.mxu0 0.0
    %1544 = vmatpush1.msra.mxu0 0.0
    %1545 = vmatprep.subr.mxu0 0.0
    %1546 = vmatpush1.msra.mxu0 0.0
    %1547 = vmatprep.subr.mxu0 0.0
    %1548 = vmatpush1.msra.mxu0 0.0
    %1549 = vmatprep.subr.mxu0 0.0
    %1550 = vmatpush1.msra.mxu0 0.0
    %1551 = vmatprep.subr.mxu0 0.0
    %1552 = vmatpush1.msra.mxu0 0.0
    %1553 = vmatprep.subr.mxu0 0.0
    %1554 = vmatpush1.msra.mxu0 0.0
    %1555 = vmatprep.subr.mxu0 0.0
    %1556 = vmatpush1.msra.mxu0 0.0
    %1557 = vmatprep.subr.mxu0 0.0
    %1558 = vmatpush1.msra.mxu0 0.0
    %1559 = vmatprep.subr.mxu0 0.0
    %1560 = vmatpush1.msra.mxu0 0.0
    %1561 = vmatprep.subr.mxu0 0.0
    %1562 = vmatpush1.msra.mxu0 %v1526
    %1563 = vmatprep.subr.mxu0 0.0
    %1564 = vmatpush2.msra.mxu0 0.0
    %1565 = vmatprep.subr.mxu0 0.0
    %1566 = vmatpush2.msra.mxu0 0.0
    %1567 = vmatprep.subr.mxu0 0.0
    %1568 = vmatpush2.msra.mxu0 0.0
    %1569 = vmatprep.subr.mxu0 0.0
    %1570 = vmatpush2.msra.mxu0 0.0
    %1571 = vmatprep.subr.mxu0 0.0
    %1572 = vmatpush2.msra.mxu0 0.0
    %1573 = vmatprep.subr.mxu0 0.0
    %1574 = vmatpush2.msra.mxu0 0.0
    %1575 = vmatprep.subr.mxu0 0.0
    %1576 = vmatpush2.msra.mxu0 0.0
    %1577 = vmatprep.subr.mxu0 0.0
    %1578 = vmatpush2.msra.mxu0 0.0
    %1579 = vmatprep.subr.mxu0 0.0
    %1580 = vmatpush2.msra.mxu0 0.0
    %1581 = vmatprep.subr.mxu0 0.0
    %1582 = vmatpush2.msra.mxu0 0.0
    %1583 = vmatprep.subr.mxu0 0.0
    %1584 = vmatpush2.msra.mxu0 0.0
    %1585 = vmatprep.subr.mxu0 0.0
    %1586 = vmatpush2.msra.mxu0 0.0
    %1587 = vmatprep.subr.mxu0 0.0
    %1588 = vmatpush2.msra.mxu0 0.0
    %1589 = vmatprep.subr.mxu0 0.0
    %1590 = vmatpush2.msra.mxu0 0.0
    %1591 = vmatprep.subr.mxu0 0.0
    %1592 = vmatpush2.msra.mxu0 0.0
    %1593 = vmatprep.subr.mxu0 0.0
    %1594 = vmatpush2.msra.mxu0 0.0
    %1595 = vmatprep.mubr.f32.mxu0 0.0
    %1596 = vmatmul.mubr.f32.gmra.mxu0 %v1529
    %v1597 = vpop.f32.mrf.mxu0
    %v1598 = vadd.f32 0.0, %v1597
    %v1599 = vpop.f32.mrf.mxu0
    %1600 = vdwg.mxu0
    %1601 = vrot.lane.b32.xlu0 %v429, 64
    %v1602 = vpop.permute.xlu0 %1601
    %v1605 = vsel %vm434, %v1143, 0
    %1607 = vmatprep.subr.mxu0 0.0
    %1608 = vmatpush1.msra.mxu0 0.0
    %1609 = vmatprep.subr.mxu0 0.0
    %1610 = vmatpush1.msra.mxu0 0.0
    %1611 = vmatprep.subr.mxu0 0.0
    %1612 = vmatpush1.msra.mxu0 0.0
    %1613 = vmatprep.subr.mxu0 0.0
    %1614 = vmatpush1.msra.mxu0 0.0
    %1615 = vmatprep.subr.mxu0 0.0
    %1616 = vmatpush1.msra.mxu0 0.0
    %1617 = vmatprep.subr.mxu0 0.0
    %1618 = vmatpush1.msra.mxu0 0.0
    %1619 = vmatprep.subr.mxu0 0.0
    %1620 = vmatpush1.msra.mxu0 0.0
    %1621 = vmatprep.subr.mxu0 0.0
    %1622 = vmatpush1.msra.mxu0 0.0
    %1623 = vmatprep.subr.mxu0 0.0
    %1624 = vmatpush1.msra.mxu0 0.0
    %1625 = vmatprep.subr.mxu0 0.0
    %1626 = vmatpush1.msra.mxu0 0.0
    %1627 = vmatprep.subr.mxu0 0.0
    %1628 = vmatpush1.msra.mxu0 0.0
    %1629 = vmatprep.subr.mxu0 0.0
    %1630 = vmatpush1.msra.mxu0 0.0
    %1631 = vmatprep.subr.mxu0 0.0
    %1632 = vmatpush1.msra.mxu0 0.0
    %1633 = vmatprep.subr.mxu0 0.0
    %1634 = vmatpush1.msra.mxu0 0.0
    %1635 = vmatprep.subr.mxu0 0.0
    %1636 = vmatpush1.msra.mxu0 0.0
    %1637 = vmatprep.subr.mxu0 0.0
    %1638 = vmatpush1.msra.mxu0 %v1602
    %1639 = vmatprep.subr.mxu0 0.0
    %1640 = vmatpush2.msra.mxu0 0.0
    %1641 = vmatprep.subr.mxu0 0.0
    %1642 = vmatpush2.msra.mxu0 0.0
    %1643 = vmatprep.subr.mxu0 0.0
    %1644 = vmatpush2.msra.mxu0 0.0
    %1645 = vmatprep.subr.mxu0 0.0
    %1646 = vmatpush2.msra.mxu0 0.0
    %1647 = vmatprep.subr.mxu0 0.0
    %1648 = vmatpush2.msra.mxu0 0.0
    %1649 = vmatprep.subr.mxu0 0.0
    %1650 = vmatpush2.msra.mxu0 0.0
    %1651 = vmatprep.subr.mxu0 0.0
    %1652 = vmatpush2.msra.mxu0 0.0
    %1653 = vmatprep.subr.mxu0 0.0
    %1654 = vmatpush2.msra.mxu0 0.0
    %1655 = vmatprep.subr.mxu0 0.0
    %1656 = vmatpush2.msra.mxu0 0.0
    %1657 = vmatprep.subr.mxu0 0.0
    %1658 = vmatpush2.msra.mxu0 0.0
    %1659 = vmatprep.subr.mxu0 0.0
    %1660 = vmatpush2.msra.mxu0 0.0
    %1661 = vmatprep.subr.mxu0 0.0
    %1662 = vmatpush2.msra.mxu0 0.0
    %1663 = vmatprep.subr.mxu0 0.0
    %1664 = vmatpush2.msra.mxu0 0.0
    %1665 = vmatprep.subr.mxu0 0.0
    %1666 = vmatpush2.msra.mxu0 0.0
    %1667 = vmatprep.subr.mxu0 0.0
    %1668 = vmatpush2.msra.mxu0 0.0
    %1669 = vmatprep.subr.mxu0 0.0
    %1670 = vmatpush2.msra.mxu0 0.0
    %1671 = vmatprep.mubr.f32.mxu0 0.0
    %1672 = vmatmul.mubr.f32.gmra.mxu0 %v1605
    %v1673 = vpop.f32.mrf.mxu0
    %v1674 = vadd.f32 0.0, %v1673
    %v1675 = vpop.f32.mrf.mxu0
    %1676 = vdwg.mxu0
    %1677 = vrot.lane.b32.xlu0 %v431, 64
    %v1678 = vpop.permute.xlu0 %1677
    %v1681 = vsel %vm434, %v1144, 0
    %1683 = vmatprep.subr.mxu0 0.0
    %1684 = vmatpush1.msra.mxu0 0.0
    %1685 = vmatprep.subr.mxu0 0.0
    %1686 = vmatpush1.msra.mxu0 0.0
    %1687 = vmatprep.subr.mxu0 0.0
    %1688 = vmatpush1.msra.mxu0 0.0
    %1689 = vmatprep.subr.mxu0 0.0
    %1690 = vmatpush1.msra.mxu0 0.0
    %1691 = vmatprep.subr.mxu0 0.0
    %1692 = vmatpush1.msra.mxu0 0.0
    %1693 = vmatprep.subr.mxu0 0.0
    %1694 = vmatpush1.msra.mxu0 0.0
    %1695 = vmatprep.subr.mxu0 0.0
    %1696 = vmatpush1.msra.mxu0 0.0
    %1697 = vmatprep.subr.mxu0 0.0
    %1698 = vmatpush1.msra.mxu0 0.0
    %1699 = vmatprep.subr.mxu0 0.0
    %1700 = vmatpush1.msra.mxu0 0.0
    %1701 = vmatprep.subr.mxu0 0.0
    %1702 = vmatpush1.msra.mxu0 0.0
    %1703 = vmatprep.subr.mxu0 0.0
    %1704 = vmatpush1.msra.mxu0 0.0
    %1705 = vmatprep.subr.mxu0 0.0
    %1706 = vmatpush1.msra.mxu0 0.0
    %1707 = vmatprep.subr.mxu0 0.0
    %1708 = vmatpush1.msra.mxu0 0.0
    %1709 = vmatprep.subr.mxu0 0.0
    %1710 = vmatpush1.msra.mxu0 0.0
    %1711 = vmatprep.subr.mxu0 0.0
    %1712 = vmatpush1.msra.mxu0 0.0
    %1713 = vmatprep.subr.mxu0 0.0
    %1714 = vmatpush1.msra.mxu0 %v1678
    %1715 = vmatprep.subr.mxu0 0.0
    %1716 = vmatpush2.msra.mxu0 0.0
    %1717 = vmatprep.subr.mxu0 0.0
    %1718 = vmatpush2.msra.mxu0 0.0
    %1719 = vmatprep.subr.mxu0 0.0
    %1720 = vmatpush2.msra.mxu0 0.0
    %1721 = vmatprep.subr.mxu0 0.0
    %1722 = vmatpush2.msra.mxu0 0.0
    %1723 = vmatprep.subr.mxu0 0.0
    %1724 = vmatpush2.msra.mxu0 0.0
    %1725 = vmatprep.subr.mxu0 0.0
    %1726 = vmatpush2.msra.mxu0 0.0
    %1727 = vmatprep.subr.mxu0 0.0
    %1728 = vmatpush2.msra.mxu0 0.0
    %1729 = vmatprep.subr.mxu0 0.0
    %1730 = vmatpush2.msra.mxu0 0.0
    %1731 = vmatprep.subr.mxu0 0.0
    %1732 = vmatpush2.msra.mxu0 0.0
    %1733 = vmatprep.subr.mxu0 0.0
    %1734 = vmatpush2.msra.mxu0 0.0
    %1735 = vmatprep.subr.mxu0 0.0
    %1736 = vmatpush2.msra.mxu0 0.0
    %1737 = vmatprep.subr.mxu0 0.0
    %1738 = vmatpush2.msra.mxu0 0.0
    %1739 = vmatprep.subr.mxu0 0.0
    %1740 = vmatpush2.msra.mxu0 0.0
    %1741 = vmatprep.subr.mxu0 0.0
    %1742 = vmatpush2.msra.mxu0 0.0
    %1743 = vmatprep.subr.mxu0 0.0
    %1744 = vmatpush2.msra.mxu0 0.0
    %1745 = vmatprep.subr.mxu0 0.0
    %1746 = vmatpush2.msra.mxu0 0.0
    %1747 = vmatprep.mubr.f32.mxu0 0.0
    %1748 = vmatmul.mubr.f32.gmra.mxu0 %v1681
    %v1749 = vpop.f32.mrf.mxu0
    %v1750 = vadd.f32 0.0, %v1749
    %v1751 = vpop.f32.mrf.mxu0
    %1752 = vdwg.mxu0
    %1755 = vrot.lane.b32.xlu0 %v1370, 8
    %v1756 = vpop.permute.xlu0 %1755
    %1757 = vrot.lane.b32.xlu0 %v1446, 8
    %v1758 = vpop.permute.xlu0 %1757
    %1763 = vrot.lane.b32.xlu0 %v1522, 16
    %v1764 = vpop.permute.xlu0 %1763
    %1765 = vrot.lane.b32.xlu0 %v1598, 16
    %v1766 = vpop.permute.xlu0 %1765
    %1771 = vrot.lane.b32.xlu0 %v1674, 24
    %v1772 = vpop.permute.xlu0 %1771
    %1773 = vrot.lane.b32.xlu0 %v1750, 24
    %v1774 = vpop.permute.xlu0 %1773
    %v1777 = vsel %vm434, %v1218, %v1756
    %v1778 = vsel %vm434, %v1294, %v1758
    %vm1779 = vcmask 130048
    %v1780 = vsel %vm1779, %v1777, %v1764
    %v1781 = vsel %vm1779, %v1778, %v1766
    %vm1782 = vcmask 195584
    %v1783 = vsel %vm1782, %v1780, %v1772
    %v1784 = vsel %vm1782, %v1781, %v1774
    %v1785 = vld [vmem:[%s8] sm:$0xff]
    %v1786 = vld [vmem:[%s8 + $0x8] sm:$0xff]
    %v1787 = vld [vmem:[%s8 + $0x10] sm:$0xff]
    %v1788 = vld [vmem:[%s8 + $0x18] sm:$0xff]
    %v1790 = vsel %vm282, %v1783, 0
    %v1793 = vsel %vm282, %v1784, 0
    %1795 = vmatprep.subr.mxu0 0.0
    %1796 = vmatpush1.msra.mxu0 0.0
    %1797 = vmatprep.subr.mxu0 0.0
    %1798 = vmatpush1.msra.mxu0 0.0
    %1799 = vmatprep.subr.mxu0 0.0
    %1800 = vmatpush1.msra.mxu0 0.0
    %1801 = vmatprep.subr.mxu0 0.0
    %1802 = vmatpush1.msra.mxu0 0.0
    %1803 = vmatprep.subr.mxu0 0.0
    %1804 = vmatpush1.msra.mxu0 0.0
    %1805 = vmatprep.subr.mxu0 0.0
    %1806 = vmatpush1.msra.mxu0 0.0
    %1807 = vmatprep.subr.mxu0 0.0
    %1808 = vmatpush1.msra.mxu0 0.0
    %1809 = vmatprep.subr.mxu0 0.0
    %1810 = vmatpush1.msra.mxu0 0.0
    %1811 = vmatprep.subr.mxu0 0.0
    %1812 = vmatpush1.msra.mxu0 0.0
    %1813 = vmatprep.subr.mxu0 0.0
    %1814 = vmatpush1.msra.mxu0 0.0
    %1815 = vmatprep.subr.mxu0 0.0
    %1816 = vmatpush1.msra.mxu0 0.0
    %1817 = vmatprep.subr.mxu0 0.0
    %1818 = vmatpush1.msra.mxu0 0.0
    %1819 = vmatprep.subr.mxu0 0.0
    %1820 = vmatpush1.msra.mxu0 %v1788
    %1821 = vmatprep.subr.mxu0 0.0
    %1822 = vmatpush1.msra.mxu0 %v1787
    %1823 = vmatprep.subr.mxu0 0.0
    %1824 = vmatpush1.msra.mxu0 %v1786
    %1825 = vmatprep.subr.mxu0 0.0
    %1826 = vmatpush1.msra.mxu0 %v1785
    %1827 = vmatprep.subr.mxu0 0.0
    %1828 = vmatpush2.msra.mxu0 0.0
    %1829 = vmatprep.subr.mxu0 0.0
    %1830 = vmatpush2.msra.mxu0 0.0
    %1831 = vmatprep.subr.mxu0 0.0
    %1832 = vmatpush2.msra.mxu0 0.0
    %1833 = vmatprep.subr.mxu0 0.0
    %1834 = vmatpush2.msra.mxu0 0.0
    %1835 = vmatprep.subr.mxu0 0.0
    %1836 = vmatpush2.msra.mxu0 0.0
    %1837 = vmatprep.subr.mxu0 0.0
    %1838 = vmatpush2.msra.mxu0 0.0
    %1839 = vmatprep.subr.mxu0 0.0
    %1840 = vmatpush2.msra.mxu0 0.0
    %1841 = vmatprep.subr.mxu0 0.0
    %1842 = vmatpush2.msra.mxu0 0.0
    %1843 = vmatprep.subr.mxu0 0.0
    %1844 = vmatpush2.msra.mxu0 0.0
    %1845 = vmatprep.subr.mxu0 0.0
    %1846 = vmatpush2.msra.mxu0 0.0
    %1847 = vmatprep.subr.mxu0 0.0
    %1848 = vmatpush2.msra.mxu0 0.0
    %1849 = vmatprep.subr.mxu0 0.0
    %1850 = vmatpush2.msra.mxu0 0.0
    %1851 = vmatprep.subr.mxu0 0.0
    %1852 = vmatpush2.msra.mxu0 0.0
    %1853 = vmatprep.subr.mxu0 0.0
    %1854 = vmatpush2.msra.mxu0 0.0
    %1855 = vmatprep.subr.mxu0 0.0
    %1856 = vmatpush2.msra.mxu0 0.0
    %1857 = vmatprep.subr.mxu0 0.0
    %1858 = vmatpush2.msra.mxu0 0.0
    %1859 = vmatprep.mubr.f32.mxu0 0.0
    %1860 = vmatmul.mubr.f32.gmra.mxu0 %v1790
    %v1861 = vpop.f32.mrf.mxu0
    %v1862 = vadd.f32 0.0, %v1861
    %v1863 = vpop.f32.mrf.mxu0
    %1864 = vmatprep.mubr.f32.mxu0 0.0
    %1865 = vmatmul.mubr.f32.gmra.mxu0 %v1793
    %v1866 = vpop.f32.mrf.mxu0
    %v1867 = vadd.f32 0.0, %v1866
    %v1868 = vpop.f32.mrf.mxu0
    %1869 = vdwg.mxu0
    %v1870 = vadd.f32 %v172, %v1862
    %v1871 = vadd.f32 %v173, %v1867
    %v1872 = vld [vmem:[%s9] sm:$0x1]
    %v1874 = vlaneseq
    %v1875 = vshrl.u32 %v1874, 7
    %v1876 = vsub.s32 0, %v1875
    %v1877 = vrot.slane %v1872, %v1876
    %v1879 = vadd.f32 %v1870, %v1877
    %v1880 = vadd.f32 %v1871, %v1877
    %v1881 = vld [vmem:[%s10] sm:$0x1]
    %v1882 = vld [vmem:[%s11] sm:$0x1]
    %v1883 = vsel %vm282, %v1879, 0.0
    %1884 = vadd.xlane.f32.xlu0 %v1883
    %v1885 = vpop.xlane.xlu0 %1884
    %v1886 = vsel %vm282, %v1880, 0.0
    %1887 = vadd.xlane.f32.xlu0 %v1886
    %v1888 = vpop.xlane.xlu0 %1887
    %v1889 = vmul.f32 %v1885, %v289
    %v1890 = vmul.f32 %v1888, %v289
    %v1891 = vsub.f32 %v1879, %v1889
    %v1892 = vsub.f32 %v1880, %v1890
    %v1893 = vmul.f32 %v1891, %v1891
    %v1894 = vmul.f32 %v1892, %v1892
    %v1895 = vsel %vm282, %v1893, 0.0
    %1896 = vadd.xlane.f32.xlu0 %v1895
    %v1897 = vpop.xlane.xlu0 %1896
    %v1898 = vsel %vm282, %v1894, 0.0
    %1899 = vadd.xlane.f32.xlu0 %v1898
    %v1900 = vpop.xlane.xlu0 %1899
    %v1901 = vmul.f32 %v1897, %v289
    %v1902 = vmul.f32 %v1900, %v289
    %v1903 = vadd.f32 %v1901, 1e-05
    %v1904 = vadd.f32 %v1902, 1e-05
    %v1905 = vrsqrt.pop %v1903
    %v1906 = vrsqrt.pop %v1904
    %v1907 = vmul.f32 %v1891, %v1905
    %v1908 = vmul.f32 %v1892, %v1906
    %v1910 = vlaneseq
    %v1911 = vshrl.u32 %v1910, 7
    %v1912 = vsub.s32 0, %v1911
    %v1913 = vrot.slane %v1881, %v1912
    %v1915 = vmul.f32 %v1907, %v1913
    %v1916 = vmul.f32 %v1908, %v1913
    %v1918 = vlaneseq
    %v1919 = vshrl.u32 %v1918, 7
    %v1920 = vsub.s32 0, %v1919
    %v1921 = vrot.slane %v1882, %v1920
    %v1923 = vadd.f32 %v1915, %v1921
    %v1924 = vadd.f32 %v1916, %v1921
    %v1925 = vld [vmem:[%s12] sm:$0xff]
    %v1926 = vld [vmem:[%s12 + $0x8] sm:$0xff]
    %v1927 = vld [vmem:[%s12 + $0x10] sm:$0xff]
    %v1928 = vld [vmem:[%s12 + $0x18] sm:$0xff]
    %v1929 = vld [vmem:[%s13] sm:$0x1]
    %v1931 = vlaneseq
    %v1932 = vshrl.u32 %v1931, 7
    %v1933 = vsub.s32 0, %v1932
    %v1934 = vrot.slane %v1929, %v1933
    %v1937 = vsel %vm282, %v1923, 0
    %v1940 = vsel %vm282, %v1924, 0
    %1942 = vmatprep.subr.mxu0 0.0
    %1943 = vmatpush1.msra.mxu0 0.0
    %1944 = vmatprep.subr.mxu0 0.0
    %1945 = vmatpush1.msra.mxu0 0.0
    %1946 = vmatprep.subr.mxu0 0.0
    %1947 = vmatpush1.msra.mxu0 0.0
    %1948 = vmatprep.subr.mxu0 0.0
    %1949 = vmatpush1.msra.mxu0 0.0
    %1950 = vmatprep.subr.mxu0 0.0
    %1951 = vmatpush1.msra.mxu0 0.0
    %1952 = vmatprep.subr.mxu0 0.0
    %1953 = vmatpush1.msra.mxu0 0.0
    %1954 = vmatprep.subr.mxu0 0.0
    %1955 = vmatpush1.msra.mxu0 0.0
    %1956 = vmatprep.subr.mxu0 0.0
    %1957 = vmatpush1.msra.mxu0 0.0
    %1958 = vmatprep.subr.mxu0 0.0
    %1959 = vmatpush1.msra.mxu0 0.0
    %1960 = vmatprep.subr.mxu0 0.0
    %1961 = vmatpush1.msra.mxu0 0.0
    %1962 = vmatprep.subr.mxu0 0.0
    %1963 = vmatpush1.msra.mxu0 0.0
    %1964 = vmatprep.subr.mxu0 0.0
    %1965 = vmatpush1.msra.mxu0 0.0
    %1966 = vmatprep.subr.mxu0 0.0
    %1967 = vmatpush1.msra.mxu0 %v1928
    %1968 = vmatprep.subr.mxu0 0.0
    %1969 = vmatpush1.msra.mxu0 %v1927
    %1970 = vmatprep.subr.mxu0 0.0
    %1971 = vmatpush1.msra.mxu0 %v1926
    %1972 = vmatprep.subr.mxu0 0.0
    %1973 = vmatpush1.msra.mxu0 %v1925
    %1974 = vmatprep.subr.mxu0 0.0
    %1975 = vmatpush2.msra.mxu0 0.0
    %1976 = vmatprep.subr.mxu0 0.0
    %1977 = vmatpush2.msra.mxu0 0.0
    %1978 = vmatprep.subr.mxu0 0.0
    %1979 = vmatpush2.msra.mxu0 0.0
    %1980 = vmatprep.subr.mxu0 0.0
    %1981 = vmatpush2.msra.mxu0 0.0
    %1982 = vmatprep.subr.mxu0 0.0
    %1983 = vmatpush2.msra.mxu0 0.0
    %1984 = vmatprep.subr.mxu0 0.0
    %1985 = vmatpush2.msra.mxu0 0.0
    %1986 = vmatprep.subr.mxu0 0.0
    %1987 = vmatpush2.msra.mxu0 0.0
    %1988 = vmatprep.subr.mxu0 0.0
    %1989 = vmatpush2.msra.mxu0 0.0
    %1990 = vmatprep.subr.mxu0 0.0
    %1991 = vmatpush2.msra.mxu0 0.0
    %1992 = vmatprep.subr.mxu0 0.0
    %1993 = vmatpush2.msra.mxu0 0.0
    %1994 = vmatprep.subr.mxu0 0.0
    %1995 = vmatpush2.msra.mxu0 0.0
    %1996 = vmatprep.subr.mxu0 0.0
    %1997 = vmatpush2.msra.mxu0 0.0
    %1998 = vmatprep.subr.mxu0 0.0
    %1999 = vmatpush2.msra.mxu0 0.0
    %2000 = vmatprep.subr.mxu0 0.0
    %2001 = vmatpush2.msra.mxu0 0.0
    %2002 = vmatprep.subr.mxu0 0.0
    %2003 = vmatpush2.msra.mxu0 0.0
    %2004 = vmatprep.subr.mxu0 0.0
    %2005 = vmatpush2.msra.mxu0 0.0
    %2006 = vmatprep.mubr.f32.mxu0 0.0
    %2007 = vmatmul.mubr.f32.gmra.mxu0 %v1937
    %v2008 = vpop.f32.mrf.mxu0
    %v2009 = vadd.f32 %v1934, %v2008
    %v2010 = vpop.f32.mrf.mxu0
    %2011 = vmatprep.mubr.f32.mxu0 0.0
    %2012 = vmatmul.mubr.f32.gmra.mxu0 %v1940
    %v2013 = vpop.f32.mrf.mxu0
    %v2014 = vadd.f32 %v1934, %v2013
    %v2015 = vpop.f32.mrf.mxu0
    %2016 = vdwg.mxu0
    %v2017 = vmax.f32 %v2009, 0.0
    %v2018 = vmax.f32 %v2014, 0.0
    %v2019 = vld [vmem:[%s14] sm:$0xff]
    %v2020 = vld [vmem:[%s14 + $0x8] sm:$0xff]
    %v2021 = vld [vmem:[%s14 + $0x10] sm:$0xff]
    %v2022 = vld [vmem:[%s14 + $0x18] sm:$0xff]
    %v2023 = vld [vmem:[%s14 + $0x20] sm:$0xff]
    %v2024 = vld [vmem:[%s14 + $0x28] sm:$0xff]
    %v2025 = vld [vmem:[%s14 + $0x30] sm:$0xff]
    %v2026 = vld [vmem:[%s14 + $0x38] sm:$0xff]
    %v2027 = vld [vmem:[%s14 + $0x40] sm:$0xff]
    %v2028 = vld [vmem:[%s14 + $0x48] sm:$0xff]
    %v2029 = vld [vmem:[%s14 + $0x50] sm:$0xff]
    %v2030 = vld [vmem:[%s14 + $0x58] sm:$0xff]
    %v2031 = vld [vmem:[%s14 + $0x60] sm:$0xff]
    %v2032 = vld [vmem:[%s14 + $0x68] sm:$0xff]
    %v2033 = vld [vmem:[%s14 + $0x70] sm:$0xff]
    %v2034 = vld [vmem:[%s14 + $0x78] sm:$0xff]
    %2035 = vmatprep.subr.mxu0 0.0
    %2036 = vmatpush1.msra.mxu0 %v2034
    %2037 = vmatprep.subr.mxu0 0.0
    %2038 = vmatpush1.msra.mxu0 %v2033
    %2039 = vmatprep.subr.mxu0 0.0
    %2040 = vmatpush1.msra.mxu0 %v2032
    %2041 = vmatprep.subr.mxu0 0.0
    %2042 = vmatpush1.msra.mxu0 %v2031
    %2043 = vmatprep.subr.mxu0 0.0
    %2044 = vmatpush1.msra.mxu0 %v2030
    %2045 = vmatprep.subr.mxu0 0.0
    %2046 = vmatpush1.msra.mxu0 %v2029
    %2047 = vmatprep.subr.mxu0 0.0
    %2048 = vmatpush1.msra.mxu0 %v2028
    %2049 = vmatprep.subr.mxu0 0.0
    %2050 = vmatpush1.msra.mxu0 %v2027
    %2051 = vmatprep.subr.mxu0 0.0
    %2052 = vmatpush1.msra.mxu0 %v2026
    %2053 = vmatprep.subr.mxu0 0.0
    %2054 = vmatpush1.msra.mxu0 %v2025
    %2055 = vmatprep.subr.mxu0 0.0
    %2056 = vmatpush1.msra.mxu0 %v2024
    %2057 = vmatprep.subr.mxu0 0.0
    %2058 = vmatpush1.msra.mxu0 %v2023
    %2059 = vmatprep.subr.mxu0 0.0
    %2060 = vmatpush1.msra.mxu0 %v2022
    %2061 = vmatprep.subr.mxu0 0.0
    %2062 = vmatpush1.msra.mxu0 %v2021
    %2063 = vmatprep.subr.mxu0 0.0
    %2064 = vmatpush1.msra.mxu0 %v2020
    %2065 = vmatprep.subr.mxu0 0.0
    %2066 = vmatpush1.msra.mxu0 %v2019
    %2067 = vmatprep.subr.mxu0 0.0
    %2068 = vmatpush2.msra.mxu0 0.0
    %2069 = vmatprep.subr.mxu0 0.0
    %2070 = vmatpush2.msra.mxu0 0.0
    %2071 = vmatprep.subr.mxu0 0.0
    %2072 = vmatpush2.msra.mxu0 0.0
    %2073 = vmatprep.subr.mxu0 0.0
    %2074 = vmatpush2.msra.mxu0 0.0
    %2075 = vmatprep.subr.mxu0 0.0
    %2076 = vmatpush2.msra.mxu0 0.0
    %2077 = vmatprep.subr.mxu0 0.0
    %2078 = vmatpush2.msra.mxu0 0.0
    %2079 = vmatprep.subr.mxu0 0.0
    %2080 = vmatpush2.msra.mxu0 0.0
    %2081 = vmatprep.subr.mxu0 0.0
    %2082 = vmatpush2.msra.mxu0 0.0
    %2083 = vmatprep.subr.mxu0 0.0
    %2084 = vmatpush2.msra.mxu0 0.0
    %2085 = vmatprep.subr.mxu0 0.0
    %2086 = vmatpush2.msra.mxu0 0.0
    %2087 = vmatprep.subr.mxu0 0.0
    %2088 = vmatpush2.msra.mxu0 0.0
    %2089 = vmatprep.subr.mxu0 0.0
    %2090 = vmatpush2.msra.mxu0 0.0
    %2091 = vmatprep.subr.mxu0 0.0
    %2092 = vmatpush2.msra.mxu0 0.0
    %2093 = vmatprep.subr.mxu0 0.0
    %2094 = vmatpush2.msra.mxu0 0.0
    %2095 = vmatprep.subr.mxu0 0.0
    %2096 = vmatpush2.msra.mxu0 0.0
    %2097 = vmatprep.subr.mxu0 0.0
    %2098 = vmatpush2.msra.mxu0 0.0
    %2099 = vmatprep.mubr.f32.mxu0 0.0
    %2100 = vmatmul.mubr.f32.gmra.mxu0 %v2017
    %v2101 = vpop.f32.mrf.mxu0
    %v2102 = vadd.f32 0.0, %v2101
    %v2103 = vpop.f32.mrf.mxu0
    %2104 = vmatprep.mubr.f32.mxu0 0.0
    %2105 = vmatmul.mubr.f32.gmra.mxu0 %v2018
    %v2106 = vpop.f32.mrf.mxu0
    %v2107 = vadd.f32 0.0, %v2106
    %v2108 = vpop.f32.mrf.mxu0
    %2109 = vdwg.mxu0
    %v2110 = vadd.f32 %v1879, %v2102
    %v2111 = vadd.f32 %v1880, %v2107
    %v2112 = vld [vmem:[%s15] sm:$0x1]
    %v2114 = vlaneseq
    %v2115 = vshrl.u32 %v2114, 7
    %v2116 = vsub.s32 0, %v2115
    %v2117 = vrot.slane %v2112, %v2116
    %v2119 = vadd.f32 %v2110, %v2117
    %v2120 = vadd.f32 %v2111, %v2117
    %s2121 = scalar_lea.vmem %s4, 1
    %v2122 = vld [vmem:[%s2121] sm:$0x1]
    %s2123 = scalar_lea.vmem %s5, 1
    %v2124 = vld [vmem:[%s2123] sm:$0x1]
    %v2125 = vsel %vm282, %v2119, 0.0
    %2126 = vadd.xlane.f32.xlu0 %v2125
    %v2127 = vpop.xlane.xlu0 %2126
    %v2128 = vsel %vm282, %v2120, 0.0
    %2129 = vadd.xlane.f32.xlu0 %v2128
    %v2130 = vpop.xlane.xlu0 %2129
    %v2131 = vmul.f32 %v2127, %v289
    %v2132 = vmul.f32 %v2130, %v289
    %v2133 = vsub.f32 %v2119, %v2131
    %v2134 = vsub.f32 %v2120, %v2132
    %v2135 = vmul.f32 %v2133, %v2133
    %v2136 = vmul.f32 %v2134, %v2134
    %v2137 = vsel %vm282, %v2135, 0.0
    %2138 = vadd.xlane.f32.xlu0 %v2137
    %v2139 = vpop.xlane.xlu0 %2138
    %v2140 = vsel %vm282, %v2136, 0.0
    %2141 = vadd.xlane.f32.xlu0 %v2140
    %v2142 = vpop.xlane.xlu0 %2141
    %v2143 = vmul.f32 %v2139, %v289
    %v2144 = vmul.f32 %v2142, %v289
    %v2145 = vadd.f32 %v2143, 1e-05
    %v2146 = vadd.f32 %v2144, 1e-05
    %v2147 = vrsqrt.pop %v2145
    %v2148 = vrsqrt.pop %v2146
    %v2149 = vmul.f32 %v2133, %v2147
    %v2150 = vmul.f32 %v2134, %v2148
    %v2152 = vlaneseq
    %v2153 = vshrl.u32 %v2152, 7
    %v2154 = vsub.s32 0, %v2153
    %v2155 = vrot.slane %v2122, %v2154
    %v2157 = vmul.f32 %v2149, %v2155
    %v2158 = vmul.f32 %v2150, %v2155
    %v2160 = vlaneseq
    %v2161 = vshrl.u32 %v2160, 7
    %v2162 = vsub.s32 0, %v2161
    %v2163 = vrot.slane %v2124, %v2162
    %v2165 = vadd.f32 %v2157, %v2163
    %v2166 = vadd.f32 %v2158, %v2163
    %s2167 = scalar_lea.vmem %s6, 32
    %v2168 = vld [vmem:[%s2167] sm:$0xff]
    %v2169 = vld [vmem:[%s2167 + $0x8] sm:$0xff]
    %v2170 = vld [vmem:[%s2167 + $0x10] sm:$0xff]
    %v2171 = vld [vmem:[%s2167 + $0x18] sm:$0xff]
    %s2172 = scalar_lea.vmem %s7, 1
    %v2173 = vld [vmem:[%s2172] sm:$0x1]
    %v2175 = vlaneseq
    %v2176 = vshrl.u32 %v2175, 7
    %v2177 = vsub.s32 0, %v2176
    %v2178 = vrot.slane %v2173, %v2177
    %v2181 = vsel %vm282, %v2165, 0
    %v2184 = vsel %vm282, %v2166, 0
    %2186 = vmatprep.subr.mxu0 0.0
    %2187 = vmatpush1.msra.mxu0 0.0
    %2188 = vmatprep.subr.mxu0 0.0
    %2189 = vmatpush1.msra.mxu0 0.0
    %2190 = vmatprep.subr.mxu0 0.0
    %2191 = vmatpush1.msra.mxu0 0.0
    %2192 = vmatprep.subr.mxu0 0.0
    %2193 = vmatpush1.msra.mxu0 0.0
    %2194 = vmatprep.subr.mxu0 0.0
    %2195 = vmatpush1.msra.mxu0 0.0
    %2196 = vmatprep.subr.mxu0 0.0
    %2197 = vmatpush1.msra.mxu0 0.0
    %2198 = vmatprep.subr.mxu0 0.0
    %2199 = vmatpush1.msra.mxu0 0.0
    %2200 = vmatprep.subr.mxu0 0.0
    %2201 = vmatpush1.msra.mxu0 0.0
    %2202 = vmatprep.subr.mxu0 0.0
    %2203 = vmatpush1.msra.mxu0 0.0
    %2204 = vmatprep.subr.mxu0 0.0
    %2205 = vmatpush1.msra.mxu0 0.0
    %2206 = vmatprep.subr.mxu0 0.0
    %2207 = vmatpush1.msra.mxu0 0.0
    %2208 = vmatprep.subr.mxu0 0.0
    %2209 = vmatpush1.msra.mxu0 0.0
    %2210 = vmatprep.subr.mxu0 0.0
    %2211 = vmatpush1.msra.mxu0 %v2171
    %2212 = vmatprep.subr.mxu0 0.0
    %2213 = vmatpush1.msra.mxu0 %v2170
    %2214 = vmatprep.subr.mxu0 0.0
    %2215 = vmatpush1.msra.mxu0 %v2169
    %2216 = vmatprep.subr.mxu0 0.0
    %2217 = vmatpush1.msra.mxu0 %v2168
    %2218 = vmatprep.subr.mxu0 0.0
    %2219 = vmatpush2.msra.mxu0 0.0
    %2220 = vmatprep.subr.mxu0 0.0
    %2221 = vmatpush2.msra.mxu0 0.0
    %2222 = vmatprep.subr.mxu0 0.0
    %2223 = vmatpush2.msra.mxu0 0.0
    %2224 = vmatprep.subr.mxu0 0.0
    %2225 = vmatpush2.msra.mxu0 0.0
    %2226 = vmatprep.subr.mxu0 0.0
    %2227 = vmatpush2.msra.mxu0 0.0
    %2228 = vmatprep.subr.mxu0 0.0
    %2229 = vmatpush2.msra.mxu0 0.0
    %2230 = vmatprep.subr.mxu0 0.0
    %2231 = vmatpush2.msra.mxu0 0.0
    %2232 = vmatprep.subr.mxu0 0.0
    %2233 = vmatpush2.msra.mxu0 0.0
    %2234 = vmatprep.subr.mxu0 0.0
    %2235 = vmatpush2.msra.mxu0 0.0
    %2236 = vmatprep.subr.mxu0 0.0
    %2237 = vmatpush2.msra.mxu0 0.0
    %2238 = vmatprep.subr.mxu0 0.0
    %2239 = vmatpush2.msra.mxu0 0.0
    %2240 = vmatprep.subr.mxu0 0.0
    %2241 = vmatpush2.msra.mxu0 0.0
    %2242 = vmatprep.subr.mxu0 0.0
    %2243 = vmatpush2.msra.mxu0 0.0
    %2244 = vmatprep.subr.mxu0 0.0
    %2245 = vmatpush2.msra.mxu0 0.0
    %2246 = vmatprep.subr.mxu0 0.0
    %2247 = vmatpush2.msra.mxu0 0.0
    %2248 = vmatprep.subr.mxu0 0.0
    %2249 = vmatpush2.msra.mxu0 0.0
    %2250 = vmatprep.mubr.f32.mxu0 0.0
    %2251 = vmatmul.mubr.f32.gmra.mxu0 %v2181
    %v2252 = vpop.f32.mrf.mxu0
    %v2253 = vadd.f32 %v2178, %v2252
    %v2254 = vpop.f32.mrf.mxu0
    %2255 = vmatprep.mubr.f32.mxu0 0.0
    %2256 = vmatmul.mubr.f32.gmra.mxu0 %v2184
    %v2257 = vpop.f32.mrf.mxu0
    %v2258 = vadd.f32 %v2178, %v2257
    %v2259 = vpop.f32.mrf.mxu0
    %2260 = vdwg.mxu0
    %2263 = vrot.lane.b32.xlu0 %v2253, 120
    %v2264 = vpop.permute.xlu0 %2263
    %2265 = vrot.lane.b32.xlu0 %v2258, 120
    %v2266 = vpop.permute.xlu0 %2265
    %2267 = vrot.lane.b32.xlu0 %v2253, 112
    %v2268 = vpop.permute.xlu0 %2267
    %2269 = vrot.lane.b32.xlu0 %v2258, 112
    %v2270 = vpop.permute.xlu0 %2269
    %2271 = vrot.lane.b32.xlu0 %v2253, 104
    %v2272 = vpop.permute.xlu0 %2271
    %2273 = vrot.lane.b32.xlu0 %v2258, 104
    %v2274 = vpop.permute.xlu0 %2273
    %2275 = vrot.lane.b32.xlu0 %v2253, 96
    %v2276 = vpop.permute.xlu0 %2275
    %v2277 = vsel %vm434, %v2253, 0
    %v2279 = vsel %vm434, %v2276, 0
    %2281 = vmatprep.subr.mxu0 0.0
    %2282 = vmatpush1.xpose.msra.mxu0 0.0
    %2283 = vmatprep.subr.mxu0 0.0
    %2284 = vmatpush1.xpose.msra.mxu0 0.0
    %2285 = vmatprep.subr.mxu0 0.0
    %2286 = vmatpush1.xpose.msra.mxu0 0.0
    %2287 = vmatprep.subr.mxu0 0.0
    %2288 = vmatpush1.xpose.msra.mxu0 0.0
    %2289 = vmatprep.subr.mxu0 0.0
    %2290 = vmatpush1.xpose.msra.mxu0 0.0
    %2291 = vmatprep.subr.mxu0 0.0
    %2292 = vmatpush1.xpose.msra.mxu0 0.0
    %2293 = vmatprep.subr.mxu0 0.0
    %2294 = vmatpush1.xpose.msra.mxu0 0.0
    %2295 = vmatprep.subr.mxu0 0.0
    %2296 = vmatpush1.xpose.msra.mxu0 0.0
    %2297 = vmatprep.subr.mxu0 0.0
    %2298 = vmatpush1.xpose.msra.mxu0 0.0
    %2299 = vmatprep.subr.mxu0 0.0
    %2300 = vmatpush1.xpose.msra.mxu0 0.0
    %2301 = vmatprep.subr.mxu0 0.0
    %2302 = vmatpush1.xpose.msra.mxu0 0.0
    %2303 = vmatprep.subr.mxu0 0.0
    %2304 = vmatpush1.xpose.msra.mxu0 0.0
    %2305 = vmatprep.subr.mxu0 0.0
    %2306 = vmatpush1.xpose.msra.mxu0 0.0
    %2307 = vmatprep.subr.mxu0 0.0
    %2308 = vmatpush1.xpose.msra.mxu0 0.0
    %2309 = vmatprep.subr.mxu0 0.0
    %2310 = vmatpush1.xpose.msra.mxu0 0.0
    %2311 = vmatprep.subr.mxu0 0.0
    %2312 = vmatpush1.xpose.msra.mxu0 %v2279
    %2313 = vmatprep.subr.mxu0 0.0
    %2314 = vmatpush2.xpose.msra.mxu0 0.0
    %2315 = vmatprep.subr.mxu0 0.0
    %2316 = vmatpush2.xpose.msra.mxu0 0.0
    %2317 = vmatprep.subr.mxu0 0.0
    %2318 = vmatpush2.xpose.msra.mxu0 0.0
    %2319 = vmatprep.subr.mxu0 0.0
    %2320 = vmatpush2.xpose.msra.mxu0 0.0
    %2321 = vmatprep.subr.mxu0 0.0
    %2322 = vmatpush2.xpose.msra.mxu0 0.0
    %2323 = vmatprep.subr.mxu0 0.0
    %2324 = vmatpush2.xpose.msra.mxu0 0.0
    %2325 = vmatprep.subr.mxu0 0.0
    %2326 = vmatpush2.xpose.msra.mxu0 0.0
    %2327 = vmatprep.subr.mxu0 0.0
    %2328 = vmatpush2.xpose.msra.mxu0 0.0
    %2329 = vmatprep.subr.mxu0 0.0
    %2330 = vmatpush2.xpose.msra.mxu0 0.0
    %2331 = vmatprep.subr.mxu0 0.0
    %2332 = vmatpush2.xpose.msra.mxu0 0.0
    %2333 = vmatprep.subr.mxu0 0.0
    %2334 = vmatpush2.xpose.msra.mxu0 0.0
    %2335 = vmatprep.subr.mxu0 0.0
    %2336 = vmatpush2.xpose.msra.mxu0 0.0
    %2337 = vmatprep.subr.mxu0 0.0
    %2338 = vmatpush2.xpose.msra.mxu0 0.0
    %2339 = vmatprep.subr.mxu0 0.0
    %2340 = vmatpush2.xpose.msra.mxu0 0.0
    %2341 = vmatprep.subr.mxu0 0.0
    %2342 = vmatpush2.xpose.msra.mxu0 0.0
    %2343 = vmatprep.subr.mxu0 0.0
    %2344 = vmatpush2.xpose.msra.mxu0 0.0
    %2345 = vmatprep.mubr.f32.mxu0 0.0
    %2346 = vmatmul.mubr.f32.gmra.mxu0 %v2277
    %v2347 = vpop.f32.mrf.mxu0
    %v2348 = vadd.f32 0.0, %v2347
    %v2349 = vpop.f32.mrf.mxu0
    %2350 = vdwg.mxu0
    %2351 = vrot.lane.b32.xlu0 %v2258, 96
    %v2352 = vpop.permute.xlu0 %2351
    %v2353 = vsel %vm434, %v2258, 0
    %v2355 = vsel %vm434, %v2352, 0
    %2357 = vmatprep.subr.mxu0 0.0
    %2358 = vmatpush1.xpose.msra.mxu0 0.0
    %2359 = vmatprep.subr.mxu0 0.0
    %2360 = vmatpush1.xpose.msra.mxu0 0.0
    %2361 = vmatprep.subr.mxu0 0.0
    %2362 = vmatpush1.xpose.msra.mxu0 0.0
    %2363 = vmatprep.subr.mxu0 0.0
    %2364 = vmatpush1.xpose.msra.mxu0 0.0
    %2365 = vmatprep.subr.mxu0 0.0
    %2366 = vmatpush1.xpose.msra.mxu0 0.0
    %2367 = vmatprep.subr.mxu0 0.0
    %2368 = vmatpush1.xpose.msra.mxu0 0.0
    %2369 = vmatprep.subr.mxu0 0.0
    %2370 = vmatpush1.xpose.msra.mxu0 0.0
    %2371 = vmatprep.subr.mxu0 0.0
    %2372 = vmatpush1.xpose.msra.mxu0 0.0
    %2373 = vmatprep.subr.mxu0 0.0
    %2374 = vmatpush1.xpose.msra.mxu0 0.0
    %2375 = vmatprep.subr.mxu0 0.0
    %2376 = vmatpush1.xpose.msra.mxu0 0.0
    %2377 = vmatprep.subr.mxu0 0.0
    %2378 = vmatpush1.xpose.msra.mxu0 0.0
    %2379 = vmatprep.subr.mxu0 0.0
    %2380 = vmatpush1.xpose.msra.mxu0 0.0
    %2381 = vmatprep.subr.mxu0 0.0
    %2382 = vmatpush1.xpose.msra.mxu0 0.0
    %2383 = vmatprep.subr.mxu0 0.0
    %2384 = vmatpush1.xpose.msra.mxu0 0.0
    %2385 = vmatprep.subr.mxu0 0.0
    %2386 = vmatpush1.xpose.msra.mxu0 0.0
    %2387 = vmatprep.subr.mxu0 0.0
    %2388 = vmatpush1.xpose.msra.mxu0 %v2355
    %2389 = vmatprep.subr.mxu0 0.0
    %2390 = vmatpush2.xpose.msra.mxu0 0.0
    %2391 = vmatprep.subr.mxu0 0.0
    %2392 = vmatpush2.xpose.msra.mxu0 0.0
    %2393 = vmatprep.subr.mxu0 0.0
    %2394 = vmatpush2.xpose.msra.mxu0 0.0
    %2395 = vmatprep.subr.mxu0 0.0
    %2396 = vmatpush2.xpose.msra.mxu0 0.0
    %2397 = vmatprep.subr.mxu0 0.0
    %2398 = vmatpush2.xpose.msra.mxu0 0.0
    %2399 = vmatprep.subr.mxu0 0.0
    %2400 = vmatpush2.xpose.msra.mxu0 0.0
    %2401 = vmatprep.subr.mxu0 0.0
    %2402 = vmatpush2.xpose.msra.mxu0 0.0
    %2403 = vmatprep.subr.mxu0 0.0
    %2404 = vmatpush2.xpose.msra.mxu0 0.0
    %2405 = vmatprep.subr.mxu0 0.0
    %2406 = vmatpush2.xpose.msra.mxu0 0.0
    %2407 = vmatprep.subr.mxu0 0.0
    %2408 = vmatpush2.xpose.msra.mxu0 0.0
    %2409 = vmatprep.subr.mxu0 0.0
    %2410 = vmatpush2.xpose.msra.mxu0 0.0
    %2411 = vmatprep.subr.mxu0 0.0
    %2412 = vmatpush2.xpose.msra.mxu0 0.0
    %2413 = vmatprep.subr.mxu0 0.0
    %2414 = vmatpush2.xpose.msra.mxu0 0.0
    %2415 = vmatprep.subr.mxu0 0.0
    %2416 = vmatpush2.xpose.msra.mxu0 0.0
    %2417 = vmatprep.subr.mxu0 0.0
    %2418 = vmatpush2.xpose.msra.mxu0 0.0
    %2419 = vmatprep.subr.mxu0 0.0
    %2420 = vmatpush2.xpose.msra.mxu0 0.0
    %2421 = vmatprep.mubr.f32.mxu0 0.0
    %2422 = vmatmul.mubr.f32.gmra.mxu0 %v2353
    %v2423 = vpop.f32.mrf.mxu0
    %v2424 = vadd.f32 0.0, %v2423
    %v2425 = vpop.f32.mrf.mxu0
    %2426 = vdwg.mxu0
    %2427 = vrot.lane.b32.xlu0 %v2264, 96
    %v2428 = vpop.permute.xlu0 %2427
    %v2429 = vsel %vm434, %v2264, 0
    %v2431 = vsel %vm434, %v2428, 0
    %2433 = vmatprep.subr.mxu0 0.0
    %2434 = vmatpush1.xpose.msra.mxu0 0.0
    %2435 = vmatprep.subr.mxu0 0.0
    %2436 = vmatpush1.xpose.msra.mxu0 0.0
    %2437 = vmatprep.subr.mxu0 0.0
    %2438 = vmatpush1.xpose.msra.mxu0 0.0
    %2439 = vmatprep.subr.mxu0 0.0
    %2440 = vmatpush1.xpose.msra.mxu0 0.0
    %2441 = vmatprep.subr.mxu0 0.0
    %2442 = vmatpush1.xpose.msra.mxu0 0.0
    %2443 = vmatprep.subr.mxu0 0.0
    %2444 = vmatpush1.xpose.msra.mxu0 0.0
    %2445 = vmatprep.subr.mxu0 0.0
    %2446 = vmatpush1.xpose.msra.mxu0 0.0
    %2447 = vmatprep.subr.mxu0 0.0
    %2448 = vmatpush1.xpose.msra.mxu0 0.0
    %2449 = vmatprep.subr.mxu0 0.0
    %2450 = vmatpush1.xpose.msra.mxu0 0.0
    %2451 = vmatprep.subr.mxu0 0.0
    %2452 = vmatpush1.xpose.msra.mxu0 0.0
    %2453 = vmatprep.subr.mxu0 0.0
    %2454 = vmatpush1.xpose.msra.mxu0 0.0
    %2455 = vmatprep.subr.mxu0 0.0
    %2456 = vmatpush1.xpose.msra.mxu0 0.0
    %2457 = vmatprep.subr.mxu0 0.0
    %2458 = vmatpush1.xpose.msra.mxu0 0.0
    %2459 = vmatprep.subr.mxu0 0.0
    %2460 = vmatpush1.xpose.msra.mxu0 0.0
    %2461 = vmatprep.subr.mxu0 0.0
    %2462 = vmatpush1.xpose.msra.mxu0 0.0
    %2463 = vmatprep.subr.mxu0 0.0
    %2464 = vmatpush1.xpose.msra.mxu0 %v2431
    %2465 = vmatprep.subr.mxu0 0.0
    %2466 = vmatpush2.xpose.msra.mxu0 0.0
    %2467 = vmatprep.subr.mxu0 0.0
    %2468 = vmatpush2.xpose.msra.mxu0 0.0
    %2469 = vmatprep.subr.mxu0 0.0
    %2470 = vmatpush2.xpose.msra.mxu0 0.0
    %2471 = vmatprep.subr.mxu0 0.0
    %2472 = vmatpush2.xpose.msra.mxu0 0.0
    %2473 = vmatprep.subr.mxu0 0.0
    %2474 = vmatpush2.xpose.msra.mxu0 0.0
    %2475 = vmatprep.subr.mxu0 0.0
    %2476 = vmatpush2.xpose.msra.mxu0 0.0
    %2477 = vmatprep.subr.mxu0 0.0
    %2478 = vmatpush2.xpose.msra.mxu0 0.0
    %2479 = vmatprep.subr.mxu0 0.0
    %2480 = vmatpush2.xpose.msra.mxu0 0.0
    %2481 = vmatprep.subr.mxu0 0.0
    %2482 = vmatpush2.xpose.msra.mxu0 0.0
    %2483 = vmatprep.subr.mxu0 0.0
    %2484 = vmatpush2.xpose.msra.mxu0 0.0
    %2485 = vmatprep.subr.mxu0 0.0
    %2486 = vmatpush2.xpose.msra.mxu0 0.0
    %2487 = vmatprep.subr.mxu0 0.0
    %2488 = vmatpush2.xpose.msra.mxu0 0.0
    %2489 = vmatprep.subr.mxu0 0.0
    %2490 = vmatpush2.xpose.msra.mxu0 0.0
    %2491 = vmatprep.subr.mxu0 0.0
    %2492 = vmatpush2.xpose.msra.mxu0 0.0
    %2493 = vmatprep.subr.mxu0 0.0
    %2494 = vmatpush2.xpose.msra.mxu0 0.0
    %2495 = vmatprep.subr.mxu0 0.0
    %2496 = vmatpush2.xpose.msra.mxu0 0.0
    %2497 = vmatprep.mubr.f32.mxu0 0.0
    %2498 = vmatmul.mubr.f32.gmra.mxu0 %v2429
    %v2499 = vpop.f32.mrf.mxu0
    %v2500 = vadd.f32 0.0, %v2499
    %v2501 = vpop.f32.mrf.mxu0
    %2502 = vdwg.mxu0
    %2503 = vrot.lane.b32.xlu0 %v2266, 96
    %v2504 = vpop.permute.xlu0 %2503
    %v2505 = vsel %vm434, %v2266, 0
    %v2507 = vsel %vm434, %v2504, 0
    %2509 = vmatprep.subr.mxu0 0.0
    %2510 = vmatpush1.xpose.msra.mxu0 0.0
    %2511 = vmatprep.subr.mxu0 0.0
    %2512 = vmatpush1.xpose.msra.mxu0 0.0
    %2513 = vmatprep.subr.mxu0 0.0
    %2514 = vmatpush1.xpose.msra.mxu0 0.0
    %2515 = vmatprep.subr.mxu0 0.0
    %2516 = vmatpush1.xpose.msra.mxu0 0.0
    %2517 = vmatprep.subr.mxu0 0.0
    %2518 = vmatpush1.xpose.msra.mxu0 0.0
    %2519 = vmatprep.subr.mxu0 0.0
    %2520 = vmatpush1.xpose.msra.mxu0 0.0
    %2521 = vmatprep.subr.mxu0 0.0
    %2522 = vmatpush1.xpose.msra.mxu0 0.0
    %2523 = vmatprep.subr.mxu0 0.0
    %2524 = vmatpush1.xpose.msra.mxu0 0.0
    %2525 = vmatprep.subr.mxu0 0.0
    %2526 = vmatpush1.xpose.msra.mxu0 0.0
    %2527 = vmatprep.subr.mxu0 0.0
    %2528 = vmatpush1.xpose.msra.mxu0 0.0
    %2529 = vmatprep.subr.mxu0 0.0
    %2530 = vmatpush1.xpose.msra.mxu0 0.0
    %2531 = vmatprep.subr.mxu0 0.0
    %2532 = vmatpush1.xpose.msra.mxu0 0.0
    %2533 = vmatprep.subr.mxu0 0.0
    %2534 = vmatpush1.xpose.msra.mxu0 0.0
    %2535 = vmatprep.subr.mxu0 0.0
    %2536 = vmatpush1.xpose.msra.mxu0 0.0
    %2537 = vmatprep.subr.mxu0 0.0
    %2538 = vmatpush1.xpose.msra.mxu0 0.0
    %2539 = vmatprep.subr.mxu0 0.0
    %2540 = vmatpush1.xpose.msra.mxu0 %v2507
    %2541 = vmatprep.subr.mxu0 0.0
    %2542 = vmatpush2.xpose.msra.mxu0 0.0
    %2543 = vmatprep.subr.mxu0 0.0
    %2544 = vmatpush2.xpose.msra.mxu0 0.0
    %2545 = vmatprep.subr.mxu0 0.0
    %2546 = vmatpush2.xpose.msra.mxu0 0.0
    %2547 = vmatprep.subr.mxu0 0.0
    %2548 = vmatpush2.xpose.msra.mxu0 0.0
    %2549 = vmatprep.subr.mxu0 0.0
    %2550 = vmatpush2.xpose.msra.mxu0 0.0
    %2551 = vmatprep.subr.mxu0 0.0
    %2552 = vmatpush2.xpose.msra.mxu0 0.0
    %2553 = vmatprep.subr.mxu0 0.0
    %2554 = vmatpush2.xpose.msra.mxu0 0.0
    %2555 = vmatprep.subr.mxu0 0.0
    %2556 = vmatpush2.xpose.msra.mxu0 0.0
    %2557 = vmatprep.subr.mxu0 0.0
    %2558 = vmatpush2.xpose.msra.mxu0 0.0
    %2559 = vmatprep.subr.mxu0 0.0
    %2560 = vmatpush2.xpose.msra.mxu0 0.0
    %2561 = vmatprep.subr.mxu0 0.0
    %2562 = vmatpush2.xpose.msra.mxu0 0.0
    %2563 = vmatprep.subr.mxu0 0.0
    %2564 = vmatpush2.xpose.msra.mxu0 0.0
    %2565 = vmatprep.subr.mxu0 0.0
    %2566 = vmatpush2.xpose.msra.mxu0 0.0
    %2567 = vmatprep.subr.mxu0 0.0
    %2568 = vmatpush2.xpose.msra.mxu0 0.0
    %2569 = vmatprep.subr.mxu0 0.0
    %2570 = vmatpush2.xpose.msra.mxu0 0.0
    %2571 = vmatprep.subr.mxu0 0.0
    %2572 = vmatpush2.xpose.msra.mxu0 0.0
    %2573 = vmatprep.mubr.f32.mxu0 0.0
    %2574 = vmatmul.mubr.f32.gmra.mxu0 %v2505
    %v2575 = vpop.f32.mrf.mxu0
    %v2576 = vadd.f32 0.0, %v2575
    %v2577 = vpop.f32.mrf.mxu0
    %2578 = vdwg.mxu0
    %2579 = vrot.lane.b32.xlu0 %v2268, 96
    %v2580 = vpop.permute.xlu0 %2579
    %v2581 = vsel %vm434, %v2268, 0
    %v2583 = vsel %vm434, %v2580, 0
    %2585 = vmatprep.subr.mxu0 0.0
    %2586 = vmatpush1.xpose.msra.mxu0 0.0
    %2587 = vmatprep.subr.mxu0 0.0
    %2588 = vmatpush1.xpose.msra.mxu0 0.0
    %2589 = vmatprep.subr.mxu0 0.0
    %2590 = vmatpush1.xpose.msra.mxu0 0.0
    %2591 = vmatprep.subr.mxu0 0.0
    %2592 = vmatpush1.xpose.msra.mxu0 0.0
    %2593 = vmatprep.subr.mxu0 0.0
    %2594 = vmatpush1.xpose.msra.mxu0 0.0
    %2595 = vmatprep.subr.mxu0 0.0
    %2596 = vmatpush1.xpose.msra.mxu0 0.0
    %2597 = vmatprep.subr.mxu0 0.0
    %2598 = vmatpush1.xpose.msra.mxu0 0.0
    %2599 = vmatprep.subr.mxu0 0.0
    %2600 = vmatpush1.xpose.msra.mxu0 0.0
    %2601 = vmatprep.subr.mxu0 0.0
    %2602 = vmatpush1.xpose.msra.mxu0 0.0
    %2603 = vmatprep.subr.mxu0 0.0
    %2604 = vmatpush1.xpose.msra.mxu0 0.0
    %2605 = vmatprep.subr.mxu0 0.0
    %2606 = vmatpush1.xpose.msra.mxu0 0.0
    %2607 = vmatprep.subr.mxu0 0.0
    %2608 = vmatpush1.xpose.msra.mxu0 0.0
    %2609 = vmatprep.subr.mxu0 0.0
    %2610 = vmatpush1.xpose.msra.mxu0 0.0
    %2611 = vmatprep.subr.mxu0 0.0
    %2612 = vmatpush1.xpose.msra.mxu0 0.0
    %2613 = vmatprep.subr.mxu0 0.0
    %2614 = vmatpush1.xpose.msra.mxu0 0.0
    %2615 = vmatprep.subr.mxu0 0.0
    %2616 = vmatpush1.xpose.msra.mxu0 %v2583
    %2617 = vmatprep.subr.mxu0 0.0
    %2618 = vmatpush2.xpose.msra.mxu0 0.0
    %2619 = vmatprep.subr.mxu0 0.0
    %2620 = vmatpush2.xpose.msra.mxu0 0.0
    %2621 = vmatprep.subr.mxu0 0.0
    %2622 = vmatpush2.xpose.msra.mxu0 0.0
    %2623 = vmatprep.subr.mxu0 0.0
    %2624 = vmatpush2.xpose.msra.mxu0 0.0
    %2625 = vmatprep.subr.mxu0 0.0
    %2626 = vmatpush2.xpose.msra.mxu0 0.0
    %2627 = vmatprep.subr.mxu0 0.0
    %2628 = vmatpush2.xpose.msra.mxu0 0.0
    %2629 = vmatprep.subr.mxu0 0.0
    %2630 = vmatpush2.xpose.msra.mxu0 0.0
    %2631 = vmatprep.subr.mxu0 0.0
    %2632 = vmatpush2.xpose.msra.mxu0 0.0
    %2633 = vmatprep.subr.mxu0 0.0
    %2634 = vmatpush2.xpose.msra.mxu0 0.0
    %2635 = vmatprep.subr.mxu0 0.0
    %2636 = vmatpush2.xpose.msra.mxu0 0.0
    %2637 = vmatprep.subr.mxu0 0.0
    %2638 = vmatpush2.xpose.msra.mxu0 0.0
    %2639 = vmatprep.subr.mxu0 0.0
    %2640 = vmatpush2.xpose.msra.mxu0 0.0
    %2641 = vmatprep.subr.mxu0 0.0
    %2642 = vmatpush2.xpose.msra.mxu0 0.0
    %2643 = vmatprep.subr.mxu0 0.0
    %2644 = vmatpush2.xpose.msra.mxu0 0.0
    %2645 = vmatprep.subr.mxu0 0.0
    %2646 = vmatpush2.xpose.msra.mxu0 0.0
    %2647 = vmatprep.subr.mxu0 0.0
    %2648 = vmatpush2.xpose.msra.mxu0 0.0
    %2649 = vmatprep.mubr.f32.mxu0 0.0
    %2650 = vmatmul.mubr.f32.gmra.mxu0 %v2581
    %v2651 = vpop.f32.mrf.mxu0
    %v2652 = vadd.f32 0.0, %v2651
    %v2653 = vpop.f32.mrf.mxu0
    %2654 = vdwg.mxu0
    %2655 = vrot.lane.b32.xlu0 %v2270, 96
    %v2656 = vpop.permute.xlu0 %2655
    %v2657 = vsel %vm434, %v2270, 0
    %v2659 = vsel %vm434, %v2656, 0
    %2661 = vmatprep.subr.mxu0 0.0
    %2662 = vmatpush1.xpose.msra.mxu0 0.0
    %2663 = vmatprep.subr.mxu0 0.0
    %2664 = vmatpush1.xpose.msra.mxu0 0.0
    %2665 = vmatprep.subr.mxu0 0.0
    %2666 = vmatpush1.xpose.msra.mxu0 0.0
    %2667 = vmatprep.subr.mxu0 0.0
    %2668 = vmatpush1.xpose.msra.mxu0 0.0
    %2669 = vmatprep.subr.mxu0 0.0
    %2670 = vmatpush1.xpose.msra.mxu0 0.0
    %2671 = vmatprep.subr.mxu0 0.0
    %2672 = vmatpush1.xpose.msra.mxu0 0.0
    %2673 = vmatprep.subr.mxu0 0.0
    %2674 = vmatpush1.xpose.msra.mxu0 0.0
    %2675 = vmatprep.subr.mxu0 0.0
    %2676 = vmatpush1.xpose.msra.mxu0 0.0
    %2677 = vmatprep.subr.mxu0 0.0
    %2678 = vmatpush1.xpose.msra.mxu0 0.0
    %2679 = vmatprep.subr.mxu0 0.0
    %2680 = vmatpush1.xpose.msra.mxu0 0.0
    %2681 = vmatprep.subr.mxu0 0.0
    %2682 = vmatpush1.xpose.msra.mxu0 0.0
    %2683 = vmatprep.subr.mxu0 0.0
    %2684 = vmatpush1.xpose.msra.mxu0 0.0
    %2685 = vmatprep.subr.mxu0 0.0
    %2686 = vmatpush1.xpose.msra.mxu0 0.0
    %2687 = vmatprep.subr.mxu0 0.0
    %2688 = vmatpush1.xpose.msra.mxu0 0.0
    %2689 = vmatprep.subr.mxu0 0.0
    %2690 = vmatpush1.xpose.msra.mxu0 0.0
    %2691 = vmatprep.subr.mxu0 0.0
    %2692 = vmatpush1.xpose.msra.mxu0 %v2659
    %2693 = vmatprep.subr.mxu0 0.0
    %2694 = vmatpush2.xpose.msra.mxu0 0.0
    %2695 = vmatprep.subr.mxu0 0.0
    %2696 = vmatpush2.xpose.msra.mxu0 0.0
    %2697 = vmatprep.subr.mxu0 0.0
    %2698 = vmatpush2.xpose.msra.mxu0 0.0
    %2699 = vmatprep.subr.mxu0 0.0
    %2700 = vmatpush2.xpose.msra.mxu0 0.0
    %2701 = vmatprep.subr.mxu0 0.0
    %2702 = vmatpush2.xpose.msra.mxu0 0.0
    %2703 = vmatprep.subr.mxu0 0.0
    %2704 = vmatpush2.xpose.msra.mxu0 0.0
    %2705 = vmatprep.subr.mxu0 0.0
    %2706 = vmatpush2.xpose.msra.mxu0 0.0
    %2707 = vmatprep.subr.mxu0 0.0
    %2708 = vmatpush2.xpose.msra.mxu0 0.0
    %2709 = vmatprep.subr.mxu0 0.0
    %2710 = vmatpush2.xpose.msra.mxu0 0.0
    %2711 = vmatprep.subr.mxu0 0.0
    %2712 = vmatpush2.xpose.msra.mxu0 0.0
    %2713 = vmatprep.subr.mxu0 0.0
    %2714 = vmatpush2.xpose.msra.mxu0 0.0
    %2715 = vmatprep.subr.mxu0 0.0
    %2716 = vmatpush2.xpose.msra.mxu0 0.0
    %2717 = vmatprep.subr.mxu0 0.0
    %2718 = vmatpush2.xpose.msra.mxu0 0.0
    %2719 = vmatprep.subr.mxu0 0.0
    %2720 = vmatpush2.xpose.msra.mxu0 0.0
    %2721 = vmatprep.subr.mxu0 0.0
    %2722 = vmatpush2.xpose.msra.mxu0 0.0
    %2723 = vmatprep.subr.mxu0 0.0
    %2724 = vmatpush2.xpose.msra.mxu0 0.0
    %2725 = vmatprep.mubr.f32.mxu0 0.0
    %2726 = vmatmul.mubr.f32.gmra.mxu0 %v2657
    %v2727 = vpop.f32.mrf.mxu0
    %v2728 = vadd.f32 0.0, %v2727
    %v2729 = vpop.f32.mrf.mxu0
    %2730 = vdwg.mxu0
    %2731 = vrot.lane.b32.xlu0 %v2272, 96
    %v2732 = vpop.permute.xlu0 %2731
    %v2733 = vsel %vm434, %v2272, 0
    %v2735 = vsel %vm434, %v2732, 0
    %2737 = vmatprep.subr.mxu0 0.0
    %2738 = vmatpush1.xpose.msra.mxu0 0.0
    %2739 = vmatprep.subr.mxu0 0.0
    %2740 = vmatpush1.xpose.msra.mxu0 0.0
    %2741 = vmatprep.subr.mxu0 0.0
    %2742 = vmatpush1.xpose.msra.mxu0 0.0
    %2743 = vmatprep.subr.mxu0 0.0
    %2744 = vmatpush1.xpose.msra.mxu0 0.0
    %2745 = vmatprep.subr.mxu0 0.0
    %2746 = vmatpush1.xpose.msra.mxu0 0.0
    %2747 = vmatprep.subr.mxu0 0.0
    %2748 = vmatpush1.xpose.msra.mxu0 0.0
    %2749 = vmatprep.subr.mxu0 0.0
    %2750 = vmatpush1.xpose.msra.mxu0 0.0
    %2751 = vmatprep.subr.mxu0 0.0
    %2752 = vmatpush1.xpose.msra.mxu0 0.0
    %2753 = vmatprep.subr.mxu0 0.0
    %2754 = vmatpush1.xpose.msra.mxu0 0.0
    %2755 = vmatprep.subr.mxu0 0.0
    %2756 = vmatpush1.xpose.msra.mxu0 0.0
    %2757 = vmatprep.subr.mxu0 0.0
    %2758 = vmatpush1.xpose.msra.mxu0 0.0
    %2759 = vmatprep.subr.mxu0 0.0
    %2760 = vmatpush1.xpose.msra.mxu0 0.0
    %2761 = vmatprep.subr.mxu0 0.0
    %2762 = vmatpush1.xpose.msra.mxu0 0.0
    %2763 = vmatprep.subr.mxu0 0.0
    %2764 = vmatpush1.xpose.msra.mxu0 0.0
    %2765 = vmatprep.subr.mxu0 0.0
    %2766 = vmatpush1.xpose.msra.mxu0 0.0
    %2767 = vmatprep.subr.mxu0 0.0
    %2768 = vmatpush1.xpose.msra.mxu0 %v2735
    %2769 = vmatprep.subr.mxu0 0.0
    %2770 = vmatpush2.xpose.msra.mxu0 0.0
    %2771 = vmatprep.subr.mxu0 0.0
    %2772 = vmatpush2.xpose.msra.mxu0 0.0
    %2773 = vmatprep.subr.mxu0 0.0
    %2774 = vmatpush2.xpose.msra.mxu0 0.0
    %2775 = vmatprep.subr.mxu0 0.0
    %2776 = vmatpush2.xpose.msra.mxu0 0.0
    %2777 = vmatprep.subr.mxu0 0.0
    %2778 = vmatpush2.xpose.msra.mxu0 0.0
    %2779 = vmatprep.subr.mxu0 0.0
    %2780 = vmatpush2.xpose.msra.mxu0 0.0
    %2781 = vmatprep.subr.mxu0 0.0
    %2782 = vmatpush2.xpose.msra.mxu0 0.0
    %2783 = vmatprep.subr.mxu0 0.0
    %2784 = vmatpush2.xpose.msra.mxu0 0.0
    %2785 = vmatprep.subr.mxu0 0.0
    %2786 = vmatpush2.xpose.msra.mxu0 0.0
    %2787 = vmatprep.subr.mxu0 0.0
    %2788 = vmatpush2.xpose.msra.mxu0 0.0
    %2789 = vmatprep.subr.mxu0 0.0
    %2790 = vmatpush2.xpose.msra.mxu0 0.0
    %2791 = vmatprep.subr.mxu0 0.0
    %2792 = vmatpush2.xpose.msra.mxu0 0.0
    %2793 = vmatprep.subr.mxu0 0.0
    %2794 = vmatpush2.xpose.msra.mxu0 0.0
    %2795 = vmatprep.subr.mxu0 0.0
    %2796 = vmatpush2.xpose.msra.mxu0 0.0
    %2797 = vmatprep.subr.mxu0 0.0
    %2798 = vmatpush2.xpose.msra.mxu0 0.0
    %2799 = vmatprep.subr.mxu0 0.0
    %2800 = vmatpush2.xpose.msra.mxu0 0.0
    %2801 = vmatprep.mubr.f32.mxu0 0.0
    %2802 = vmatmul.mubr.f32.gmra.mxu0 %v2733
    %v2803 = vpop.f32.mrf.mxu0
    %v2804 = vadd.f32 0.0, %v2803
    %v2805 = vpop.f32.mrf.mxu0
    %2806 = vdwg.mxu0
    %2807 = vrot.lane.b32.xlu0 %v2274, 96
    %v2808 = vpop.permute.xlu0 %2807
    %v2809 = vsel %vm434, %v2274, 0
    %v2811 = vsel %vm434, %v2808, 0
    %2813 = vmatprep.subr.mxu0 0.0
    %2814 = vmatpush1.xpose.msra.mxu0 0.0
    %2815 = vmatprep.subr.mxu0 0.0
    %2816 = vmatpush1.xpose.msra.mxu0 0.0
    %2817 = vmatprep.subr.mxu0 0.0
    %2818 = vmatpush1.xpose.msra.mxu0 0.0
    %2819 = vmatprep.subr.mxu0 0.0
    %2820 = vmatpush1.xpose.msra.mxu0 0.0
    %2821 = vmatprep.subr.mxu0 0.0
    %2822 = vmatpush1.xpose.msra.mxu0 0.0
    %2823 = vmatprep.subr.mxu0 0.0
    %2824 = vmatpush1.xpose.msra.mxu0 0.0
    %2825 = vmatprep.subr.mxu0 0.0
    %2826 = vmatpush1.xpose.msra.mxu0 0.0
    %2827 = vmatprep.subr.mxu0 0.0
    %2828 = vmatpush1.xpose.msra.mxu0 0.0
    %2829 = vmatprep.subr.mxu0 0.0
    %2830 = vmatpush1.xpose.msra.mxu0 0.0
    %2831 = vmatprep.subr.mxu0 0.0
    %2832 = vmatpush1.xpose.msra.mxu0 0.0
    %2833 = vmatprep.subr.mxu0 0.0
    %2834 = vmatpush1.xpose.msra.mxu0 0.0
    %2835 = vmatprep.subr.mxu0 0.0
    %2836 = vmatpush1.xpose.msra.mxu0 0.0
    %2837 = vmatprep.subr.mxu0 0.0
    %2838 = vmatpush1.xpose.msra.mxu0 0.0
    %2839 = vmatprep.subr.mxu0 0.0
    %2840 = vmatpush1.xpose.msra.mxu0 0.0
    %2841 = vmatprep.subr.mxu0 0.0
    %2842 = vmatpush1.xpose.msra.mxu0 0.0
    %2843 = vmatprep.subr.mxu0 0.0
    %2844 = vmatpush1.xpose.msra.mxu0 %v2811
    %2845 = vmatprep.subr.mxu0 0.0
    %2846 = vmatpush2.xpose.msra.mxu0 0.0
    %2847 = vmatprep.subr.mxu0 0.0
    %2848 = vmatpush2.xpose.msra.mxu0 0.0
    %2849 = vmatprep.subr.mxu0 0.0
    %2850 = vmatpush2.xpose.msra.mxu0 0.0
    %2851 = vmatprep.subr.mxu0 0.0
    %2852 = vmatpush2.xpose.msra.mxu0 0.0
    %2853 = vmatprep.subr.mxu0 0.0
    %2854 = vmatpush2.xpose.msra.mxu0 0.0
    %2855 = vmatprep.subr.mxu0 0.0
    %2856 = vmatpush2.xpose.msra.mxu0 0.0
    %2857 = vmatprep.subr.mxu0 0.0
    %2858 = vmatpush2.xpose.msra.mxu0 0.0
    %2859 = vmatprep.subr.mxu0 0.0
    %2860 = vmatpush2.xpose.msra.mxu0 0.0
    %2861 = vmatprep.subr.mxu0 0.0
    %2862 = vmatpush2.xpose.msra.mxu0 0.0
    %2863 = vmatprep.subr.mxu0 0.0
    %2864 = vmatpush2.xpose.msra.mxu0 0.0
    %2865 = vmatprep.subr.mxu0 0.0
    %2866 = vmatpush2.xpose.msra.mxu0 0.0
    %2867 = vmatprep.subr.mxu0 0.0
    %2868 = vmatpush2.xpose.msra.mxu0 0.0
    %2869 = vmatprep.subr.mxu0 0.0
    %2870 = vmatpush2.xpose.msra.mxu0 0.0
    %2871 = vmatprep.subr.mxu0 0.0
    %2872 = vmatpush2.xpose.msra.mxu0 0.0
    %2873 = vmatprep.subr.mxu0 0.0
    %2874 = vmatpush2.xpose.msra.mxu0 0.0
    %2875 = vmatprep.subr.mxu0 0.0
    %2876 = vmatpush2.xpose.msra.mxu0 0.0
    %2877 = vmatprep.mubr.f32.mxu0 0.0
    %2878 = vmatmul.mubr.f32.gmra.mxu0 %v2809
    %v2879 = vpop.f32.mrf.mxu0
    %v2880 = vadd.f32 0.0, %v2879
    %v2881 = vpop.f32.mrf.mxu0
    %2882 = vdwg.mxu0
    %v2883 = vmul.f32 %v2348, 0.35355338
    %v2884 = vmul.f32 %v2424, 0.35355338
    %v2885 = vmul.f32 %v2500, 0.35355338
    %v2886 = vmul.f32 %v2576, 0.35355338
    %v2887 = vmul.f32 %v2652, 0.35355338
    %v2888 = vmul.f32 %v2728, 0.35355338
    %v2889 = vmul.f32 %v2804, 0.35355338
    %v2890 = vmul.f32 %v2880, 0.35355338
    %v2891 = vadd.f32 %v2883, %v243
    %v2892 = vadd.f32 %v2884, %v247
    %v2893 = vadd.f32 %v2885, %v251
    %v2894 = vadd.f32 %v2886, %v255
    %v2895 = vadd.f32 %v2887, %v259
    %v2896 = vadd.f32 %v2888, %v263
    %v2897 = vadd.f32 %v2889, %v267
    %v2898 = vadd.f32 %v2890, %v271
    %v2899 = vsel %vm434, %v2891, -inf
    %2900 = vmax.xlane.f32.xlu0 %v2899
    %v2901 = vpop.xlane.xlu0 %2900
    %v2902 = vsel %vm434, %v2892, -inf
    %2903 = vmax.xlane.f32.xlu0 %v2902
    %v2904 = vpop.xlane.xlu0 %2903
    %v2905 = vsel %vm434, %v2893, -inf
    %2906 = vmax.xlane.f32.xlu0 %v2905
    %v2907 = vpop.xlane.xlu0 %2906
    %v2908 = vsel %vm434, %v2894, -inf
    %2909 = vmax.xlane.f32.xlu0 %v2908
    %v2910 = vpop.xlane.xlu0 %2909
    %v2911 = vsel %vm434, %v2895, -inf
    %2912 = vmax.xlane.f32.xlu0 %v2911
    %v2913 = vpop.xlane.xlu0 %2912
    %v2914 = vsel %vm434, %v2896, -inf
    %2915 = vmax.xlane.f32.xlu0 %v2914
    %v2916 = vpop.xlane.xlu0 %2915
    %v2917 = vsel %vm434, %v2897, -inf
    %2918 = vmax.xlane.f32.xlu0 %v2917
    %v2919 = vpop.xlane.xlu0 %2918
    %v2920 = vsel %vm434, %v2898, -inf
    %2921 = vmax.xlane.f32.xlu0 %v2920
    %v2922 = vpop.xlane.xlu0 %2921
    %v2923 = vsub.f32 %v2891, %v2901
    %v2924 = vsub.f32 %v2892, %v2904
    %v2925 = vsub.f32 %v2893, %v2907
    %v2926 = vsub.f32 %v2894, %v2910
    %v2927 = vsub.f32 %v2895, %v2913
    %v2928 = vsub.f32 %v2896, %v2916
    %v2929 = vsub.f32 %v2897, %v2919
    %v2930 = vsub.f32 %v2898, %v2922
    %v2931 = vmul.f32 %v2923, 1.442695
    %v2932 = vpow.pop %v2931
    %v2933 = vmul.f32 %v2924, 1.442695
    %v2934 = vpow.pop %v2933
    %v2935 = vmul.f32 %v2925, 1.442695
    %v2936 = vpow.pop %v2935
    %v2937 = vmul.f32 %v2926, 1.442695
    %v2938 = vpow.pop %v2937
    %v2939 = vmul.f32 %v2927, 1.442695
    %v2940 = vpow.pop %v2939
    %v2941 = vmul.f32 %v2928, 1.442695
    %v2942 = vpow.pop %v2941
    %v2943 = vmul.f32 %v2929, 1.442695
    %v2944 = vpow.pop %v2943
    %v2945 = vmul.f32 %v2930, 1.442695
    %v2946 = vpow.pop %v2945
    %v2947 = vsel %vm434, %v2932, 0.0
    %2948 = vadd.xlane.f32.xlu0 %v2947
    %v2949 = vpop.xlane.xlu0 %2948
    %v2950 = vsel %vm434, %v2934, 0.0
    %2951 = vadd.xlane.f32.xlu0 %v2950
    %v2952 = vpop.xlane.xlu0 %2951
    %v2953 = vsel %vm434, %v2936, 0.0
    %2954 = vadd.xlane.f32.xlu0 %v2953
    %v2955 = vpop.xlane.xlu0 %2954
    %v2956 = vsel %vm434, %v2938, 0.0
    %2957 = vadd.xlane.f32.xlu0 %v2956
    %v2958 = vpop.xlane.xlu0 %2957
    %v2959 = vsel %vm434, %v2940, 0.0
    %2960 = vadd.xlane.f32.xlu0 %v2959
    %v2961 = vpop.xlane.xlu0 %2960
    %v2962 = vsel %vm434, %v2942, 0.0
    %2963 = vadd.xlane.f32.xlu0 %v2962
    %v2964 = vpop.xlane.xlu0 %2963
    %v2965 = vsel %vm434, %v2944, 0.0
    %2966 = vadd.xlane.f32.xlu0 %v2965
    %v2967 = vpop.xlane.xlu0 %2966
    %v2968 = vsel %vm434, %v2946, 0.0
    %2969 = vadd.xlane.f32.xlu0 %v2968
    %v2970 = vpop.xlane.xlu0 %2969
    %v2971 = vrcp.pop %v2949
    %v2972 = vrcp.pop %v2952
    %v2973 = vrcp.pop %v2955
    %v2974 = vrcp.pop %v2958
    %v2975 = vrcp.pop %v2961
    %v2976 = vrcp.pop %v2964
    %v2977 = vrcp.pop %v2967
    %v2978 = vrcp.pop %v2970
    %v2979 = vmul.f32 %v2932, %v2971
    %v2980 = vmul.f32 %v2934, %v2972
    %v2981 = vmul.f32 %v2936, %v2973
    %v2982 = vmul.f32 %v2938, %v2974
    %v2983 = vmul.f32 %v2940, %v2975
    %v2984 = vmul.f32 %v2942, %v2976
    %v2985 = vmul.f32 %v2944, %v2977
    %v2986 = vmul.f32 %v2946, %v2978
    %2987 = vrot.lane.b32.xlu0 %v2253, 64
    %v2988 = vpop.permute.xlu0 %2987
    %v2991 = vsel %vm434, %v2979, 0
    %2993 = vmatprep.subr.mxu0 0.0
    %2994 = vmatpush1.msra.mxu0 0.0
    %2995 = vmatprep.subr.mxu0 0.0
    %2996 = vmatpush1.msra.mxu0 0.0
    %2997 = vmatprep.subr.mxu0 0.0
    %2998 = vmatpush1.msra.mxu0 0.0
    %2999 = vmatprep.subr.mxu0 0.0
    %3000 = vmatpush1.msra.mxu0 0.0
    %3001 = vmatprep.subr.mxu0 0.0
    %3002 = vmatpush1.msra.mxu0 0.0
    %3003 = vmatprep.subr.mxu0 0.0
    %3004 = vmatpush1.msra.mxu0 0.0
    %3005 = vmatprep.subr.mxu0 0.0
    %3006 = vmatpush1.msra.mxu0 0.0
    %3007 = vmatprep.subr.mxu0 0.0
    %3008 = vmatpush1.msra.mxu0 0.0
    %3009 = vmatprep.subr.mxu0 0.0
    %3010 = vmatpush1.msra.mxu0 0.0
    %3011 = vmatprep.subr.mxu0 0.0
    %3012 = vmatpush1.msra.mxu0 0.0
    %3013 = vmatprep.subr.mxu0 0.0
    %3014 = vmatpush1.msra.mxu0 0.0
    %3015 = vmatprep.subr.mxu0 0.0
    %3016 = vmatpush1.msra.mxu0 0.0
    %3017 = vmatprep.subr.mxu0 0.0
    %3018 = vmatpush1.msra.mxu0 0.0
    %3019 = vmatprep.subr.mxu0 0.0
    %3020 = vmatpush1.msra.mxu0 0.0
    %3021 = vmatprep.subr.mxu0 0.0
    %3022 = vmatpush1.msra.mxu0 0.0
    %3023 = vmatprep.subr.mxu0 0.0
    %3024 = vmatpush1.msra.mxu0 %v2988
    %3025 = vmatprep.subr.mxu0 0.0
    %3026 = vmatpush2.msra.mxu0 0.0
    %3027 = vmatprep.subr.mxu0 0.0
    %3028 = vmatpush2.msra.mxu0 0.0
    %3029 = vmatprep.subr.mxu0 0.0
    %3030 = vmatpush2.msra.mxu0 0.0
    %3031 = vmatprep.subr.mxu0 0.0
    %3032 = vmatpush2.msra.mxu0 0.0
    %3033 = vmatprep.subr.mxu0 0.0
    %3034 = vmatpush2.msra.mxu0 0.0
    %3035 = vmatprep.subr.mxu0 0.0
    %3036 = vmatpush2.msra.mxu0 0.0
    %3037 = vmatprep.subr.mxu0 0.0
    %3038 = vmatpush2.msra.mxu0 0.0
    %3039 = vmatprep.subr.mxu0 0.0
    %3040 = vmatpush2.msra.mxu0 0.0
    %3041 = vmatprep.subr.mxu0 0.0
    %3042 = vmatpush2.msra.mxu0 0.0
    %3043 = vmatprep.subr.mxu0 0.0
    %3044 = vmatpush2.msra.mxu0 0.0
    %3045 = vmatprep.subr.mxu0 0.0
    %3046 = vmatpush2.msra.mxu0 0.0
    %3047 = vmatprep.subr.mxu0 0.0
    %3048 = vmatpush2.msra.mxu0 0.0
    %3049 = vmatprep.subr.mxu0 0.0
    %3050 = vmatpush2.msra.mxu0 0.0
    %3051 = vmatprep.subr.mxu0 0.0
    %3052 = vmatpush2.msra.mxu0 0.0
    %3053 = vmatprep.subr.mxu0 0.0
    %3054 = vmatpush2.msra.mxu0 0.0
    %3055 = vmatprep.subr.mxu0 0.0
    %3056 = vmatpush2.msra.mxu0 0.0
    %3057 = vmatprep.mubr.f32.mxu0 0.0
    %3058 = vmatmul.mubr.f32.gmra.mxu0 %v2991
    %v3059 = vpop.f32.mrf.mxu0
    %v3060 = vadd.f32 0.0, %v3059
    %v3061 = vpop.f32.mrf.mxu0
    %3062 = vdwg.mxu0
    %3063 = vrot.lane.b32.xlu0 %v2258, 64
    %v3064 = vpop.permute.xlu0 %3063
    %v3067 = vsel %vm434, %v2980, 0
    %3069 = vmatprep.subr.mxu0 0.0
    %3070 = vmatpush1.msra.mxu0 0.0
    %3071 = vmatprep.subr.mxu0 0.0
    %3072 = vmatpush1.msra.mxu0 0.0
    %3073 = vmatprep.subr.mxu0 0.0
    %3074 = vmatpush1.msra.mxu0 0.0
    %3075 = vmatprep.subr.mxu0 0.0
    %3076 = vmatpush1.msra.mxu0 0.0
    %3077 = vmatprep.subr.mxu0 0.0
    %3078 = vmatpush1.msra.mxu0 0.0
    %3079 = vmatprep.subr.mxu0 0.0
    %3080 = vmatpush1.msra.mxu0 0.0
    %3081 = vmatprep.subr.mxu0 0.0
    %3082 = vmatpush1.msra.mxu0 0.0
    %3083 = vmatprep.subr.mxu0 0.0
    %3084 = vmatpush1.msra.mxu0 0.0
    %3085 = vmatprep.subr.mxu0 0.0
    %3086 = vmatpush1.msra.mxu0 0.0
    %3087 = vmatprep.subr.mxu0 0.0
    %3088 = vmatpush1.msra.mxu0 0.0
    %3089 = vmatprep.subr.mxu0 0.0
    %3090 = vmatpush1.msra.mxu0 0.0
    %3091 = vmatprep.subr.mxu0 0.0
    %3092 = vmatpush1.msra.mxu0 0.0
    %3093 = vmatprep.subr.mxu0 0.0
    %3094 = vmatpush1.msra.mxu0 0.0
    %3095 = vmatprep.subr.mxu0 0.0
    %3096 = vmatpush1.msra.mxu0 0.0
    %3097 = vmatprep.subr.mxu0 0.0
    %3098 = vmatpush1.msra.mxu0 0.0
    %3099 = vmatprep.subr.mxu0 0.0
    %3100 = vmatpush1.msra.mxu0 %v3064
    %3101 = vmatprep.subr.mxu0 0.0
    %3102 = vmatpush2.msra.mxu0 0.0
    %3103 = vmatprep.subr.mxu0 0.0
    %3104 = vmatpush2.msra.mxu0 0.0
    %3105 = vmatprep.subr.mxu0 0.0
    %3106 = vmatpush2.msra.mxu0 0.0
    %3107 = vmatprep.subr.mxu0 0.0
    %3108 = vmatpush2.msra.mxu0 0.0
    %3109 = vmatprep.subr.mxu0 0.0
    %3110 = vmatpush2.msra.mxu0 0.0
    %3111 = vmatprep.subr.mxu0 0.0
    %3112 = vmatpush2.msra.mxu0 0.0
    %3113 = vmatprep.subr.mxu0 0.0
    %3114 = vmatpush2.msra.mxu0 0.0
    %3115 = vmatprep.subr.mxu0 0.0
    %3116 = vmatpush2.msra.mxu0 0.0
    %3117 = vmatprep.subr.mxu0 0.0
    %3118 = vmatpush2.msra.mxu0 0.0
    %3119 = vmatprep.subr.mxu0 0.0
    %3120 = vmatpush2.msra.mxu0 0.0
    %3121 = vmatprep.subr.mxu0 0.0
    %3122 = vmatpush2.msra.mxu0 0.0
    %3123 = vmatprep.subr.mxu0 0.0
    %3124 = vmatpush2.msra.mxu0 0.0
    %3125 = vmatprep.subr.mxu0 0.0
    %3126 = vmatpush2.msra.mxu0 0.0
    %3127 = vmatprep.subr.mxu0 0.0
    %3128 = vmatpush2.msra.mxu0 0.0
    %3129 = vmatprep.subr.mxu0 0.0
    %3130 = vmatpush2.msra.mxu0 0.0
    %3131 = vmatprep.subr.mxu0 0.0
    %3132 = vmatpush2.msra.mxu0 0.0
    %3133 = vmatprep.mubr.f32.mxu0 0.0
    %3134 = vmatmul.mubr.f32.gmra.mxu0 %v3067
    %v3135 = vpop.f32.mrf.mxu0
    %v3136 = vadd.f32 0.0, %v3135
    %v3137 = vpop.f32.mrf.mxu0
    %3138 = vdwg.mxu0
    %3139 = vrot.lane.b32.xlu0 %v2264, 64
    %v3140 = vpop.permute.xlu0 %3139
    %v3143 = vsel %vm434, %v2981, 0
    %3145 = vmatprep.subr.mxu0 0.0
    %3146 = vmatpush1.msra.mxu0 0.0
    %3147 = vmatprep.subr.mxu0 0.0
    %3148 = vmatpush1.msra.mxu0 0.0
    %3149 = vmatprep.subr.mxu0 0.0
    %3150 = vmatpush1.msra.mxu0 0.0
    %3151 = vmatprep.subr.mxu0 0.0
    %3152 = vmatpush1.msra.mxu0 0.0
    %3153 = vmatprep.subr.mxu0 0.0
    %3154 = vmatpush1.msra.mxu0 0.0
    %3155 = vmatprep.subr.mxu0 0.0
    %3156 = vmatpush1.msra.mxu0 0.0
    %3157 = vmatprep.subr.mxu0 0.0
    %3158 = vmatpush1.msra.mxu0 0.0
    %3159 = vmatprep.subr.mxu0 0.0
    %3160 = vmatpush1.msra.mxu0 0.0
    %3161 = vmatprep.subr.mxu0 0.0
    %3162 = vmatpush1.msra.mxu0 0.0
    %3163 = vmatprep.subr.mxu0 0.0
    %3164 = vmatpush1.msra.mxu0 0.0
    %3165 = vmatprep.subr.mxu0 0.0
    %3166 = vmatpush1.msra.mxu0 0.0
    %3167 = vmatprep.subr.mxu0 0.0
    %3168 = vmatpush1.msra.mxu0 0.0
    %3169 = vmatprep.subr.mxu0 0.0
    %3170 = vmatpush1.msra.mxu0 0.0
    %3171 = vmatprep.subr.mxu0 0.0
    %3172 = vmatpush1.msra.mxu0 0.0
    %3173 = vmatprep.subr.mxu0 0.0
    %3174 = vmatpush1.msra.mxu0 0.0
    %3175 = vmatprep.subr.mxu0 0.0
    %3176 = vmatpush1.msra.mxu0 %v3140
    %3177 = vmatprep.subr.mxu0 0.0
    %3178 = vmatpush2.msra.mxu0 0.0
    %3179 = vmatprep.subr.mxu0 0.0
    %3180 = vmatpush2.msra.mxu0 0.0
    %3181 = vmatprep.subr.mxu0 0.0
    %3182 = vmatpush2.msra.mxu0 0.0
    %3183 = vmatprep.subr.mxu0 0.0
    %3184 = vmatpush2.msra.mxu0 0.0
    %3185 = vmatprep.subr.mxu0 0.0
    %3186 = vmatpush2.msra.mxu0 0.0
    %3187 = vmatprep.subr.mxu0 0.0
    %3188 = vmatpush2.msra.mxu0 0.0
    %3189 = vmatprep.subr.mxu0 0.0
    %3190 = vmatpush2.msra.mxu0 0.0
    %3191 = vmatprep.subr.mxu0 0.0
    %3192 = vmatpush2.msra.mxu0 0.0
    %3193 = vmatprep.subr.mxu0 0.0
    %3194 = vmatpush2.msra.mxu0 0.0
    %3195 = vmatprep.subr.mxu0 0.0
    %3196 = vmatpush2.msra.mxu0 0.0
    %3197 = vmatprep.subr.mxu0 0.0
    %3198 = vmatpush2.msra.mxu0 0.0
    %3199 = vmatprep.subr.mxu0 0.0
    %3200 = vmatpush2.msra.mxu0 0.0
    %3201 = vmatprep.subr.mxu0 0.0
    %3202 = vmatpush2.msra.mxu0 0.0
    %3203 = vmatprep.subr.mxu0 0.0
    %3204 = vmatpush2.msra.mxu0 0.0
    %3205 = vmatprep.subr.mxu0 0.0
    %3206 = vmatpush2.msra.mxu0 0.0
    %3207 = vmatprep.subr.mxu0 0.0
    %3208 = vmatpush2.msra.mxu0 0.0
    %3209 = vmatprep.mubr.f32.mxu0 0.0
    %3210 = vmatmul.mubr.f32.gmra.mxu0 %v3143
    %v3211 = vpop.f32.mrf.mxu0
    %v3212 = vadd.f32 0.0, %v3211
    %v3213 = vpop.f32.mrf.mxu0
    %3214 = vdwg.mxu0
    %3215 = vrot.lane.b32.xlu0 %v2266, 64
    %v3216 = vpop.permute.xlu0 %3215
    %v3219 = vsel %vm434, %v2982, 0
    %3221 = vmatprep.subr.mxu0 0.0
    %3222 = vmatpush1.msra.mxu0 0.0
    %3223 = vmatprep.subr.mxu0 0.0
    %3224 = vmatpush1.msra.mxu0 0.0
    %3225 = vmatprep.subr.mxu0 0.0
    %3226 = vmatpush1.msra.mxu0 0.0
    %3227 = vmatprep.subr.mxu0 0.0
    %3228 = vmatpush1.msra.mxu0 0.0
    %3229 = vmatprep.subr.mxu0 0.0
    %3230 = vmatpush1.msra.mxu0 0.0
    %3231 = vmatprep.subr.mxu0 0.0
    %3232 = vmatpush1.msra.mxu0 0.0
    %3233 = vmatprep.subr.mxu0 0.0
    %3234 = vmatpush1.msra.mxu0 0.0
    %3235 = vmatprep.subr.mxu0 0.0
    %3236 = vmatpush1.msra.mxu0 0.0
    %3237 = vmatprep.subr.mxu0 0.0
    %3238 = vmatpush1.msra.mxu0 0.0
    %3239 = vmatprep.subr.mxu0 0.0
    %3240 = vmatpush1.msra.mxu0 0.0
    %3241 = vmatprep.subr.mxu0 0.0
    %3242 = vmatpush1.msra.mxu0 0.0
    %3243 = vmatprep.subr.mxu0 0.0
    %3244 = vmatpush1.msra.mxu0 0.0
    %3245 = vmatprep.subr.mxu0 0.0
    %3246 = vmatpush1.msra.mxu0 0.0
    %3247 = vmatprep.subr.mxu0 0.0
    %3248 = vmatpush1.msra.mxu0 0.0
    %3249 = vmatprep.subr.mxu0 0.0
    %3250 = vmatpush1.msra.mxu0 0.0
    %3251 = vmatprep.subr.mxu0 0.0
    %3252 = vmatpush1.msra.mxu0 %v3216
    %3253 = vmatprep.subr.mxu0 0.0
    %3254 = vmatpush2.msra.mxu0 0.0
    %3255 = vmatprep.subr.mxu0 0.0
    %3256 = vmatpush2.msra.mxu0 0.0
    %3257 = vmatprep.subr.mxu0 0.0
    %3258 = vmatpush2.msra.mxu0 0.0
    %3259 = vmatprep.subr.mxu0 0.0
    %3260 = vmatpush2.msra.mxu0 0.0
    %3261 = vmatprep.subr.mxu0 0.0
    %3262 = vmatpush2.msra.mxu0 0.0
    %3263 = vmatprep.subr.mxu0 0.0
    %3264 = vmatpush2.msra.mxu0 0.0
    %3265 = vmatprep.subr.mxu0 0.0
    %3266 = vmatpush2.msra.mxu0 0.0
    %3267 = vmatprep.subr.mxu0 0.0
    %3268 = vmatpush2.msra.mxu0 0.0
    %3269 = vmatprep.subr.mxu0 0.0
    %3270 = vmatpush2.msra.mxu0 0.0
    %3271 = vmatprep.subr.mxu0 0.0
    %3272 = vmatpush2.msra.mxu0 0.0
    %3273 = vmatprep.subr.mxu0 0.0
    %3274 = vmatpush2.msra.mxu0 0.0
    %3275 = vmatprep.subr.mxu0 0.0
    %3276 = vmatpush2.msra.mxu0 0.0
    %3277 = vmatprep.subr.mxu0 0.0
    %3278 = vmatpush2.msra.mxu0 0.0
    %3279 = vmatprep.subr.mxu0 0.0
    %3280 = vmatpush2.msra.mxu0 0.0
    %3281 = vmatprep.subr.mxu0 0.0
    %3282 = vmatpush2.msra.mxu0 0.0
    %3283 = vmatprep.subr.mxu0 0.0
    %3284 = vmatpush2.msra.mxu0 0.0
    %3285 = vmatprep.mubr.f32.mxu0 0.0
    %3286 = vmatmul.mubr.f32.gmra.mxu0 %v3219
    %v3287 = vpop.f32.mrf.mxu0
    %v3288 = vadd.f32 0.0, %v3287
    %v3289 = vpop.f32.mrf.mxu0
    %3290 = vdwg.mxu0
    %3291 = vrot.lane.b32.xlu0 %v2268, 64
    %v3292 = vpop.permute.xlu0 %3291
    %v3295 = vsel %vm434, %v2983, 0
    %3297 = vmatprep.subr.mxu0 0.0
    %3298 = vmatpush1.msra.mxu0 0.0
    %3299 = vmatprep.subr.mxu0 0.0
    %3300 = vmatpush1.msra.mxu0 0.0
    %3301 = vmatprep.subr.mxu0 0.0
    %3302 = vmatpush1.msra.mxu0 0.0
    %3303 = vmatprep.subr.mxu0 0.0
    %3304 = vmatpush1.msra.mxu0 0.0
    %3305 = vmatprep.subr.mxu0 0.0
    %3306 = vmatpush1.msra.mxu0 0.0
    %3307 = vmatprep.subr.mxu0 0.0
    %3308 = vmatpush1.msra.mxu0 0.0
    %3309 = vmatprep.subr.mxu0 0.0
    %3310 = vmatpush1.msra.mxu0 0.0
    %3311 = vmatprep.subr.mxu0 0.0
    %3312 = vmatpush1.msra.mxu0 0.0
    %3313 = vmatprep.subr.mxu0 0.0
    %3314 = vmatpush1.msra.mxu0 0.0
    %3315 = vmatprep.subr.mxu0 0.0
    %3316 = vmatpush1.msra.mxu0 0.0
    %3317 = vmatprep.subr.mxu0 0.0
    %3318 = vmatpush1.msra.mxu0 0.0
    %3319 = vmatprep.subr.mxu0 0.0
    %3320 = vmatpush1.msra.mxu0 0.0
    %3321 = vmatprep.subr.mxu0 0.0
    %3322 = vmatpush1.msra.mxu0 0.0
    %3323 = vmatprep.subr.mxu0 0.0
    %3324 = vmatpush1.msra.mxu0 0.0
    %3325 = vmatprep.subr.mxu0 0.0
    %3326 = vmatpush1.msra.mxu0 0.0
    %3327 = vmatprep.subr.mxu0 0.0
    %3328 = vmatpush1.msra.mxu0 %v3292
    %3329 = vmatprep.subr.mxu0 0.0
    %3330 = vmatpush2.msra.mxu0 0.0
    %3331 = vmatprep.subr.mxu0 0.0
    %3332 = vmatpush2.msra.mxu0 0.0
    %3333 = vmatprep.subr.mxu0 0.0
    %3334 = vmatpush2.msra.mxu0 0.0
    %3335 = vmatprep.subr.mxu0 0.0
    %3336 = vmatpush2.msra.mxu0 0.0
    %3337 = vmatprep.subr.mxu0 0.0
    %3338 = vmatpush2.msra.mxu0 0.0
    %3339 = vmatprep.subr.mxu0 0.0
    %3340 = vmatpush2.msra.mxu0 0.0
    %3341 = vmatprep.subr.mxu0 0.0
    %3342 = vmatpush2.msra.mxu0 0.0
    %3343 = vmatprep.subr.mxu0 0.0
    %3344 = vmatpush2.msra.mxu0 0.0
    %3345 = vmatprep.subr.mxu0 0.0
    %3346 = vmatpush2.msra.mxu0 0.0
    %3347 = vmatprep.subr.mxu0 0.0
    %3348 = vmatpush2.msra.mxu0 0.0
    %3349 = vmatprep.subr.mxu0 0.0
    %3350 = vmatpush2.msra.mxu0 0.0
    %3351 = vmatprep.subr.mxu0 0.0
    %3352 = vmatpush2.msra.mxu0 0.0
    %3353 = vmatprep.subr.mxu0 0.0
    %3354 = vmatpush2.msra.mxu0 0.0
    %3355 = vmatprep.subr.mxu0 0.0
    %3356 = vmatpush2.msra.mxu0 0.0
    %3357 = vmatprep.subr.mxu0 0.0
    %3358 = vmatpush2.msra.mxu0 0.0
    %3359 = vmatprep.subr.mxu0 0.0
    %3360 = vmatpush2.msra.mxu0 0.0
    %3361 = vmatprep.mubr.f32.mxu0 0.0
    %3362 = vmatmul.mubr.f32.gmra.mxu0 %v3295
    %v3363 = vpop.f32.mrf.mxu0
    %v3364 = vadd.f32 0.0, %v3363
    %v3365 = vpop.f32.mrf.mxu0
    %3366 = vdwg.mxu0
    %3367 = vrot.lane.b32.xlu0 %v2270, 64
    %v3368 = vpop.permute.xlu0 %3367
    %v3371 = vsel %vm434, %v2984, 0
    %3373 = vmatprep.subr.mxu0 0.0
    %3374 = vmatpush1.msra.mxu0 0.0
    %3375 = vmatprep.subr.mxu0 0.0
    %3376 = vmatpush1.msra.mxu0 0.0
    %3377 = vmatprep.subr.mxu0 0.0
    %3378 = vmatpush1.msra.mxu0 0.0
    %3379 = vmatprep.subr.mxu0 0.0
    %3380 = vmatpush1.msra.mxu0 0.0
    %3381 = vmatprep.subr.mxu0 0.0
    %3382 = vmatpush1.msra.mxu0 0.0
    %3383 = vmatprep.subr.mxu0 0.0
    %3384 = vmatpush1.msra.mxu0 0.0
    %3385 = vmatprep.subr.mxu0 0.0
    %3386 = vmatpush1.msra.mxu0 0.0
    %3387 = vmatprep.subr.mxu0 0.0
    %3388 = vmatpush1.msra.mxu0 0.0
    %3389 = vmatprep.subr.mxu0 0.0
    %3390 = vmatpush1.msra.mxu0 0.0
    %3391 = vmatprep.subr.mxu0 0.0
    %3392 = vmatpush1.msra.mxu0 0.0
    %3393 = vmatprep.subr.mxu0 0.0
    %3394 = vmatpush1.msra.mxu0 0.0
    %3395 = vmatprep.subr.mxu0 0.0
    %3396 = vmatpush1.msra.mxu0 0.0
    %3397 = vmatprep.subr.mxu0 0.0
    %3398 = vmatpush1.msra.mxu0 0.0
    %3399 = vmatprep.subr.mxu0 0.0
    %3400 = vmatpush1.msra.mxu0 0.0
    %3401 = vmatprep.subr.mxu0 0.0
    %3402 = vmatpush1.msra.mxu0 0.0
    %3403 = vmatprep.subr.mxu0 0.0
    %3404 = vmatpush1.msra.mxu0 %v3368
    %3405 = vmatprep.subr.mxu0 0.0
    %3406 = vmatpush2.msra.mxu0 0.0
    %3407 = vmatprep.subr.mxu0 0.0
    %3408 = vmatpush2.msra.mxu0 0.0
    %3409 = vmatprep.subr.mxu0 0.0
    %3410 = vmatpush2.msra.mxu0 0.0
    %3411 = vmatprep.subr.mxu0 0.0
    %3412 = vmatpush2.msra.mxu0 0.0
    %3413 = vmatprep.subr.mxu0 0.0
    %3414 = vmatpush2.msra.mxu0 0.0
    %3415 = vmatprep.subr.mxu0 0.0
    %3416 = vmatpush2.msra.mxu0 0.0
    %3417 = vmatprep.subr.mxu0 0.0
    %3418 = vmatpush2.msra.mxu0 0.0
    %3419 = vmatprep.subr.mxu0 0.0
    %3420 = vmatpush2.msra.mxu0 0.0
    %3421 = vmatprep.subr.mxu0 0.0
    %3422 = vmatpush2.msra.mxu0 0.0
    %3423 = vmatprep.subr.mxu0 0.0
    %3424 = vmatpush2.msra.mxu0 0.0
    %3425 = vmatprep.subr.mxu0 0.0
    %3426 = vmatpush2.msra.mxu0 0.0
    %3427 = vmatprep.subr.mxu0 0.0
    %3428 = vmatpush2.msra.mxu0 0.0
    %3429 = vmatprep.subr.mxu0 0.0
    %3430 = vmatpush2.msra.mxu0 0.0
    %3431 = vmatprep.subr.mxu0 0.0
    %3432 = vmatpush2.msra.mxu0 0.0
    %3433 = vmatprep.subr.mxu0 0.0
    %3434 = vmatpush2.msra.mxu0 0.0
    %3435 = vmatprep.subr.mxu0 0.0
    %3436 = vmatpush2.msra.mxu0 0.0
    %3437 = vmatprep.mubr.f32.mxu0 0.0
    %3438 = vmatmul.mubr.f32.gmra.mxu0 %v3371
    %v3439 = vpop.f32.mrf.mxu0
    %v3440 = vadd.f32 0.0, %v3439
    %v3441 = vpop.f32.mrf.mxu0
    %3442 = vdwg.mxu0
    %3443 = vrot.lane.b32.xlu0 %v2272, 64
    %v3444 = vpop.permute.xlu0 %3443
    %v3447 = vsel %vm434, %v2985, 0
    %3449 = vmatprep.subr.mxu0 0.0
    %3450 = vmatpush1.msra.mxu0 0.0
    %3451 = vmatprep.subr.mxu0 0.0
    %3452 = vmatpush1.msra.mxu0 0.0
    %3453 = vmatprep.subr.mxu0 0.0
    %3454 = vmatpush1.msra.mxu0 0.0
    %3455 = vmatprep.subr.mxu0 0.0
    %3456 = vmatpush1.msra.mxu0 0.0
    %3457 = vmatprep.subr.mxu0 0.0
    %3458 = vmatpush1.msra.mxu0 0.0
    %3459 = vmatprep.subr.mxu0 0.0
    %3460 = vmatpush1.msra.mxu0 0.0
    %3461 = vmatprep.subr.mxu0 0.0
    %3462 = vmatpush1.msra.mxu0 0.0
    %3463 = vmatprep.subr.mxu0 0.0
    %3464 = vmatpush1.msra.mxu0 0.0
    %3465 = vmatprep.subr.mxu0 0.0
    %3466 = vmatpush1.msra.mxu0 0.0
    %3467 = vmatprep.subr.mxu0 0.0
    %3468 = vmatpush1.msra.mxu0 0.0
    %3469 = vmatprep.subr.mxu0 0.0
    %3470 = vmatpush1.msra.mxu0 0.0
    %3471 = vmatprep.subr.mxu0 0.0
    %3472 = vmatpush1.msra.mxu0 0.0
    %3473 = vmatprep.subr.mxu0 0.0
    %3474 = vmatpush1.msra.mxu0 0.0
    %3475 = vmatprep.subr.mxu0 0.0
    %3476 = vmatpush1.msra.mxu0 0.0
    %3477 = vmatprep.subr.mxu0 0.0
    %3478 = vmatpush1.msra.mxu0 0.0
    %3479 = vmatprep.subr.mxu0 0.0
    %3480 = vmatpush1.msra.mxu0 %v3444
    %3481 = vmatprep.subr.mxu0 0.0
    %3482 = vmatpush2.msra.mxu0 0.0
    %3483 = vmatprep.subr.mxu0 0.0
    %3484 = vmatpush2.msra.mxu0 0.0
    %3485 = vmatprep.subr.mxu0 0.0
    %3486 = vmatpush2.msra.mxu0 0.0
    %3487 = vmatprep.subr.mxu0 0.0
    %3488 = vmatpush2.msra.mxu0 0.0
    %3489 = vmatprep.subr.mxu0 0.0
    %3490 = vmatpush2.msra.mxu0 0.0
    %3491 = vmatprep.subr.mxu0 0.0
    %3492 = vmatpush2.msra.mxu0 0.0
    %3493 = vmatprep.subr.mxu0 0.0
    %3494 = vmatpush2.msra.mxu0 0.0
    %3495 = vmatprep.subr.mxu0 0.0
    %3496 = vmatpush2.msra.mxu0 0.0
    %3497 = vmatprep.subr.mxu0 0.0
    %3498 = vmatpush2.msra.mxu0 0.0
    %3499 = vmatprep.subr.mxu0 0.0
    %3500 = vmatpush2.msra.mxu0 0.0
    %3501 = vmatprep.subr.mxu0 0.0
    %3502 = vmatpush2.msra.mxu0 0.0
    %3503 = vmatprep.subr.mxu0 0.0
    %3504 = vmatpush2.msra.mxu0 0.0
    %3505 = vmatprep.subr.mxu0 0.0
    %3506 = vmatpush2.msra.mxu0 0.0
    %3507 = vmatprep.subr.mxu0 0.0
    %3508 = vmatpush2.msra.mxu0 0.0
    %3509 = vmatprep.subr.mxu0 0.0
    %3510 = vmatpush2.msra.mxu0 0.0
    %3511 = vmatprep.subr.mxu0 0.0
    %3512 = vmatpush2.msra.mxu0 0.0
    %3513 = vmatprep.mubr.f32.mxu0 0.0
    %3514 = vmatmul.mubr.f32.gmra.mxu0 %v3447
    %v3515 = vpop.f32.mrf.mxu0
    %v3516 = vadd.f32 0.0, %v3515
    %v3517 = vpop.f32.mrf.mxu0
    %3518 = vdwg.mxu0
    %3519 = vrot.lane.b32.xlu0 %v2274, 64
    %v3520 = vpop.permute.xlu0 %3519
    %v3523 = vsel %vm434, %v2986, 0
    %3525 = vmatprep.subr.mxu0 0.0
    %3526 = vmatpush1.msra.mxu0 0.0
    %3527 = vmatprep.subr.mxu0 0.0
    %3528 = vmatpush1.msra.mxu0 0.0
    %3529 = vmatprep.subr.mxu0 0.0
    %3530 = vmatpush1.msra.mxu0 0.0
    %3531 = vmatprep.subr.mxu0 0.0
    %3532 = vmatpush1.msra.mxu0 0.0
    %3533 = vmatprep.subr.mxu0 0.0
    %3534 = vmatpush1.msra.mxu0 0.0
    %3535 = vmatprep.subr.mxu0 0.0
    %3536 = vmatpush1.msra.mxu0 0.0
    %3537 = vmatprep.subr.mxu0 0.0
    %3538 = vmatpush1.msra.mxu0 0.0
    %3539 = vmatprep.subr.mxu0 0.0
    %3540 = vmatpush1.msra.mxu0 0.0
    %3541 = vmatprep.subr.mxu0 0.0
    %3542 = vmatpush1.msra.mxu0 0.0
    %3543 = vmatprep.subr.mxu0 0.0
    %3544 = vmatpush1.msra.mxu0 0.0
    %3545 = vmatprep.subr.mxu0 0.0
    %3546 = vmatpush1.msra.mxu0 0.0
    %3547 = vmatprep.subr.mxu0 0.0
    %3548 = vmatpush1.msra.mxu0 0.0
    %3549 = vmatprep.subr.mxu0 0.0
    %3550 = vmatpush1.msra.mxu0 0.0
    %3551 = vmatprep.subr.mxu0 0.0
    %3552 = vmatpush1.msra.mxu0 0.0
    %3553 = vmatprep.subr.mxu0 0.0
    %3554 = vmatpush1.msra.mxu0 0.0
    %3555 = vmatprep.subr.mxu0 0.0
    %3556 = vmatpush1.msra.mxu0 %v3520
    %3557 = vmatprep.subr.mxu0 0.0
    %3558 = vmatpush2.msra.mxu0 0.0
    %3559 = vmatprep.subr.mxu0 0.0
    %3560 = vmatpush2.msra.mxu0 0.0
    %3561 = vmatprep.subr.mxu0 0.0
    %3562 = vmatpush2.msra.mxu0 0.0
    %3563 = vmatprep.subr.mxu0 0.0
    %3564 = vmatpush2.msra.mxu0 0.0
    %3565 = vmatprep.subr.mxu0 0.0
    %3566 = vmatpush2.msra.mxu0 0.0
    %3567 = vmatprep.subr.mxu0 0.0
    %3568 = vmatpush2.msra.mxu0 0.0
    %3569 = vmatprep.subr.mxu0 0.0
    %3570 = vmatpush2.msra.mxu0 0.0
    %3571 = vmatprep.subr.mxu0 0.0
    %3572 = vmatpush2.msra.mxu0 0.0
    %3573 = vmatprep.subr.mxu0 0.0
    %3574 = vmatpush2.msra.mxu0 0.0
    %3575 = vmatprep.subr.mxu0 0.0
    %3576 = vmatpush2.msra.mxu0 0.0
    %3577 = vmatprep.subr.mxu0 0.0
    %3578 = vmatpush2.msra.mxu0 0.0
    %3579 = vmatprep.subr.mxu0 0.0
    %3580 = vmatpush2.msra.mxu0 0.0
    %3581 = vmatprep.subr.mxu0 0.0
    %3582 = vmatpush2.msra.mxu0 0.0
    %3583 = vmatprep.subr.mxu0 0.0
    %3584 = vmatpush2.msra.mxu0 0.0
    %3585 = vmatprep.subr.mxu0 0.0
    %3586 = vmatpush2.msra.mxu0 0.0
    %3587 = vmatprep.subr.mxu0 0.0
    %3588 = vmatpush2.msra.mxu0 0.0
    %3589 = vmatprep.mubr.f32.mxu0 0.0
    %3590 = vmatmul.mubr.f32.gmra.mxu0 %v3523
    %v3591 = vpop.f32.mrf.mxu0
    %v3592 = vadd.f32 0.0, %v3591
    %v3593 = vpop.f32.mrf.mxu0
    %3594 = vdwg.mxu0
    %3597 = vrot.lane.b32.xlu0 %v3212, 8
    %v3598 = vpop.permute.xlu0 %3597
    %3599 = vrot.lane.b32.xlu0 %v3288, 8
    %v3600 = vpop.permute.xlu0 %3599
    %3605 = vrot.lane.b32.xlu0 %v3364, 16
    %v3606 = vpop.permute.xlu0 %3605
    %3607 = vrot.lane.b32.xlu0 %v3440, 16
    %v3608 = vpop.permute.xlu0 %3607
    %3613 = vrot.lane.b32.xlu0 %v3516, 24
    %v3614 = vpop.permute.xlu0 %3613
    %3615 = vrot.lane.b32.xlu0 %v3592, 24
    %v3616 = vpop.permute.xlu0 %3615
    %v3619 = vsel %vm434, %v3060, %v3598
    %v3620 = vsel %vm434, %v3136, %v3600
    %v3621 = vsel %vm1779, %v3619, %v3606
    %v3622 = vsel %vm1779, %v3620, %v3608
    %v3623 = vsel %vm1782, %v3621, %v3614
    %v3624 = vsel %vm1782, %v3622, %v3616
    %s3625 = scalar_lea.vmem %s8, 32
    %v3626 = vld [vmem:[%s3625] sm:$0xff]
    %v3627 = vld [vmem:[%s3625 + $0x8] sm:$0xff]
    %v3628 = vld [vmem:[%s3625 + $0x10] sm:$0xff]
    %v3629 = vld [vmem:[%s3625 + $0x18] sm:$0xff]
    %v3631 = vsel %vm282, %v3623, 0
    %v3634 = vsel %vm282, %v3624, 0
    %3636 = vmatprep.subr.mxu0 0.0
    %3637 = vmatpush1.msra.mxu0 0.0
    %3638 = vmatprep.subr.mxu0 0.0
    %3639 = vmatpush1.msra.mxu0 0.0
    %3640 = vmatprep.subr.mxu0 0.0
    %3641 = vmatpush1.msra.mxu0 0.0
    %3642 = vmatprep.subr.mxu0 0.0
    %3643 = vmatpush1.msra.mxu0 0.0
    %3644 = vmatprep.subr.mxu0 0.0
    %3645 = vmatpush1.msra.mxu0 0.0
    %3646 = vmatprep.subr.mxu0 0.0
    %3647 = vmatpush1.msra.mxu0 0.0
    %3648 = vmatprep.subr.mxu0 0.0
    %3649 = vmatpush1.msra.mxu0 0.0
    %3650 = vmatprep.subr.mxu0 0.0
    %3651 = vmatpush1.msra.mxu0 0.0
    %3652 = vmatprep.subr.mxu0 0.0
    %3653 = vmatpush1.msra.mxu0 0.0
    %3654 = vmatprep.subr.mxu0 0.0
    %3655 = vmatpush1.msra.mxu0 0.0
    %3656 = vmatprep.subr.mxu0 0.0
    %3657 = vmatpush1.msra.mxu0 0.0
    %3658 = vmatprep.subr.mxu0 0.0
    %3659 = vmatpush1.msra.mxu0 0.0
    %3660 = vmatprep.subr.mxu0 0.0
    %3661 = vmatpush1.msra.mxu0 %v3629
    %3662 = vmatprep.subr.mxu0 0.0
    %3663 = vmatpush1.msra.mxu0 %v3628
    %3664 = vmatprep.subr.mxu0 0.0
    %3665 = vmatpush1.msra.mxu0 %v3627
    %3666 = vmatprep.subr.mxu0 0.0
    %3667 = vmatpush1.msra.mxu0 %v3626
    %3668 = vmatprep.subr.mxu0 0.0
    %3669 = vmatpush2.msra.mxu0 0.0
    %3670 = vmatprep.subr.mxu0 0.0
    %3671 = vmatpush2.msra.mxu0 0.0
    %3672 = vmatprep.subr.mxu0 0.0
    %3673 = vmatpush2.msra.mxu0 0.0
    %3674 = vmatprep.subr.mxu0 0.0
    %3675 = vmatpush2.msra.mxu0 0.0
    %3676 = vmatprep.subr.mxu0 0.0
    %3677 = vmatpush2.msra.mxu0 0.0
    %3678 = vmatprep.subr.mxu0 0.0
    %3679 = vmatpush2.msra.mxu0 0.0
    %3680 = vmatprep.subr.mxu0 0.0
    %3681 = vmatpush2.msra.mxu0 0.0
    %3682 = vmatprep.subr.mxu0 0.0
    %3683 = vmatpush2.msra.mxu0 0.0
    %3684 = vmatprep.subr.mxu0 0.0
    %3685 = vmatpush2.msra.mxu0 0.0
    %3686 = vmatprep.subr.mxu0 0.0
    %3687 = vmatpush2.msra.mxu0 0.0
    %3688 = vmatprep.subr.mxu0 0.0
    %3689 = vmatpush2.msra.mxu0 0.0
    %3690 = vmatprep.subr.mxu0 0.0
    %3691 = vmatpush2.msra.mxu0 0.0
    %3692 = vmatprep.subr.mxu0 0.0
    %3693 = vmatpush2.msra.mxu0 0.0
    %3694 = vmatprep.subr.mxu0 0.0
    %3695 = vmatpush2.msra.mxu0 0.0
    %3696 = vmatprep.subr.mxu0 0.0
    %3697 = vmatpush2.msra.mxu0 0.0
    %3698 = vmatprep.subr.mxu0 0.0
    %3699 = vmatpush2.msra.mxu0 0.0
    %3700 = vmatprep.mubr.f32.mxu0 0.0
    %3701 = vmatmul.mubr.f32.gmra.mxu0 %v3631
    %v3702 = vpop.f32.mrf.mxu0
    %v3703 = vadd.f32 0.0, %v3702
    %v3704 = vpop.f32.mrf.mxu0
    %3705 = vmatprep.mubr.f32.mxu0 0.0
    %3706 = vmatmul.mubr.f32.gmra.mxu0 %v3634
    %v3707 = vpop.f32.mrf.mxu0
    %v3708 = vadd.f32 0.0, %v3707
    %v3709 = vpop.f32.mrf.mxu0
    %3710 = vdwg.mxu0
    %v3711 = vadd.f32 %v2119, %v3703
    %v3712 = vadd.f32 %v2120, %v3708
    %s3713 = scalar_lea.vmem %s9, 1
    %v3714 = vld [vmem:[%s3713] sm:$0x1]
    %v3716 = vlaneseq
    %v3717 = vshrl.u32 %v3716, 7
    %v3718 = vsub.s32 0, %v3717
    %v3719 = vrot.slane %v3714, %v3718
    %v3721 = vadd.f32 %v3711, %v3719
    %v3722 = vadd.f32 %v3712, %v3719
    %s3723 = scalar_lea.vmem %s10, 1
    %v3724 = vld [vmem:[%s3723] sm:$0x1]
    %s3725 = scalar_lea.vmem %s11, 1
    %v3726 = vld [vmem:[%s3725] sm:$0x1]
    %v3727 = vsel %vm282, %v3721, 0.0
    %3728 = vadd.xlane.f32.xlu0 %v3727
    %v3729 = vpop.xlane.xlu0 %3728
    %v3730 = vsel %vm282, %v3722, 0.0
    %3731 = vadd.xlane.f32.xlu0 %v3730
    %v3732 = vpop.xlane.xlu0 %3731
    %v3733 = vmul.f32 %v3729, %v289
    %v3734 = vmul.f32 %v3732, %v289
    %v3735 = vsub.f32 %v3721, %v3733
    %v3736 = vsub.f32 %v3722, %v3734
    %v3737 = vmul.f32 %v3735, %v3735
    %v3738 = vmul.f32 %v3736, %v3736
    %v3739 = vsel %vm282, %v3737, 0.0
    %3740 = vadd.xlane.f32.xlu0 %v3739
    %v3741 = vpop.xlane.xlu0 %3740
    %v3742 = vsel %vm282, %v3738, 0.0
    %3743 = vadd.xlane.f32.xlu0 %v3742
    %v3744 = vpop.xlane.xlu0 %3743
    %v3745 = vmul.f32 %v3741, %v289
    %v3746 = vmul.f32 %v3744, %v289
    %v3747 = vadd.f32 %v3745, 1e-05
    %v3748 = vadd.f32 %v3746, 1e-05
    %v3749 = vrsqrt.pop %v3747
    %v3750 = vrsqrt.pop %v3748
    %v3751 = vmul.f32 %v3735, %v3749
    %v3752 = vmul.f32 %v3736, %v3750
    %v3754 = vlaneseq
    %v3755 = vshrl.u32 %v3754, 7
    %v3756 = vsub.s32 0, %v3755
    %v3757 = vrot.slane %v3724, %v3756
    %v3759 = vmul.f32 %v3751, %v3757
    %v3760 = vmul.f32 %v3752, %v3757
    %v3762 = vlaneseq
    %v3763 = vshrl.u32 %v3762, 7
    %v3764 = vsub.s32 0, %v3763
    %v3765 = vrot.slane %v3726, %v3764
    %v3767 = vadd.f32 %v3759, %v3765
    %v3768 = vadd.f32 %v3760, %v3765
    %s3769 = scalar_lea.vmem %s12, 32
    %v3770 = vld [vmem:[%s3769] sm:$0xff]
    %v3771 = vld [vmem:[%s3769 + $0x8] sm:$0xff]
    %v3772 = vld [vmem:[%s3769 + $0x10] sm:$0xff]
    %v3773 = vld [vmem:[%s3769 + $0x18] sm:$0xff]
    %s3774 = scalar_lea.vmem %s13, 1
    %v3775 = vld [vmem:[%s3774] sm:$0x1]
    %v3777 = vlaneseq
    %v3778 = vshrl.u32 %v3777, 7
    %v3779 = vsub.s32 0, %v3778
    %v3780 = vrot.slane %v3775, %v3779
    %v3783 = vsel %vm282, %v3767, 0
    %v3786 = vsel %vm282, %v3768, 0
    %3788 = vmatprep.subr.mxu0 0.0
    %3789 = vmatpush1.msra.mxu0 0.0
    %3790 = vmatprep.subr.mxu0 0.0
    %3791 = vmatpush1.msra.mxu0 0.0
    %3792 = vmatprep.subr.mxu0 0.0
    %3793 = vmatpush1.msra.mxu0 0.0
    %3794 = vmatprep.subr.mxu0 0.0
    %3795 = vmatpush1.msra.mxu0 0.0
    %3796 = vmatprep.subr.mxu0 0.0
    %3797 = vmatpush1.msra.mxu0 0.0
    %3798 = vmatprep.subr.mxu0 0.0
    %3799 = vmatpush1.msra.mxu0 0.0
    %3800 = vmatprep.subr.mxu0 0.0
    %3801 = vmatpush1.msra.mxu0 0.0
    %3802 = vmatprep.subr.mxu0 0.0
    %3803 = vmatpush1.msra.mxu0 0.0
    %3804 = vmatprep.subr.mxu0 0.0
    %3805 = vmatpush1.msra.mxu0 0.0
    %3806 = vmatprep.subr.mxu0 0.0
    %3807 = vmatpush1.msra.mxu0 0.0
    %3808 = vmatprep.subr.mxu0 0.0
    %3809 = vmatpush1.msra.mxu0 0.0
    %3810 = vmatprep.subr.mxu0 0.0
    %3811 = vmatpush1.msra.mxu0 0.0
    %3812 = vmatprep.subr.mxu0 0.0
    %3813 = vmatpush1.msra.mxu0 %v3773
    %3814 = vmatprep.subr.mxu0 0.0
    %3815 = vmatpush1.msra.mxu0 %v3772
    %3816 = vmatprep.subr.mxu0 0.0
    %3817 = vmatpush1.msra.mxu0 %v3771
    %3818 = vmatprep.subr.mxu0 0.0
    %3819 = vmatpush1.msra.mxu0 %v3770
    %3820 = vmatprep.subr.mxu0 0.0
    %3821 = vmatpush2.msra.mxu0 0.0
    %3822 = vmatprep.subr.mxu0 0.0
    %3823 = vmatpush2.msra.mxu0 0.0
    %3824 = vmatprep.subr.mxu0 0.0
    %3825 = vmatpush2.msra.mxu0 0.0
    %3826 = vmatprep.subr.mxu0 0.0
    %3827 = vmatpush2.msra.mxu0 0.0
    %3828 = vmatprep.subr.mxu0 0.0
    %3829 = vmatpush2.msra.mxu0 0.0
    %3830 = vmatprep.subr.mxu0 0.0
    %3831 = vmatpush2.msra.mxu0 0.0
    %3832 = vmatprep.subr.mxu0 0.0
    %3833 = vmatpush2.msra.mxu0 0.0
    %3834 = vmatprep.subr.mxu0 0.0
    %3835 = vmatpush2.msra.mxu0 0.0
    %3836 = vmatprep.subr.mxu0 0.0
    %3837 = vmatpush2.msra.mxu0 0.0
    %3838 = vmatprep.subr.mxu0 0.0
    %3839 = vmatpush2.msra.mxu0 0.0
    %3840 = vmatprep.subr.mxu0 0.0
    %3841 = vmatpush2.msra.mxu0 0.0
    %3842 = vmatprep.subr.mxu0 0.0
    %3843 = vmatpush2.msra.mxu0 0.0
    %3844 = vmatprep.subr.mxu0 0.0
    %3845 = vmatpush2.msra.mxu0 0.0
    %3846 = vmatprep.subr.mxu0 0.0
    %3847 = vmatpush2.msra.mxu0 0.0
    %3848 = vmatprep.subr.mxu0 0.0
    %3849 = vmatpush2.msra.mxu0 0.0
    %3850 = vmatprep.subr.mxu0 0.0
    %3851 = vmatpush2.msra.mxu0 0.0
    %3852 = vmatprep.mubr.f32.mxu0 0.0
    %3853 = vmatmul.mubr.f32.gmra.mxu0 %v3783
    %v3854 = vpop.f32.mrf.mxu0
    %v3855 = vadd.f32 %v3780, %v3854
    %v3856 = vpop.f32.mrf.mxu0
    %3857 = vmatprep.mubr.f32.mxu0 0.0
    %3858 = vmatmul.mubr.f32.gmra.mxu0 %v3786
    %v3859 = vpop.f32.mrf.mxu0
    %v3860 = vadd.f32 %v3780, %v3859
    %v3861 = vpop.f32.mrf.mxu0
    %3862 = vdwg.mxu0
    %v3863 = vmax.f32 %v3855, 0.0
    %v3864 = vmax.f32 %v3860, 0.0
    %s3865 = scalar_lea.vmem %s14, 128
    %v3866 = vld [vmem:[%s3865] sm:$0xff]
    %v3867 = vld [vmem:[%s3865 + $0x8] sm:$0xff]
    %v3868 = vld [vmem:[%s3865 + $0x10] sm:$0xff]
    %v3869 = vld [vmem:[%s3865 + $0x18] sm:$0xff]
    %v3870 = vld [vmem:[%s3865 + $0x20] sm:$0xff]
    %v3871 = vld [vmem:[%s3865 + $0x28] sm:$0xff]
    %v3872 = vld [vmem:[%s3865 + $0x30] sm:$0xff]
    %v3873 = vld [vmem:[%s3865 + $0x38] sm:$0xff]
    %v3874 = vld [vmem:[%s3865 + $0x40] sm:$0xff]
    %v3875 = vld [vmem:[%s3865 + $0x48] sm:$0xff]
    %v3876 = vld [vmem:[%s3865 + $0x50] sm:$0xff]
    %v3877 = vld [vmem:[%s3865 + $0x58] sm:$0xff]
    %v3878 = vld [vmem:[%s3865 + $0x60] sm:$0xff]
    %v3879 = vld [vmem:[%s3865 + $0x68] sm:$0xff]
    %v3880 = vld [vmem:[%s3865 + $0x70] sm:$0xff]
    %v3881 = vld [vmem:[%s3865 + $0x78] sm:$0xff]
    %3882 = vmatprep.subr.mxu0 0.0
    %3883 = vmatpush1.msra.mxu0 %v3881
    %3884 = vmatprep.subr.mxu0 0.0
    %3885 = vmatpush1.msra.mxu0 %v3880
    %3886 = vmatprep.subr.mxu0 0.0
    %3887 = vmatpush1.msra.mxu0 %v3879
    %3888 = vmatprep.subr.mxu0 0.0
    %3889 = vmatpush1.msra.mxu0 %v3878
    %3890 = vmatprep.subr.mxu0 0.0
    %3891 = vmatpush1.msra.mxu0 %v3877
    %3892 = vmatprep.subr.mxu0 0.0
    %3893 = vmatpush1.msra.mxu0 %v3876
    %3894 = vmatprep.subr.mxu0 0.0
    %3895 = vmatpush1.msra.mxu0 %v3875
    %3896 = vmatprep.subr.mxu0 0.0
    %3897 = vmatpush1.msra.mxu0 %v3874
    %3898 = vmatprep.subr.mxu0 0.0
    %3899 = vmatpush1.msra.mxu0 %v3873
    %3900 = vmatprep.subr.mxu0 0.0
    %3901 = vmatpush1.msra.mxu0 %v3872
    %3902 = vmatprep.subr.mxu0 0.0
    %3903 = vmatpush1.msra.mxu0 %v3871
    %3904 = vmatprep.subr.mxu0 0.0
    %3905 = vmatpush1.msra.mxu0 %v3870
    %3906 = vmatprep.subr.mxu0 0.0
    %3907 = vmatpush1.msra.mxu0 %v3869
    %3908 = vmatprep.subr.mxu0 0.0
    %3909 = vmatpush1.msra.mxu0 %v3868
    %3910 = vmatprep.subr.mxu0 0.0
    %3911 = vmatpush1.msra.mxu0 %v3867
    %3912 = vmatprep.subr.mxu0 0.0
    %3913 = vmatpush1.msra.mxu0 %v3866
    %3914 = vmatprep.subr.mxu0 0.0
    %3915 = vmatpush2.msra.mxu0 0.0
    %3916 = vmatprep.subr.mxu0 0.0
    %3917 = vmatpush2.msra.mxu0 0.0
    %3918 = vmatprep.subr.mxu0 0.0
    %3919 = vmatpush2.msra.mxu0 0.0
    %3920 = vmatprep.subr.mxu0 0.0
    %3921 = vmatpush2.msra.mxu0 0.0
    %3922 = vmatprep.subr.mxu0 0.0
    %3923 = vmatpush2.msra.mxu0 0.0
    %3924 = vmatprep.subr.mxu0 0.0
    %3925 = vmatpush2.msra.mxu0 0.0
    %3926 = vmatprep.subr.mxu0 0.0
    %3927 = vmatpush2.msra.mxu0 0.0
    %3928 = vmatprep.subr.mxu0 0.0
    %3929 = vmatpush2.msra.mxu0 0.0
    %3930 = vmatprep.subr.mxu0 0.0
    %3931 = vmatpush2.msra.mxu0 0.0
    %3932 = vmatprep.subr.mxu0 0.0
    %3933 = vmatpush2.msra.mxu0 0.0
    %3934 = vmatprep.subr.mxu0 0.0
    %3935 = vmatpush2.msra.mxu0 0.0
    %3936 = vmatprep.subr.mxu0 0.0
    %3937 = vmatpush2.msra.mxu0 0.0
    %3938 = vmatprep.subr.mxu0 0.0
    %3939 = vmatpush2.msra.mxu0 0.0
    %3940 = vmatprep.subr.mxu0 0.0
    %3941 = vmatpush2.msra.mxu0 0.0
    %3942 = vmatprep.subr.mxu0 0.0
    %3943 = vmatpush2.msra.mxu0 0.0
    %3944 = vmatprep.subr.mxu0 0.0
    %3945 = vmatpush2.msra.mxu0 0.0
    %3946 = vmatprep.mubr.f32.mxu0 0.0
    %3947 = vmatmul.mubr.f32.gmra.mxu0 %v3863
    %v3948 = vpop.f32.mrf.mxu0
    %v3949 = vadd.f32 0.0, %v3948
    %v3950 = vpop.f32.mrf.mxu0
    %3951 = vmatprep.mubr.f32.mxu0 0.0
    %3952 = vmatmul.mubr.f32.gmra.mxu0 %v3864
    %v3953 = vpop.f32.mrf.mxu0
    %v3954 = vadd.f32 0.0, %v3953
    %v3955 = vpop.f32.mrf.mxu0
    %3956 = vdwg.mxu0
    %v3957 = vadd.f32 %v3721, %v3949
    %v3958 = vadd.f32 %v3722, %v3954
    %s3959 = scalar_lea.vmem %s15, 1
    %v3960 = vld [vmem:[%s3959] sm:$0x1]
    %v3962 = vlaneseq
    %v3963 = vshrl.u32 %v3962, 7
    %v3964 = vsub.s32 0, %v3963
    %v3965 = vrot.slane %v3960, %v3964
    %v3967 = vadd.f32 %v3957, %v3965
    %v3968 = vadd.f32 %v3958, %v3965
    %v3969 = vld [vmem:[%s16] sm:$0x1]
    %v3970 = vld [vmem:[%s17] sm:$0x1]
    %v3971 = vsel %vm282, %v3967, 0.0
    %3972 = vadd.xlane.f32.xlu0 %v3971
    %v3973 = vpop.xlane.xlu0 %3972
    %v3974 = vsel %vm282, %v3968, 0.0
    %3975 = vadd.xlane.f32.xlu0 %v3974
    %v3976 = vpop.xlane.xlu0 %3975
    %v3977 = vmul.f32 %v3973, %v289
    %v3978 = vmul.f32 %v3976, %v289
    %v3979 = vsub.f32 %v3967, %v3977
    %v3980 = vsub.f32 %v3968, %v3978
    %v3981 = vmul.f32 %v3979, %v3979
    %v3982 = vmul.f32 %v3980, %v3980
    %v3983 = vsel %vm282, %v3981, 0.0
    %3984 = vadd.xlane.f32.xlu0 %v3983
    %v3985 = vpop.xlane.xlu0 %3984
    %v3986 = vsel %vm282, %v3982, 0.0
    %3987 = vadd.xlane.f32.xlu0 %v3986
    %v3988 = vpop.xlane.xlu0 %3987
    %v3989 = vmul.f32 %v3985, %v289
    %v3990 = vmul.f32 %v3988, %v289
    %v3991 = vadd.f32 %v3989, 1e-05
    %v3992 = vadd.f32 %v3990, 1e-05
    %v3993 = vrsqrt.pop %v3991
    %v3994 = vrsqrt.pop %v3992
    %v3995 = vmul.f32 %v3979, %v3993
    %v3996 = vmul.f32 %v3980, %v3994
    %v3998 = vlaneseq
    %v3999 = vshrl.u32 %v3998, 7
    %v4000 = vsub.s32 0, %v3999
    %v4001 = vrot.slane %v3969, %v4000
    %v4003 = vmul.f32 %v3995, %v4001
    %v4004 = vmul.f32 %v3996, %v4001
    %v4006 = vlaneseq
    %v4007 = vshrl.u32 %v4006, 7
    %v4008 = vsub.s32 0, %v4007
    %v4009 = vrot.slane %v3970, %v4008
    %v4011 = vadd.f32 %v4003, %v4009
    %v4012 = vadd.f32 %v4004, %v4009
    %4013 = vst.msk [vmem:[#allocation2] sm:$0xff] %vm282, %v4011
    %4014 = vst.msk [vmem:[#allocation2 + $0x8] sm:$0xff] %vm282, %v4012
    // Predicated region
    $region74: #{encoder_forward.1} parent=1 // pred_check
      _
    $region75: #{encoder_forward.1} parent=1 // pred_check_branch
      %4016 = sbr.rel (0) target = $region77
    $region76: #{encoder_forward.1} parent=1 // pred_region
      %s4018 = ssub.s32 256, 256
      %4019 = vsyncadd [#allocation3], %s4018
      %s4020 = sshll.u32 [#allocation2], 4
      %s4021 = int_to_ptr.vmem [resolvable:$true] %s4020
      %4026 = dma.vmem_to_hbm [thread:$0]  %s4021, 256, %s18, [#allocation3], 128, 128, 8
    $region77: #{encoder_forward.1} parent=1 // pred_fallthru
      _
    // Predicated region
    $region78: #{encoder_forward.1} parent=1 // pred_check
      _
    $region79: #{encoder_forward.1} parent=1 // pred_check_branch
      %4028 = sbr.rel (0) target = $region81
    $region80: #{encoder_forward.1} parent=1 // pred_region
      %4029 = dma.done [#allocation3], 256
    $region81: #{encoder_forward.1} parent=1 // pred_fallthru
      _
    %4030 = vsyncpa [#allocation3], 1

</llo_original>
